<compile_context>
chip_gen: v5e
topology: v5e:2x2
jax: 0.10.0
libtpu: 0.0.40
codegen_flags: <defaults>
</compile_context>

<pallas_src>
import functools

import numpy as np
import jax
import jax.numpy as jnp
from jax.experimental import pallas as pl
from jax.experimental.pallas import tpu as pltpu


def _freq_bands(n_freqs: int, log_space: bool) -> np.ndarray:
    if log_space:
        bands = 2.0 ** np.linspace(0.0, n_freqs - 1, n_freqs)
    else:
        bands = np.linspace(2.0 ** 0.0, 2.0 ** (n_freqs - 1), n_freqs)
    return np.asarray(bands, dtype=np.float64)


def _round_up(a: int, b: int) -> int:
    return ((a + b - 1) // b) * b


def _pe_kernel(freq_ref, phase_ref, x_ref, o_ref, *, add_original_x: bool):
    # x_ref: (tile_n, d_in); freq/phase: (1, 2*n_freqs*d_in); o_ref: (tile_n, d_out)
    x = x_ref[...]
    xf = x.astype(jnp.float32)               # f32 transcendentals (v5e-safe)
    d = x.shape[1]
    n_rep = freq_ref.shape[1] // d           # = 2 * n_freqs
    # Pack every sin/cos piece into one lane slab; cos t == sin(t + pi/2), so a
    # single jnp.sin (one EUP pass) covers all pieces.
    slab = jnp.concatenate([xf] * n_rep, axis=-1)        # (tile_n, 2*n_freqs*d)
    enc = jnp.sin(slab * freq_ref[...] + phase_ref[...]).astype(o_ref.dtype)
    if add_original_x:
        o_ref[...] = jnp.concatenate([x.astype(o_ref.dtype), enc], axis=-1)
    else:
        o_ref[...] = enc


def positional_encoder(x, *, n_freqs: int, log_space: bool = False,
                       add_original_x: bool = True, scale: float = 1.0,
                       tile_n: int = 16384):
    """Sine-cosine positional encoding matching the PyTorch PositionalEncoder.

    x: (N, d_input).  Returns (N, d_input*(1 + 2*n_freqs)) when add_original_x
    else (N, d_input*2*n_freqs), ordered [x, sin(f0*x/s), cos(f0*x/s), ...].
    """
    N, d_input = x.shape
    if n_freqs < 1:
        raise ValueError("n_freqs must be >= 1")
    freqs = _freq_bands(n_freqs, log_space) / float(scale)   # scale folded in
    n_pieces = (1 if add_original_x else 0) + 2 * n_freqs
    d_output = d_input * n_pieces
    W = 2 * n_freqs * d_input

    # Per-column frequency / phase rows for the packed slab.
    col_freq = np.repeat(freqs, 2 * d_input).astype(np.float32)
    col_phase = np.tile(
        np.concatenate([np.zeros(d_input), np.full(d_input, np.pi / 2.0)]),
        n_freqs).astype(np.float32)
    freq_row = jnp.asarray(col_freq.reshape(1, W))
    phase_row = jnp.asarray(col_phase.reshape(1, W))

    # --- tile_n selection ---------------------------------------------------
    # Keep the double-buffered working set (in + out blocks, x2) under ~8 MiB so
    # default scoped-VMEM limits hold on v5e (16 MiB) and v7x (halved VMEM).
    vmem_budget = 8 * 1024 * 1024
    bytes_per_row = 2 * 4 * (d_input + d_output)      # double-buffered, f32
    cap = max(8, (vmem_budget // bytes_per_row) // 8 * 8)
    tile_n = max(8, min(int(tile_n), cap))
    # Ensure >= 2 grid steps so v7x's two TensorCores both get work.
    half = max(8, _round_up(pl.cdiv(N, 2), 8))
    tile_n = _round_up(min(tile_n, half), 8)

    grid_n = pl.cdiv(N, tile_n)                       # ragged tail handled by Pallas

    kernel = functools.partial(_pe_kernel, add_original_x=add_original_x)
    return pl.pallas_call(
        kernel,
        out_shape=jax.ShapeDtypeStruct((N, d_output), x.dtype),
        grid_spec=pltpu.PrefetchScalarGridSpec(
            num_scalar_prefetch=0,
            grid=(grid_n,),
            in_specs=[
                pl.BlockSpec((1, W), lambda i: (0, 0)),            # freq row
                pl.BlockSpec((1, W), lambda i: (0, 0)),            # phase row
                pl.BlockSpec((tile_n, d_input), lambda i: (i, 0)),  # x rows
            ],
            out_specs=pl.BlockSpec((tile_n, d_output), lambda i: (i, 0)),
        ),
        compiler_params=pltpu.CompilerParams(
            dimension_semantics=("parallel",)),
    )(freq_row, phase_row, x)


def positional_encoder_ref(x, *, n_freqs, log_space=False,
                           add_original_x=True, scale=1.0):
    freqs = _freq_bands(n_freqs, log_space)
    pieces = [x] if add_original_x else []
    for f in freqs:
        pieces.append(jnp.sin(x / scale * float(f)))
        pieces.append(jnp.cos(x / scale * float(f)))
    return jnp.concatenate(pieces, axis=-1)


if __name__ == "__main__":
    key = jax.random.PRNGKey(0)
    k1, k2 = jax.random.split(key)

    # Config 1: linear bands, keep original x, scale=1.  tile_n auto-clamps to
    # 256 -> 2 grid steps (both v7x cores get work).
    N1, d1, nf1 = 512, 4, 4
    x1 = jax.random.uniform(k1, (N1, d1), dtype=jnp.float32,
                            minval=-1.0, maxval=1.0)
    out1 = jax.block_until_ready(
        positional_encoder(x1, n_freqs=nf1, log_space=False,
                           add_original_x=True, scale=1.0))
    ref1 = positional_encoder_ref(x1, n_freqs=nf1, log_space=False,
                                  add_original_x=True, scale=1.0)
    assert out1.shape == (N1, d1 * (1 + 2 * nf1)), out1.shape
    np.testing.assert_allclose(np.asarray(out1), np.asarray(ref1),
                               rtol=1e-5, atol=2e-5)

    # Config 2: log-space bands, no original x, scale=2, ragged N (exercises
    # the bounded edge-block path) and an explicit small tile_n (4-step grid).
    N2, d2, nf2 = 500, 3, 5
    x2 = jax.random.uniform(k2, (N2, d2), dtype=jnp.float32,
                            minval=-1.0, maxval=1.0)
    out2 = jax.block_until_ready(
        positional_encoder(x2, n_freqs=nf2, log_space=True,
                           add_original_x=False, scale=2.0, tile_n=128))
    ref2 = positional_encoder_ref(x2, n_freqs=nf2, log_space=True,
                                  add_original_x=False, scale=2.0)
    assert out2.shape == (N2, d2 * 2 * nf2), out2.shape
    np.testing.assert_allclose(np.asarray(out2), np.asarray(ref2),
                               rtol=1e-5, atol=2e-5)

    print("KERNEL_OK")
</pallas_src>

<mosaic_0001>
module attributes {stable_mosaic.version = 11 : i64} {
  func.func @_pe_kernel(%arg0: i32, %arg1: memref<1x32xf32, #tpu.memory_space<vmem>>, %arg2: memref<1x32xf32, #tpu.memory_space<vmem>>, %arg3: memref<256x4xf32, #tpu.memory_space<vmem>>, %arg4: memref<256x36xf32, #tpu.memory_space<vmem>>) attributes {dimension_semantics = [#tpu.dimension_semantics<parallel>], iteration_bounds = array<i64: 2>, scalar_prefetch = 0 : i64, scratch_operands = 0 : i64, tpu.core_type = #tpu.core_type<tc>, window_params = [{pipeline_mode = #tpu.pipeline_mode<synchronous>, transform_indices = @transform_0, window_bounds = array<i64: 1, 32>}, {pipeline_mode = #tpu.pipeline_mode<synchronous>, transform_indices = @transform_1, window_bounds = array<i64: 1, 32>}, {transform_indices = @transform_2, window_bounds = array<i64: 256, 4>}, {transform_indices = @transform_3, window_bounds = array<i64: 256, 36>}]} {
    %c0 = arith.constant 0 : index
    %c0_0 = arith.constant 0 : index
    %0 = vector.load %arg3[%c0, %c0_0] : memref<256x4xf32, #tpu.memory_space<vmem>>, vector<256x4xf32>
    %1 = tpu.concatenate %0, %0, %0, %0, %0, %0, %0, %0 in 1 : vector<256x4xf32>, vector<256x4xf32>, vector<256x4xf32>, vector<256x4xf32>, vector<256x4xf32>, vector<256x4xf32>, vector<256x4xf32>, vector<256x4xf32> -> vector<256x32xf32>
    %c0_1 = arith.constant 0 : index
    %c0_2 = arith.constant 0 : index
    %2 = vector.load %arg1[%c0_1, %c0_2] : memref<1x32xf32, #tpu.memory_space<vmem>>, vector<1x32xf32>
    %3 = vector.broadcast %2 : vector<1x32xf32> to vector<256x32xf32>
    %4 = arith.mulf %1, %3 : vector<256x32xf32>
    %c0_3 = arith.constant 0 : index
    %c0_4 = arith.constant 0 : index
    %5 = vector.load %arg2[%c0_3, %c0_4] : memref<1x32xf32, #tpu.memory_space<vmem>>, vector<1x32xf32>
    %6 = vector.broadcast %5 : vector<1x32xf32> to vector<256x32xf32>
    %7 = arith.addf %4, %6 : vector<256x32xf32>
    %8 = math.sin %7 : vector<256x32xf32>
    %9 = tpu.concatenate %0, %8 in 1 : vector<256x4xf32>, vector<256x32xf32> -> vector<256x36xf32>
    %c0_5 = arith.constant 0 : index
    %c0_6 = arith.constant 0 : index
    %10 = vector.load %arg4[%c0_5, %c0_6] : memref<256x36xf32, #tpu.memory_space<vmem>>, vector<256x36xf32>
    tpu.vector_store %arg4[%c0_5, %c0_6], %9 {strides = array<i32>} : memref<256x36xf32, #tpu.memory_space<vmem>>, vector<256x36xf32>,
    return
  }
  func.func @transform_0(%arg0: i32) -> (i32, i32) {
    %c0_i32 = arith.constant 0 : i32
    %c0_i32_0 = arith.constant 0 : i32
    %c0_i32_1 = arith.constant 0 : i32
    return %c0_i32, %c0_i32_0 : i32, i32
  }
  func.func @transform_1(%arg0: i32) -> (i32, i32) {
    %c0_i32 = arith.constant 0 : i32
    %c0_i32_0 = arith.constant 0 : i32
    %c0_i32_1 = arith.constant 0 : i32
    return %c0_i32, %c0_i32_0 : i32, i32
  }
  func.func @transform_2(%arg0: i32) -> (i32, i32) {
    %c0_i32 = arith.constant 0 : i32
    %c0_i32_0 = arith.constant 0 : i32
    return %arg0, %c0_i32 : i32, i32
  }
  func.func @transform_3(%arg0: i32) -> (i32, i32) {
    %c0_i32 = arith.constant 0 : i32
    %c0_i32_0 = arith.constant 0 : i32
    return %arg0, %c0_i32 : i32, i32
  }
}

</mosaic_0001>

<llo_original>
// kernel: tpu_custom_call.1
$region0: #{tpu_custom_call.1}
  #allocation0 [shape = 'u32[]', space=smem, size = 0x4, offset = 0x4, fixed_abs, tag = 'smem constant byte address 0x4 - core index']
  #allocation1 [shape = 'u32[72,128]{1,0:T(1,128)}', space=vmem, size = 0x9000, scoped, tag = 'internal scratch']
  %s0 = inlined_call_operand.vmem [shape: f32[1,32], index: 0, kind: input, shape index: {}]
  %s1 = inlined_call_operand.vmem [shape: f32[1,32], index: 1, kind: input, shape index: {}]
  %s2 = inlined_call_operand.vmem [shape: f32[512,4], index: 2, kind: input, shape index: {}]
  %s3 = inlined_call_operand.vmem [shape: f32[512,36], index: 3, kind: output, shape index: {}]
  %s4 = sld [smem:[#allocation0]]
  $region45: #{tpu_custom_call.1} parent=0
    _
  %s6 = ssub.s32 1, %s4
  %s7 = scalar_select 0, %s6, %s4
  loop: start=0, step=1, limit=4
  $region2: #{tpu_custom_call.1} parent=0 // loop_pre_header
    _
  $region3: #{tpu_custom_call.1} parent=0 // loop_header
    %s9 = sphi 0, %s13
    %p10 = scmp.ge.s32.totalorder %s9, 4
    %s17 = sphi 0, %s17
    %s19 = sphi 0, %s17
    %s20 = sphi 0, %s19
    %s34 = sphi 0, %s20
    %s38 = sphi 0, %s38
    %s40 = sphi 0, %s38
    %s41 = sphi 0, %s40
    %s55 = sphi 0, %s41
    %s61 = sphi 0, %s63
    %s64 = sphi 0, %s61
    %s65 = sphi 0, %s64
    %s81 = sphi 0, %s65
    %s87 = sphi 0, %s89
    %s90 = sphi 0, %s87
    %s91 = sphi 0, %s90
    %s107 = sphi 0, %s91
  $region4: #{tpu_custom_call.1} parent=0 // loop_header_branch
    %12 = sbr.rel (%p10) target = $region8
  $region5: #{tpu_custom_call.1} parent=0 // loop_body
    %s14 = ssub.s32 %s9, 1
    %s15 = ssub.s32 %s9, 2
    %s16 = sadd.s32 %s9, 1
    %s18 = sadd.s32 %s17, 1
    %p21 = scmp.eq.s32.totalorder %s9, 1
    %p22 = scmp.ne.s32.totalorder %s17, %s19
    %p23 = scmp.eq.s32.totalorder %s9, 0
    %p24 = por %p22, %p23
    %p25 = scmp.ne.s32.totalorder %s17, %s19
    %p26 = scmp.eq.s32.totalorder %s14, 1
    %p27 = por %p25, %p26
    %p28 = scmp.ne.s32.totalorder %s19, %s20
    %p29 = scmp.eq.s32.totalorder %s14, 0
    %p30 = por %p28, %p29
    %p31 = scmp.ne.s32.totalorder %s19, %s20
    %p32 = scmp.eq.s32.totalorder %s15, 1
    %p33 = por %p31, %p32
    %p35 = scmp.ne.s32.totalorder %s20, %s34
    %p36 = scmp.eq.s32.totalorder %s15, 0
    %p37 = por %p35, %p36
    %s39 = sadd.s32 %s38, 1
    %p42 = scmp.eq.s32.totalorder %s9, 1
    %p43 = scmp.ne.s32.totalorder %s38, %s40
    %p44 = scmp.eq.s32.totalorder %s9, 0
    %p45 = por %p43, %p44
    %p46 = scmp.ne.s32.totalorder %s38, %s40
    %p47 = scmp.eq.s32.totalorder %s14, 1
    %p48 = por %p46, %p47
    %p49 = scmp.ne.s32.totalorder %s40, %s41
    %p50 = scmp.eq.s32.totalorder %s14, 0
    %p51 = por %p49, %p50
    %p52 = scmp.ne.s32.totalorder %s40, %s41
    %p53 = scmp.eq.s32.totalorder %s15, 1
    %p54 = por %p52, %p53
    %p56 = scmp.ne.s32.totalorder %s41, %s55
    %p57 = scmp.eq.s32.totalorder %s15, 0
    %p58 = por %p56, %p57
    %s59 = ssub.s32 %s9, %s16
    %p60 = scmp.eq.s32.totalorder %s59, 0
    %s62 = sadd.s32 %s61, 1
    %s63 = scalar_select %p60, %s61, %s62
    %p66 = pneg %p60
    %p67 = scmp.eq.s32.totalorder %s9, 1
    %p68 = por %p66, %p67
    %p69 = scmp.ne.s32.totalorder %s61, %s64
    %p70 = scmp.eq.s32.totalorder %s9, 0
    %p71 = por %p69, %p70
    %p72 = scmp.ne.s32.totalorder %s61, %s64
    %p73 = scmp.eq.s32.totalorder %s14, 1
    %p74 = por %p72, %p73
    %p75 = scmp.ne.s32.totalorder %s64, %s65
    %p76 = scmp.eq.s32.totalorder %s14, 0
    %p77 = por %p75, %p76
    %p78 = scmp.ne.s32.totalorder %s64, %s65
    %p79 = scmp.eq.s32.totalorder %s15, 1
    %p80 = por %p78, %p79
    %p82 = scmp.ne.s32.totalorder %s65, %s81
    %p83 = scmp.eq.s32.totalorder %s15, 0
    %p84 = por %p82, %p83
    %s85 = ssub.s32 %s9, %s16
    %p86 = scmp.eq.s32.totalorder %s85, 0
    %s88 = sadd.s32 %s87, 1
    %s89 = scalar_select %p86, %s87, %s88
    %p92 = pneg %p86
    %p93 = scmp.eq.s32.totalorder %s9, 1
    %p94 = por %p92, %p93
    %p95 = scmp.ne.s32.totalorder %s87, %s90
    %p96 = scmp.eq.s32.totalorder %s9, 0
    %p97 = por %p95, %p96
    %p98 = scmp.ne.s32.totalorder %s87, %s90
    %p99 = scmp.eq.s32.totalorder %s14, 1
    %p100 = por %p98, %p99
    %p101 = scmp.ne.s32.totalorder %s90, %s91
    %p102 = scmp.eq.s32.totalorder %s14, 0
    %p103 = por %p101, %p102
    %p104 = scmp.ne.s32.totalorder %s90, %s91
    %p105 = scmp.eq.s32.totalorder %s15, 1
    %p106 = por %p104, %p105
    %p108 = scmp.ne.s32.totalorder %s91, %s107
    %p109 = scmp.eq.s32.totalorder %s15, 0
    %p110 = por %p108, %p109
    %p111 = scmp.le.s32.totalorder 1, %s9
    %p112 = scmp.lt.s32.totalorder %s9, 3
    %p113 = pnand %p111, %p112
    %p114 = pneg %p113
    // Predicated region
    $region9: #{tpu_custom_call.1} parent=5 // pred_check
      _
    $region10: #{tpu_custom_call.1} parent=5 // pred_check_branch
      %116 = sbr.rel (%p113) target = $region12
    $region11: #{tpu_custom_call.1} parent=5 // pred_region
      %s117 = ssub.s32 %s9, 1
      // Predicated region
      $region13: #{tpu_custom_call.1} parent=11 // pred_check
        %p118 = pneg %p30
      $region14: #{tpu_custom_call.1} parent=11 // pred_check_branch
        %120 = sbr.rel (%p118) target = $region16
      $region15: #{tpu_custom_call.1} parent=11 // pred_region
        _
      $region16: #{tpu_custom_call.1} parent=11 // pred_fallthru
        _
      // Predicated region
      $region17: #{tpu_custom_call.1} parent=11 // pred_check
        %p121 = pneg %p51
      $region18: #{tpu_custom_call.1} parent=11 // pred_check_branch
        %123 = sbr.rel (%p121) target = $region20
      $region19: #{tpu_custom_call.1} parent=11 // pred_region
        _
      $region20: #{tpu_custom_call.1} parent=11 // pred_fallthru
        _
    $region12: #{tpu_custom_call.1} parent=5 // pred_fallthru
      _
    %p124 = scmp.lt.s32.totalorder %s9, 2
    // Predicated region
    $region21: #{tpu_custom_call.1} parent=5 // pred_check
      %p125 = pneg %p124
    $region22: #{tpu_custom_call.1} parent=5 // pred_check_branch
      %127 = sbr.rel (%p125) target = $region24
    $region23: #{tpu_custom_call.1} parent=5 // pred_region
      // Predicated region
      $region25: #{tpu_custom_call.1} parent=23 // pred_check
        %p128 = pneg %p71
      $region26: #{tpu_custom_call.1} parent=23 // pred_check_branch
        %130 = sbr.rel (%p128) target = $region28
      $region27: #{tpu_custom_call.1} parent=23 // pred_region
        %s131 = smul.u32 32, %s9
        %p132 = scmp.lt.s32.totalorder %s131, 63
        %s133 = scalar_select %p132, %s131, 63
        %s134 = smul.addr %s133, 8
        %s135 = scalar_lea.vmem %s2, %s134
        %s136 = smul.u32 32, %s9
      $region28: #{tpu_custom_call.1} parent=23 // pred_fallthru
        _
    $region24: #{tpu_custom_call.1} parent=5 // pred_fallthru
      _
    %p137 = scmp.le.s32.totalorder 1, %s9
    %p138 = scmp.lt.s32.totalorder %s9, 3
    %p139 = pnand %p137, %p138
    %p140 = pneg %p139
    // Predicated region
    $region29: #{tpu_custom_call.1} parent=5 // pred_check
      _
    $region30: #{tpu_custom_call.1} parent=5 // pred_check_branch
      %142 = sbr.rel (%p139) target = $region32
    $region31: #{tpu_custom_call.1} parent=5 // pred_region
      %s143 = ssub.s32 %s9, 1
      %p144 = pneg %p30
      %p145 = pneg %p27
      %p146 = pneg %p51
      %p147 = pneg %p48
      %s148 = smul.u32 32, %s14
      %p149 = scmp.lt.s32.totalorder %s148, 63
      %s150 = scalar_select %p149, %s148, 63
      %s151 = smul.addr %s150, 8
      %s152 = scalar_lea.vmem %s2, %s151
      %p153 = pneg %p77
      %p154 = pneg %p74
      %p155 = pneg %p103
      %p156 = pneg %p100
      %s157 = smul.u32 32, %s14
      %p158 = scmp.lt.s32.totalorder %s157, 63
      %s159 = scalar_select %p158, %s157, 63
      %s160 = smul.addr %s159, 8
      %s161 = scalar_lea.vmem %s3, %s160
      %s162 = smul.u32 32, %s14
      %p163 = scmp.lt.s32.totalorder %s162, 63
      %s164 = scalar_select %p163, %s162, 63
      %s165 = smul.addr %s164, 8
      %s166 = scalar_lea.vmem %s2, %s165
      %s167 = smul.u32 32, %s14
      %s168 = smul.u32 32, %s14
      %p169 = scmp.lt.s32.totalorder %s168, 63
      %s170 = scalar_select %p169, %s168, 63
      %s171 = smul.addr %s170, 8
      %s172 = scalar_lea.vmem %s3, %s171
      %s173 = smul.u32 32, %s14
      %v174 = vld [vmem:[%s166] sm:$0xff]
      %v175 = vld [vmem:[%s166 + $0x8] sm:$0xff]
      %v176 = vld [vmem:[%s166 + $0x10] sm:$0xff]
      %v177 = vld [vmem:[%s166 + $0x18] sm:$0xff]
      %v178 = vld [vmem:[%s166 + $0x20] sm:$0xff]
      %v179 = vld [vmem:[%s166 + $0x28] sm:$0xff]
      %v180 = vld [vmem:[%s166 + $0x30] sm:$0xff]
      %v181 = vld [vmem:[%s166 + $0x38] sm:$0xff]
      %v182 = vld [vmem:[%s166 + $0x40] sm:$0xff]
      %v183 = vld [vmem:[%s166 + $0x48] sm:$0xff]
      %v184 = vld [vmem:[%s166 + $0x50] sm:$0xff]
      %v185 = vld [vmem:[%s166 + $0x58] sm:$0xff]
      %v186 = vld [vmem:[%s166 + $0x60] sm:$0xff]
      %v187 = vld [vmem:[%s166 + $0x68] sm:$0xff]
      %v188 = vld [vmem:[%s166 + $0x70] sm:$0xff]
      %v189 = vld [vmem:[%s166 + $0x78] sm:$0xff]
      %v190 = vld [vmem:[%s166 + $0x80] sm:$0xff]
      %v191 = vld [vmem:[%s166 + $0x88] sm:$0xff]
      %v192 = vld [vmem:[%s166 + $0x90] sm:$0xff]
      %v193 = vld [vmem:[%s166 + $0x98] sm:$0xff]
      %v194 = vld [vmem:[%s166 + $0xa0] sm:$0xff]
      %v195 = vld [vmem:[%s166 + $0xa8] sm:$0xff]
      %v196 = vld [vmem:[%s166 + $0xb0] sm:$0xff]
      %v197 = vld [vmem:[%s166 + $0xb8] sm:$0xff]
      %v198 = vld [vmem:[%s166 + $0xc0] sm:$0xff]
      %v199 = vld [vmem:[%s166 + $0xc8] sm:$0xff]
      %v200 = vld [vmem:[%s166 + $0xd0] sm:$0xff]
      %v201 = vld [vmem:[%s166 + $0xd8] sm:$0xff]
      %v202 = vld [vmem:[%s166 + $0xe0] sm:$0xff]
      %v203 = vld [vmem:[%s166 + $0xe8] sm:$0xff]
      %v204 = vld [vmem:[%s166 + $0xf0] sm:$0xff]
      %v205 = vld [vmem:[%s166 + $0xf8] sm:$0xff]
      %238 = vrot.lane.b32.xlu0 %v174, 4
      %v239 = vpop.permute.xlu0 %238
      %240 = vrot.lane.b32.xlu0 %v175, 4
      %v241 = vpop.permute.xlu0 %240
      %242 = vrot.lane.b32.xlu0 %v176, 4
      %v243 = vpop.permute.xlu0 %242
      %244 = vrot.lane.b32.xlu0 %v177, 4
      %v245 = vpop.permute.xlu0 %244
      %246 = vrot.lane.b32.xlu0 %v178, 4
      %v247 = vpop.permute.xlu0 %246
      %248 = vrot.lane.b32.xlu0 %v179, 4
      %v249 = vpop.permute.xlu0 %248
      %250 = vrot.lane.b32.xlu0 %v180, 4
      %v251 = vpop.permute.xlu0 %250
      %252 = vrot.lane.b32.xlu0 %v181, 4
      %v253 = vpop.permute.xlu0 %252
      %254 = vrot.lane.b32.xlu0 %v182, 4
      %v255 = vpop.permute.xlu0 %254
      %256 = vrot.lane.b32.xlu0 %v183, 4
      %v257 = vpop.permute.xlu0 %256
      %258 = vrot.lane.b32.xlu0 %v184, 4
      %v259 = vpop.permute.xlu0 %258
      %260 = vrot.lane.b32.xlu0 %v185, 4
      %v261 = vpop.permute.xlu0 %260
      %262 = vrot.lane.b32.xlu0 %v186, 4
      %v263 = vpop.permute.xlu0 %262
      %264 = vrot.lane.b32.xlu0 %v187, 4
      %v265 = vpop.permute.xlu0 %264
      %266 = vrot.lane.b32.xlu0 %v188, 4
      %v267 = vpop.permute.xlu0 %266
      %268 = vrot.lane.b32.xlu0 %v189, 4
      %v269 = vpop.permute.xlu0 %268
      %270 = vrot.lane.b32.xlu0 %v190, 4
      %v271 = vpop.permute.xlu0 %270
      %272 = vrot.lane.b32.xlu0 %v191, 4
      %v273 = vpop.permute.xlu0 %272
      %274 = vrot.lane.b32.xlu0 %v192, 4
      %v275 = vpop.permute.xlu0 %274
      %276 = vrot.lane.b32.xlu0 %v193, 4
      %v277 = vpop.permute.xlu0 %276
      %278 = vrot.lane.b32.xlu0 %v194, 4
      %v279 = vpop.permute.xlu0 %278
      %280 = vrot.lane.b32.xlu0 %v195, 4
      %v281 = vpop.permute.xlu0 %280
      %282 = vrot.lane.b32.xlu0 %v196, 4
      %v283 = vpop.permute.xlu0 %282
      %284 = vrot.lane.b32.xlu0 %v197, 4
      %v285 = vpop.permute.xlu0 %284
      %286 = vrot.lane.b32.xlu0 %v198, 4
      %v287 = vpop.permute.xlu0 %286
      %288 = vrot.lane.b32.xlu0 %v199, 4
      %v289 = vpop.permute.xlu0 %288
      %290 = vrot.lane.b32.xlu0 %v200, 4
      %v291 = vpop.permute.xlu0 %290
      %292 = vrot.lane.b32.xlu0 %v201, 4
      %v293 = vpop.permute.xlu0 %292
      %294 = vrot.lane.b32.xlu0 %v202, 4
      %v295 = vpop.permute.xlu0 %294
      %296 = vrot.lane.b32.xlu0 %v203, 4
      %v297 = vpop.permute.xlu0 %296
      %298 = vrot.lane.b32.xlu0 %v204, 4
      %v299 = vpop.permute.xlu0 %298
      %300 = vrot.lane.b32.xlu0 %v205, 4
      %v301 = vpop.permute.xlu0 %300
      %334 = vrot.lane.b32.xlu0 %v174, 8
      %v335 = vpop.permute.xlu0 %334
      %336 = vrot.lane.b32.xlu0 %v175, 8
      %v337 = vpop.permute.xlu0 %336
      %338 = vrot.lane.b32.xlu0 %v176, 8
      %v339 = vpop.permute.xlu0 %338
      %340 = vrot.lane.b32.xlu0 %v177, 8
      %v341 = vpop.permute.xlu0 %340
      %342 = vrot.lane.b32.xlu0 %v178, 8
      %v343 = vpop.permute.xlu0 %342
      %344 = vrot.lane.b32.xlu0 %v179, 8
      %v345 = vpop.permute.xlu0 %344
      %346 = vrot.lane.b32.xlu0 %v180, 8
      %v347 = vpop.permute.xlu0 %346
      %348 = vrot.lane.b32.xlu0 %v181, 8
      %v349 = vpop.permute.xlu0 %348
      %350 = vrot.lane.b32.xlu0 %v182, 8
      %v351 = vpop.permute.xlu0 %350
      %352 = vrot.lane.b32.xlu0 %v183, 8
      %v353 = vpop.permute.xlu0 %352
      %354 = vrot.lane.b32.xlu0 %v184, 8
      %v355 = vpop.permute.xlu0 %354
      %356 = vrot.lane.b32.xlu0 %v185, 8
      %v357 = vpop.permute.xlu0 %356
      %358 = vrot.lane.b32.xlu0 %v186, 8
      %v359 = vpop.permute.xlu0 %358
      %360 = vrot.lane.b32.xlu0 %v187, 8
      %v361 = vpop.permute.xlu0 %360
      %362 = vrot.lane.b32.xlu0 %v188, 8
      %v363 = vpop.permute.xlu0 %362
      %364 = vrot.lane.b32.xlu0 %v189, 8
      %v365 = vpop.permute.xlu0 %364
      %366 = vrot.lane.b32.xlu0 %v190, 8
      %v367 = vpop.permute.xlu0 %366
      %368 = vrot.lane.b32.xlu0 %v191, 8
      %v369 = vpop.permute.xlu0 %368
      %370 = vrot.lane.b32.xlu0 %v192, 8
      %v371 = vpop.permute.xlu0 %370
      %372 = vrot.lane.b32.xlu0 %v193, 8
      %v373 = vpop.permute.xlu0 %372
      %374 = vrot.lane.b32.xlu0 %v194, 8
      %v375 = vpop.permute.xlu0 %374
      %376 = vrot.lane.b32.xlu0 %v195, 8
      %v377 = vpop.permute.xlu0 %376
      %378 = vrot.lane.b32.xlu0 %v196, 8
      %v379 = vpop.permute.xlu0 %378
      %380 = vrot.lane.b32.xlu0 %v197, 8
      %v381 = vpop.permute.xlu0 %380
      %382 = vrot.lane.b32.xlu0 %v198, 8
      %v383 = vpop.permute.xlu0 %382
      %384 = vrot.lane.b32.xlu0 %v199, 8
      %v385 = vpop.permute.xlu0 %384
      %386 = vrot.lane.b32.xlu0 %v200, 8
      %v387 = vpop.permute.xlu0 %386
      %388 = vrot.lane.b32.xlu0 %v201, 8
      %v389 = vpop.permute.xlu0 %388
      %390 = vrot.lane.b32.xlu0 %v202, 8
      %v391 = vpop.permute.xlu0 %390
      %392 = vrot.lane.b32.xlu0 %v203, 8
      %v393 = vpop.permute.xlu0 %392
      %394 = vrot.lane.b32.xlu0 %v204, 8
      %v395 = vpop.permute.xlu0 %394
      %396 = vrot.lane.b32.xlu0 %v205, 8
      %v397 = vpop.permute.xlu0 %396
      %430 = vrot.lane.b32.xlu0 %v174, 12
      %v431 = vpop.permute.xlu0 %430
      %432 = vrot.lane.b32.xlu0 %v175, 12
      %v433 = vpop.permute.xlu0 %432
      %434 = vrot.lane.b32.xlu0 %v176, 12
      %v435 = vpop.permute.xlu0 %434
      %436 = vrot.lane.b32.xlu0 %v177, 12
      %v437 = vpop.permute.xlu0 %436
      %438 = vrot.lane.b32.xlu0 %v178, 12
      %v439 = vpop.permute.xlu0 %438
      %440 = vrot.lane.b32.xlu0 %v179, 12
      %v441 = vpop.permute.xlu0 %440
      %442 = vrot.lane.b32.xlu0 %v180, 12
      %v443 = vpop.permute.xlu0 %442
      %444 = vrot.lane.b32.xlu0 %v181, 12
      %v445 = vpop.permute.xlu0 %444
      %446 = vrot.lane.b32.xlu0 %v182, 12
      %v447 = vpop.permute.xlu0 %446
      %448 = vrot.lane.b32.xlu0 %v183, 12
      %v449 = vpop.permute.xlu0 %448
      %450 = vrot.lane.b32.xlu0 %v184, 12
      %v451 = vpop.permute.xlu0 %450
      %452 = vrot.lane.b32.xlu0 %v185, 12
      %v453 = vpop.permute.xlu0 %452
      %454 = vrot.lane.b32.xlu0 %v186, 12
      %v455 = vpop.permute.xlu0 %454
      %456 = vrot.lane.b32.xlu0 %v187, 12
      %v457 = vpop.permute.xlu0 %456
      %458 = vrot.lane.b32.xlu0 %v188, 12
      %v459 = vpop.permute.xlu0 %458
      %460 = vrot.lane.b32.xlu0 %v189, 12
      %v461 = vpop.permute.xlu0 %460
      %462 = vrot.lane.b32.xlu0 %v190, 12
      %v463 = vpop.permute.xlu0 %462
      %464 = vrot.lane.b32.xlu0 %v191, 12
      %v465 = vpop.permute.xlu0 %464
      %466 = vrot.lane.b32.xlu0 %v192, 12
      %v467 = vpop.permute.xlu0 %466
      %468 = vrot.lane.b32.xlu0 %v193, 12
      %v469 = vpop.permute.xlu0 %468
      %470 = vrot.lane.b32.xlu0 %v194, 12
      %v471 = vpop.permute.xlu0 %470
      %472 = vrot.lane.b32.xlu0 %v195, 12
      %v473 = vpop.permute.xlu0 %472
      %474 = vrot.lane.b32.xlu0 %v196, 12
      %v475 = vpop.permute.xlu0 %474
      %476 = vrot.lane.b32.xlu0 %v197, 12
      %v477 = vpop.permute.xlu0 %476
      %478 = vrot.lane.b32.xlu0 %v198, 12
      %v479 = vpop.permute.xlu0 %478
      %480 = vrot.lane.b32.xlu0 %v199, 12
      %v481 = vpop.permute.xlu0 %480
      %482 = vrot.lane.b32.xlu0 %v200, 12
      %v483 = vpop.permute.xlu0 %482
      %484 = vrot.lane.b32.xlu0 %v201, 12
      %v485 = vpop.permute.xlu0 %484
      %486 = vrot.lane.b32.xlu0 %v202, 12
      %v487 = vpop.permute.xlu0 %486
      %488 = vrot.lane.b32.xlu0 %v203, 12
      %v489 = vpop.permute.xlu0 %488
      %490 = vrot.lane.b32.xlu0 %v204, 12
      %v491 = vpop.permute.xlu0 %490
      %492 = vrot.lane.b32.xlu0 %v205, 12
      %v493 = vpop.permute.xlu0 %492
      %526 = vrot.lane.b32.xlu0 %v174, 16
      %v527 = vpop.permute.xlu0 %526
      %528 = vrot.lane.b32.xlu0 %v175, 16
      %v529 = vpop.permute.xlu0 %528
      %530 = vrot.lane.b32.xlu0 %v176, 16
      %v531 = vpop.permute.xlu0 %530
      %532 = vrot.lane.b32.xlu0 %v177, 16
      %v533 = vpop.permute.xlu0 %532
      %534 = vrot.lane.b32.xlu0 %v178, 16
      %v535 = vpop.permute.xlu0 %534
      %536 = vrot.lane.b32.xlu0 %v179, 16
      %v537 = vpop.permute.xlu0 %536
      %538 = vrot.lane.b32.xlu0 %v180, 16
      %v539 = vpop.permute.xlu0 %538
      %540 = vrot.lane.b32.xlu0 %v181, 16
      %v541 = vpop.permute.xlu0 %540
      %542 = vrot.lane.b32.xlu0 %v182, 16
      %v543 = vpop.permute.xlu0 %542
      %544 = vrot.lane.b32.xlu0 %v183, 16
      %v545 = vpop.permute.xlu0 %544
      %546 = vrot.lane.b32.xlu0 %v184, 16
      %v547 = vpop.permute.xlu0 %546
      %548 = vrot.lane.b32.xlu0 %v185, 16
      %v549 = vpop.permute.xlu0 %548
      %550 = vrot.lane.b32.xlu0 %v186, 16
      %v551 = vpop.permute.xlu0 %550
      %552 = vrot.lane.b32.xlu0 %v187, 16
      %v553 = vpop.permute.xlu0 %552
      %554 = vrot.lane.b32.xlu0 %v188, 16
      %v555 = vpop.permute.xlu0 %554
      %556 = vrot.lane.b32.xlu0 %v189, 16
      %v557 = vpop.permute.xlu0 %556
      %558 = vrot.lane.b32.xlu0 %v190, 16
      %v559 = vpop.permute.xlu0 %558
      %560 = vrot.lane.b32.xlu0 %v191, 16
      %v561 = vpop.permute.xlu0 %560
      %562 = vrot.lane.b32.xlu0 %v192, 16
      %v563 = vpop.permute.xlu0 %562
      %564 = vrot.lane.b32.xlu0 %v193, 16
      %v565 = vpop.permute.xlu0 %564
      %566 = vrot.lane.b32.xlu0 %v194, 16
      %v567 = vpop.permute.xlu0 %566
      %568 = vrot.lane.b32.xlu0 %v195, 16
      %v569 = vpop.permute.xlu0 %568
      %570 = vrot.lane.b32.xlu0 %v196, 16
      %v571 = vpop.permute.xlu0 %570
      %572 = vrot.lane.b32.xlu0 %v197, 16
      %v573 = vpop.permute.xlu0 %572
      %574 = vrot.lane.b32.xlu0 %v198, 16
      %v575 = vpop.permute.xlu0 %574
      %576 = vrot.lane.b32.xlu0 %v199, 16
      %v577 = vpop.permute.xlu0 %576
      %578 = vrot.lane.b32.xlu0 %v200, 16
      %v579 = vpop.permute.xlu0 %578
      %580 = vrot.lane.b32.xlu0 %v201, 16
      %v581 = vpop.permute.xlu0 %580
      %582 = vrot.lane.b32.xlu0 %v202, 16
      %v583 = vpop.permute.xlu0 %582
      %584 = vrot.lane.b32.xlu0 %v203, 16
      %v585 = vpop.permute.xlu0 %584
      %586 = vrot.lane.b32.xlu0 %v204, 16
      %v587 = vpop.permute.xlu0 %586
      %588 = vrot.lane.b32.xlu0 %v205, 16
      %v589 = vpop.permute.xlu0 %588
      %622 = vrot.lane.b32.xlu0 %v174, 20
      %v623 = vpop.permute.xlu0 %622
      %624 = vrot.lane.b32.xlu0 %v175, 20
      %v625 = vpop.permute.xlu0 %624
      %626 = vrot.lane.b32.xlu0 %v176, 20
      %v627 = vpop.permute.xlu0 %626
      %628 = vrot.lane.b32.xlu0 %v177, 20
      %v629 = vpop.permute.xlu0 %628
      %630 = vrot.lane.b32.xlu0 %v178, 20
      %v631 = vpop.permute.xlu0 %630
      %632 = vrot.lane.b32.xlu0 %v179, 20
      %v633 = vpop.permute.xlu0 %632
      %634 = vrot.lane.b32.xlu0 %v180, 20
      %v635 = vpop.permute.xlu0 %634
      %636 = vrot.lane.b32.xlu0 %v181, 20
      %v637 = vpop.permute.xlu0 %636
      %638 = vrot.lane.b32.xlu0 %v182, 20
      %v639 = vpop.permute.xlu0 %638
      %640 = vrot.lane.b32.xlu0 %v183, 20
      %v641 = vpop.permute.xlu0 %640
      %642 = vrot.lane.b32.xlu0 %v184, 20
      %v643 = vpop.permute.xlu0 %642
      %644 = vrot.lane.b32.xlu0 %v185, 20
      %v645 = vpop.permute.xlu0 %644
      %646 = vrot.lane.b32.xlu0 %v186, 20
      %v647 = vpop.permute.xlu0 %646
      %648 = vrot.lane.b32.xlu0 %v187, 20
      %v649 = vpop.permute.xlu0 %648
      %650 = vrot.lane.b32.xlu0 %v188, 20
      %v651 = vpop.permute.xlu0 %650
      %652 = vrot.lane.b32.xlu0 %v189, 20
      %v653 = vpop.permute.xlu0 %652
      %654 = vrot.lane.b32.xlu0 %v190, 20
      %v655 = vpop.permute.xlu0 %654
      %656 = vrot.lane.b32.xlu0 %v191, 20
      %v657 = vpop.permute.xlu0 %656
      %658 = vrot.lane.b32.xlu0 %v192, 20
      %v659 = vpop.permute.xlu0 %658
      %660 = vrot.lane.b32.xlu0 %v193, 20
      %v661 = vpop.permute.xlu0 %660
      %662 = vrot.lane.b32.xlu0 %v194, 20
      %v663 = vpop.permute.xlu0 %662
      %664 = vrot.lane.b32.xlu0 %v195, 20
      %v665 = vpop.permute.xlu0 %664
      %666 = vrot.lane.b32.xlu0 %v196, 20
      %v667 = vpop.permute.xlu0 %666
      %668 = vrot.lane.b32.xlu0 %v197, 20
      %v669 = vpop.permute.xlu0 %668
      %670 = vrot.lane.b32.xlu0 %v198, 20
      %v671 = vpop.permute.xlu0 %670
      %672 = vrot.lane.b32.xlu0 %v199, 20
      %v673 = vpop.permute.xlu0 %672
      %674 = vrot.lane.b32.xlu0 %v200, 20
      %v675 = vpop.permute.xlu0 %674
      %676 = vrot.lane.b32.xlu0 %v201, 20
      %v677 = vpop.permute.xlu0 %676
      %678 = vrot.lane.b32.xlu0 %v202, 20
      %v679 = vpop.permute.xlu0 %678
      %680 = vrot.lane.b32.xlu0 %v203, 20
      %v681 = vpop.permute.xlu0 %680
      %682 = vrot.lane.b32.xlu0 %v204, 20
      %v683 = vpop.permute.xlu0 %682
      %684 = vrot.lane.b32.xlu0 %v205, 20
      %v685 = vpop.permute.xlu0 %684
      %718 = vrot.lane.b32.xlu0 %v174, 24
      %v719 = vpop.permute.xlu0 %718
      %720 = vrot.lane.b32.xlu0 %v175, 24
      %v721 = vpop.permute.xlu0 %720
      %722 = vrot.lane.b32.xlu0 %v176, 24
      %v723 = vpop.permute.xlu0 %722
      %724 = vrot.lane.b32.xlu0 %v177, 24
      %v725 = vpop.permute.xlu0 %724
      %726 = vrot.lane.b32.xlu0 %v178, 24
      %v727 = vpop.permute.xlu0 %726
      %728 = vrot.lane.b32.xlu0 %v179, 24
      %v729 = vpop.permute.xlu0 %728
      %730 = vrot.lane.b32.xlu0 %v180, 24
      %v731 = vpop.permute.xlu0 %730
      %732 = vrot.lane.b32.xlu0 %v181, 24
      %v733 = vpop.permute.xlu0 %732
      %734 = vrot.lane.b32.xlu0 %v182, 24
      %v735 = vpop.permute.xlu0 %734
      %736 = vrot.lane.b32.xlu0 %v183, 24
      %v737 = vpop.permute.xlu0 %736
      %738 = vrot.lane.b32.xlu0 %v184, 24
      %v739 = vpop.permute.xlu0 %738
      %740 = vrot.lane.b32.xlu0 %v185, 24
      %v741 = vpop.permute.xlu0 %740
      %742 = vrot.lane.b32.xlu0 %v186, 24
      %v743 = vpop.permute.xlu0 %742
      %744 = vrot.lane.b32.xlu0 %v187, 24
      %v745 = vpop.permute.xlu0 %744
      %746 = vrot.lane.b32.xlu0 %v188, 24
      %v747 = vpop.permute.xlu0 %746
      %748 = vrot.lane.b32.xlu0 %v189, 24
      %v749 = vpop.permute.xlu0 %748
      %750 = vrot.lane.b32.xlu0 %v190, 24
      %v751 = vpop.permute.xlu0 %750
      %752 = vrot.lane.b32.xlu0 %v191, 24
      %v753 = vpop.permute.xlu0 %752
      %754 = vrot.lane.b32.xlu0 %v192, 24
      %v755 = vpop.permute.xlu0 %754
      %756 = vrot.lane.b32.xlu0 %v193, 24
      %v757 = vpop.permute.xlu0 %756
      %758 = vrot.lane.b32.xlu0 %v194, 24
      %v759 = vpop.permute.xlu0 %758
      %760 = vrot.lane.b32.xlu0 %v195, 24
      %v761 = vpop.permute.xlu0 %760
      %762 = vrot.lane.b32.xlu0 %v196, 24
      %v763 = vpop.permute.xlu0 %762
      %764 = vrot.lane.b32.xlu0 %v197, 24
      %v765 = vpop.permute.xlu0 %764
      %766 = vrot.lane.b32.xlu0 %v198, 24
      %v767 = vpop.permute.xlu0 %766
      %768 = vrot.lane.b32.xlu0 %v199, 24
      %v769 = vpop.permute.xlu0 %768
      %770 = vrot.lane.b32.xlu0 %v200, 24
      %v771 = vpop.permute.xlu0 %770
      %772 = vrot.lane.b32.xlu0 %v201, 24
      %v773 = vpop.permute.xlu0 %772
      %774 = vrot.lane.b32.xlu0 %v202, 24
      %v775 = vpop.permute.xlu0 %774
      %776 = vrot.lane.b32.xlu0 %v203, 24
      %v777 = vpop.permute.xlu0 %776
      %778 = vrot.lane.b32.xlu0 %v204, 24
      %v779 = vpop.permute.xlu0 %778
      %780 = vrot.lane.b32.xlu0 %v205, 24
      %v781 = vpop.permute.xlu0 %780
      %814 = vrot.lane.b32.xlu0 %v174, 28
      %v815 = vpop.permute.xlu0 %814
      %816 = vrot.lane.b32.xlu0 %v175, 28
      %v817 = vpop.permute.xlu0 %816
      %818 = vrot.lane.b32.xlu0 %v176, 28
      %v819 = vpop.permute.xlu0 %818
      %820 = vrot.lane.b32.xlu0 %v177, 28
      %v821 = vpop.permute.xlu0 %820
      %822 = vrot.lane.b32.xlu0 %v178, 28
      %v823 = vpop.permute.xlu0 %822
      %824 = vrot.lane.b32.xlu0 %v179, 28
      %v825 = vpop.permute.xlu0 %824
      %826 = vrot.lane.b32.xlu0 %v180, 28
      %v827 = vpop.permute.xlu0 %826
      %828 = vrot.lane.b32.xlu0 %v181, 28
      %v829 = vpop.permute.xlu0 %828
      %830 = vrot.lane.b32.xlu0 %v182, 28
      %v831 = vpop.permute.xlu0 %830
      %832 = vrot.lane.b32.xlu0 %v183, 28
      %v833 = vpop.permute.xlu0 %832
      %834 = vrot.lane.b32.xlu0 %v184, 28
      %v835 = vpop.permute.xlu0 %834
      %836 = vrot.lane.b32.xlu0 %v185, 28
      %v837 = vpop.permute.xlu0 %836
      %838 = vrot.lane.b32.xlu0 %v186, 28
      %v839 = vpop.permute.xlu0 %838
      %840 = vrot.lane.b32.xlu0 %v187, 28
      %v841 = vpop.permute.xlu0 %840
      %842 = vrot.lane.b32.xlu0 %v188, 28
      %v843 = vpop.permute.xlu0 %842
      %844 = vrot.lane.b32.xlu0 %v189, 28
      %v845 = vpop.permute.xlu0 %844
      %846 = vrot.lane.b32.xlu0 %v190, 28
      %v847 = vpop.permute.xlu0 %846
      %848 = vrot.lane.b32.xlu0 %v191, 28
      %v849 = vpop.permute.xlu0 %848
      %850 = vrot.lane.b32.xlu0 %v192, 28
      %v851 = vpop.permute.xlu0 %850
      %852 = vrot.lane.b32.xlu0 %v193, 28
      %v853 = vpop.permute.xlu0 %852
      %854 = vrot.lane.b32.xlu0 %v194, 28
      %v855 = vpop.permute.xlu0 %854
      %856 = vrot.lane.b32.xlu0 %v195, 28
      %v857 = vpop.permute.xlu0 %856
      %858 = vrot.lane.b32.xlu0 %v196, 28
      %v859 = vpop.permute.xlu0 %858
      %860 = vrot.lane.b32.xlu0 %v197, 28
      %v861 = vpop.permute.xlu0 %860
      %862 = vrot.lane.b32.xlu0 %v198, 28
      %v863 = vpop.permute.xlu0 %862
      %864 = vrot.lane.b32.xlu0 %v199, 28
      %v865 = vpop.permute.xlu0 %864
      %866 = vrot.lane.b32.xlu0 %v200, 28
      %v867 = vpop.permute.xlu0 %866
      %868 = vrot.lane.b32.xlu0 %v201, 28
      %v869 = vpop.permute.xlu0 %868
      %870 = vrot.lane.b32.xlu0 %v202, 28
      %v871 = vpop.permute.xlu0 %870
      %872 = vrot.lane.b32.xlu0 %v203, 28
      %v873 = vpop.permute.xlu0 %872
      %874 = vrot.lane.b32.xlu0 %v204, 28
      %v875 = vpop.permute.xlu0 %874
      %876 = vrot.lane.b32.xlu0 %v205, 28
      %v877 = vpop.permute.xlu0 %876
      %vm910 = vcmask 31744
      %v911 = vsel %vm910, %v174, %v239
      %v912 = vsel %vm910, %v175, %v241
      %v913 = vsel %vm910, %v176, %v243
      %v914 = vsel %vm910, %v177, %v245
      %v915 = vsel %vm910, %v178, %v247
      %v916 = vsel %vm910, %v179, %v249
      %v917 = vsel %vm910, %v180, %v251
      %v918 = vsel %vm910, %v181, %v253
      %v919 = vsel %vm910, %v182, %v255
      %v920 = vsel %vm910, %v183, %v257
      %v921 = vsel %vm910, %v184, %v259
      %v922 = vsel %vm910, %v185, %v261
      %v923 = vsel %vm910, %v186, %v263
      %v924 = vsel %vm910, %v187, %v265
      %v925 = vsel %vm910, %v188, %v267
      %v926 = vsel %vm910, %v189, %v269
      %v927 = vsel %vm910, %v190, %v271
      %v928 = vsel %vm910, %v191, %v273
      %v929 = vsel %vm910, %v192, %v275
      %v930 = vsel %vm910, %v193, %v277
      %v931 = vsel %vm910, %v194, %v279
      %v932 = vsel %vm910, %v195, %v281
      %v933 = vsel %vm910, %v196, %v283
      %v934 = vsel %vm910, %v197, %v285
      %v935 = vsel %vm910, %v198, %v287
      %v936 = vsel %vm910, %v199, %v289
      %v937 = vsel %vm910, %v200, %v291
      %v938 = vsel %vm910, %v201, %v293
      %v939 = vsel %vm910, %v202, %v295
      %v940 = vsel %vm910, %v203, %v297
      %v941 = vsel %vm910, %v204, %v299
      %v942 = vsel %vm910, %v205, %v301
      %vm943 = vcmask 64512
      %v944 = vsel %vm943, %v911, %v335
      %v945 = vsel %vm943, %v912, %v337
      %v946 = vsel %vm943, %v913, %v339
      %v947 = vsel %vm943, %v914, %v341
      %v948 = vsel %vm943, %v915, %v343
      %v949 = vsel %vm943, %v916, %v345
      %v950 = vsel %vm943, %v917, %v347
      %v951 = vsel %vm943, %v918, %v349
      %v952 = vsel %vm943, %v919, %v351
      %v953 = vsel %vm943, %v920, %v353
      %v954 = vsel %vm943, %v921, %v355
      %v955 = vsel %vm943, %v922, %v357
      %v956 = vsel %vm943, %v923, %v359
      %v957 = vsel %vm943, %v924, %v361
      %v958 = vsel %vm943, %v925, %v363
      %v959 = vsel %vm943, %v926, %v365
      %v960 = vsel %vm943, %v927, %v367
      %v961 = vsel %vm943, %v928, %v369
      %v962 = vsel %vm943, %v929, %v371
      %v963 = vsel %vm943, %v930, %v373
      %v964 = vsel %vm943, %v931, %v375
      %v965 = vsel %vm943, %v932, %v377
      %v966 = vsel %vm943, %v933, %v379
      %v967 = vsel %vm943, %v934, %v381
      %v968 = vsel %vm943, %v935, %v383
      %v969 = vsel %vm943, %v936, %v385
      %v970 = vsel %vm943, %v937, %v387
      %v971 = vsel %vm943, %v938, %v389
      %v972 = vsel %vm943, %v939, %v391
      %v973 = vsel %vm943, %v940, %v393
      %v974 = vsel %vm943, %v941, %v395
      %v975 = vsel %vm943, %v942, %v397
      %vm976 = vcmask 97280
      %v977 = vsel %vm976, %v944, %v431
      %v978 = vsel %vm976, %v945, %v433
      %v979 = vsel %vm976, %v946, %v435
      %v980 = vsel %vm976, %v947, %v437
      %v981 = vsel %vm976, %v948, %v439
      %v982 = vsel %vm976, %v949, %v441
      %v983 = vsel %vm976, %v950, %v443
      %v984 = vsel %vm976, %v951, %v445
      %v985 = vsel %vm976, %v952, %v447
      %v986 = vsel %vm976, %v953, %v449
      %v987 = vsel %vm976, %v954, %v451
      %v988 = vsel %vm976, %v955, %v453
      %v989 = vsel %vm976, %v956, %v455
      %v990 = vsel %vm976, %v957, %v457
      %v991 = vsel %vm976, %v958, %v459
      %v992 = vsel %vm976, %v959, %v461
      %v993 = vsel %vm976, %v960, %v463
      %v994 = vsel %vm976, %v961, %v465
      %v995 = vsel %vm976, %v962, %v467
      %v996 = vsel %vm976, %v963, %v469
      %v997 = vsel %vm976, %v964, %v471
      %v998 = vsel %vm976, %v965, %v473
      %v999 = vsel %vm976, %v966, %v475
      %v1000 = vsel %vm976, %v967, %v477
      %v1001 = vsel %vm976, %v968, %v479
      %v1002 = vsel %vm976, %v969, %v481
      %v1003 = vsel %vm976, %v970, %v483
      %v1004 = vsel %vm976, %v971, %v485
      %v1005 = vsel %vm976, %v972, %v487
      %v1006 = vsel %vm976, %v973, %v489
      %v1007 = vsel %vm976, %v974, %v491
      %v1008 = vsel %vm976, %v975, %v493
      %vm1009 = vcmask 130048
      %v1010 = vsel %vm1009, %v977, %v527
      %v1011 = vsel %vm1009, %v978, %v529
      %v1012 = vsel %vm1009, %v979, %v531
      %v1013 = vsel %vm1009, %v980, %v533
      %v1014 = vsel %vm1009, %v981, %v535
      %v1015 = vsel %vm1009, %v982, %v537
      %v1016 = vsel %vm1009, %v983, %v539
      %v1017 = vsel %vm1009, %v984, %v541
      %v1018 = vsel %vm1009, %v985, %v543
      %v1019 = vsel %vm1009, %v986, %v545
      %v1020 = vsel %vm1009, %v987, %v547
      %v1021 = vsel %vm1009, %v988, %v549
      %v1022 = vsel %vm1009, %v989, %v551
      %v1023 = vsel %vm1009, %v990, %v553
      %v1024 = vsel %vm1009, %v991, %v555
      %v1025 = vsel %vm1009, %v992, %v557
      %v1026 = vsel %vm1009, %v993, %v559
      %v1027 = vsel %vm1009, %v994, %v561
      %v1028 = vsel %vm1009, %v995, %v563
      %v1029 = vsel %vm1009, %v996, %v565
      %v1030 = vsel %vm1009, %v997, %v567
      %v1031 = vsel %vm1009, %v998, %v569
      %v1032 = vsel %vm1009, %v999, %v571
      %v1033 = vsel %vm1009, %v1000, %v573
      %v1034 = vsel %vm1009, %v1001, %v575
      %v1035 = vsel %vm1009, %v1002, %v577
      %v1036 = vsel %vm1009, %v1003, %v579
      %v1037 = vsel %vm1009, %v1004, %v581
      %v1038 = vsel %vm1009, %v1005, %v583
      %v1039 = vsel %vm1009, %v1006, %v585
      %v1040 = vsel %vm1009, %v1007, %v587
      %v1041 = vsel %vm1009, %v1008, %v589
      %vm1042 = vcmask 162816
      %v1043 = vsel %vm1042, %v1010, %v623
      %v1044 = vsel %vm1042, %v1011, %v625
      %v1045 = vsel %vm1042, %v1012, %v627
      %v1046 = vsel %vm1042, %v1013, %v629
      %v1047 = vsel %vm1042, %v1014, %v631
      %v1048 = vsel %vm1042, %v1015, %v633
      %v1049 = vsel %vm1042, %v1016, %v635
      %v1050 = vsel %vm1042, %v1017, %v637
      %v1051 = vsel %vm1042, %v1018, %v639
      %v1052 = vsel %vm1042, %v1019, %v641
      %v1053 = vsel %vm1042, %v1020, %v643
      %v1054 = vsel %vm1042, %v1021, %v645
      %v1055 = vsel %vm1042, %v1022, %v647
      %v1056 = vsel %vm1042, %v1023, %v649
      %v1057 = vsel %vm1042, %v1024, %v651
      %v1058 = vsel %vm1042, %v1025, %v653
      %v1059 = vsel %vm1042, %v1026, %v655
      %v1060 = vsel %vm1042, %v1027, %v657
      %v1061 = vsel %vm1042, %v1028, %v659
      %v1062 = vsel %vm1042, %v1029, %v661
      %v1063 = vsel %vm1042, %v1030, %v663
      %v1064 = vsel %vm1042, %v1031, %v665
      %v1065 = vsel %vm1042, %v1032, %v667
      %v1066 = vsel %vm1042, %v1033, %v669
      %v1067 = vsel %vm1042, %v1034, %v671
      %v1068 = vsel %vm1042, %v1035, %v673
      %v1069 = vsel %vm1042, %v1036, %v675
      %v1070 = vsel %vm1042, %v1037, %v677
      %v1071 = vsel %vm1042, %v1038, %v679
      %v1072 = vsel %vm1042, %v1039, %v681
      %v1073 = vsel %vm1042, %v1040, %v683
      %v1074 = vsel %vm1042, %v1041, %v685
      %vm1075 = vcmask 195584
      %v1076 = vsel %vm1075, %v1043, %v719
      %v1077 = vsel %vm1075, %v1044, %v721
      %v1078 = vsel %vm1075, %v1045, %v723
      %v1079 = vsel %vm1075, %v1046, %v725
      %v1080 = vsel %vm1075, %v1047, %v727
      %v1081 = vsel %vm1075, %v1048, %v729
      %v1082 = vsel %vm1075, %v1049, %v731
      %v1083 = vsel %vm1075, %v1050, %v733
      %v1084 = vsel %vm1075, %v1051, %v735
      %v1085 = vsel %vm1075, %v1052, %v737
      %v1086 = vsel %vm1075, %v1053, %v739
      %v1087 = vsel %vm1075, %v1054, %v741
      %v1088 = vsel %vm1075, %v1055, %v743
      %v1089 = vsel %vm1075, %v1056, %v745
      %v1090 = vsel %vm1075, %v1057, %v747
      %v1091 = vsel %vm1075, %v1058, %v749
      %v1092 = vsel %vm1075, %v1059, %v751
      %v1093 = vsel %vm1075, %v1060, %v753
      %v1094 = vsel %vm1075, %v1061, %v755
      %v1095 = vsel %vm1075, %v1062, %v757
      %v1096 = vsel %vm1075, %v1063, %v759
      %v1097 = vsel %vm1075, %v1064, %v761
      %v1098 = vsel %vm1075, %v1065, %v763
      %v1099 = vsel %vm1075, %v1066, %v765
      %v1100 = vsel %vm1075, %v1067, %v767
      %v1101 = vsel %vm1075, %v1068, %v769
      %v1102 = vsel %vm1075, %v1069, %v771
      %v1103 = vsel %vm1075, %v1070, %v773
      %v1104 = vsel %vm1075, %v1071, %v775
      %v1105 = vsel %vm1075, %v1072, %v777
      %v1106 = vsel %vm1075, %v1073, %v779
      %v1107 = vsel %vm1075, %v1074, %v781
      %vm1108 = vcmask 228352
      %v1109 = vsel %vm1108, %v1076, %v815
      %v1110 = vsel %vm1108, %v1077, %v817
      %v1111 = vsel %vm1108, %v1078, %v819
      %v1112 = vsel %vm1108, %v1079, %v821
      %v1113 = vsel %vm1108, %v1080, %v823
      %v1114 = vsel %vm1108, %v1081, %v825
      %v1115 = vsel %vm1108, %v1082, %v827
      %v1116 = vsel %vm1108, %v1083, %v829
      %v1117 = vsel %vm1108, %v1084, %v831
      %v1118 = vsel %vm1108, %v1085, %v833
      %v1119 = vsel %vm1108, %v1086, %v835
      %v1120 = vsel %vm1108, %v1087, %v837
      %v1121 = vsel %vm1108, %v1088, %v839
      %v1122 = vsel %vm1108, %v1089, %v841
      %v1123 = vsel %vm1108, %v1090, %v843
      %v1124 = vsel %vm1108, %v1091, %v845
      %v1125 = vsel %vm1108, %v1092, %v847
      %v1126 = vsel %vm1108, %v1093, %v849
      %v1127 = vsel %vm1108, %v1094, %v851
      %v1128 = vsel %vm1108, %v1095, %v853
      %v1129 = vsel %vm1108, %v1096, %v855
      %v1130 = vsel %vm1108, %v1097, %v857
      %v1131 = vsel %vm1108, %v1098, %v859
      %v1132 = vsel %vm1108, %v1099, %v861
      %v1133 = vsel %vm1108, %v1100, %v863
      %v1134 = vsel %vm1108, %v1101, %v865
      %v1135 = vsel %vm1108, %v1102, %v867
      %v1136 = vsel %vm1108, %v1103, %v869
      %v1137 = vsel %vm1108, %v1104, %v871
      %v1138 = vsel %vm1108, %v1105, %v873
      %v1139 = vsel %vm1108, %v1106, %v875
      %v1140 = vsel %vm1108, %v1107, %v877
      %v1141 = vld [vmem:[%s0] sm:$0x1]
      %v1143 = vperm.slane %v1141, 0
      %v1145 = vmul.f32 %v1109, %v1143
      %v1146 = vmul.f32 %v1110, %v1143
      %v1147 = vmul.f32 %v1111, %v1143
      %v1148 = vmul.f32 %v1112, %v1143
      %v1149 = vmul.f32 %v1113, %v1143
      %v1150 = vmul.f32 %v1114, %v1143
      %v1151 = vmul.f32 %v1115, %v1143
      %v1152 = vmul.f32 %v1116, %v1143
      %v1153 = vmul.f32 %v1117, %v1143
      %v1154 = vmul.f32 %v1118, %v1143
      %v1155 = vmul.f32 %v1119, %v1143
      %v1156 = vmul.f32 %v1120, %v1143
      %v1157 = vmul.f32 %v1121, %v1143
      %v1158 = vmul.f32 %v1122, %v1143
      %v1159 = vmul.f32 %v1123, %v1143
      %v1160 = vmul.f32 %v1124, %v1143
      %v1161 = vmul.f32 %v1125, %v1143
      %v1162 = vmul.f32 %v1126, %v1143
      %v1163 = vmul.f32 %v1127, %v1143
      %v1164 = vmul.f32 %v1128, %v1143
      %v1165 = vmul.f32 %v1129, %v1143
      %v1166 = vmul.f32 %v1130, %v1143
      %v1167 = vmul.f32 %v1131, %v1143
      %v1168 = vmul.f32 %v1132, %v1143
      %v1169 = vmul.f32 %v1133, %v1143
      %v1170 = vmul.f32 %v1134, %v1143
      %v1171 = vmul.f32 %v1135, %v1143
      %v1172 = vmul.f32 %v1136, %v1143
      %v1173 = vmul.f32 %v1137, %v1143
      %v1174 = vmul.f32 %v1138, %v1143
      %v1175 = vmul.f32 %v1139, %v1143
      %v1176 = vmul.f32 %v1140, %v1143
      %v1177 = vld [vmem:[%s1] sm:$0x1]
      %v1179 = vperm.slane %v1177, 0
      %v1181 = vadd.f32 %v1145, %v1179
      %v1182 = vadd.f32 %v1146, %v1179
      %v1183 = vadd.f32 %v1147, %v1179
      %v1184 = vadd.f32 %v1148, %v1179
      %v1185 = vadd.f32 %v1149, %v1179
      %v1186 = vadd.f32 %v1150, %v1179
      %v1187 = vadd.f32 %v1151, %v1179
      %v1188 = vadd.f32 %v1152, %v1179
      %v1189 = vadd.f32 %v1153, %v1179
      %v1190 = vadd.f32 %v1154, %v1179
      %v1191 = vadd.f32 %v1155, %v1179
      %v1192 = vadd.f32 %v1156, %v1179
      %v1193 = vadd.f32 %v1157, %v1179
      %v1194 = vadd.f32 %v1158, %v1179
      %v1195 = vadd.f32 %v1159, %v1179
      %v1196 = vadd.f32 %v1160, %v1179
      %v1197 = vadd.f32 %v1161, %v1179
      %v1198 = vadd.f32 %v1162, %v1179
      %v1199 = vadd.f32 %v1163, %v1179
      %v1200 = vadd.f32 %v1164, %v1179
      %v1201 = vadd.f32 %v1165, %v1179
      %v1202 = vadd.f32 %v1166, %v1179
      %v1203 = vadd.f32 %v1167, %v1179
      %v1204 = vadd.f32 %v1168, %v1179
      %v1205 = vadd.f32 %v1169, %v1179
      %v1206 = vadd.f32 %v1170, %v1179
      %v1207 = vadd.f32 %v1171, %v1179
      %v1208 = vadd.f32 %v1172, %v1179
      %v1209 = vadd.f32 %v1173, %v1179
      %v1210 = vadd.f32 %v1174, %v1179
      %v1211 = vadd.f32 %v1175, %v1179
      %v1212 = vadd.f32 %v1176, %v1179
      %v1213 = vand.u32 2147483647, %v1181
      %vm1214 = vcmp.le.f32.partialorder %v1213, 0.7853982
      %vm1215 = vcmp.lt.s32.totalorder %v1181, 0
      %v1216 = vand.u32 %v1181, 2139095040
      %v1217 = vshrl.u32 %v1216, 23
      %v1218 = vsub.s32 %v1217, 127
      %v1219 = vand.u32 2147483647, %v1181
      %v1220 = vand.u32 %v1219, 8388607
      %v1221 = vor.u32 %v1220, 8388608
      %v1222 = vsub.s32 0, %v1221
      %v1223 = vadd.s32 %v1218, 1
      %vm1224 = vcmp.gt.s32.totalorder %v1223, 0
      %v1225 = vsel %vm1224, %v1223, 0
      %v1226 = vshrl.u32 %v1225, 5
      %v1227 = vand.u32 %v1225, 31
      %v1228 = vsub.s32 32, %v1227
      %v1229 = vshrl.u32 683565275, %v1228
      %v1230 = vshll.u32 683565275, %v1227
      %v1231 = vshrl.u32 2475754826, %v1228
      %v1232 = vor.u32 %v1230, %v1231
      %v1233 = vshll.u32 2475754826, %v1227
      %v1234 = vshrl.u32 2131351028, %v1228
      %v1235 = vor.u32 %v1233, %v1234
      %v1236 = vshll.u32 2131351028, %v1227
      %v1237 = vshrl.u32 2102212464, %v1228
      %v1238 = vor.u32 %v1236, %v1237
      %v1239 = vshll.u32 2102212464, %v1227
      %v1240 = vshrl.u32 920167782, %v1228
      %v1241 = vor.u32 %v1239, %v1240
      %v1242 = vshll.u32 920167782, %v1227
      %v1243 = vshrl.u32 1326507024, %v1228
      %v1244 = vor.u32 %v1242, %v1243
      %vm1245 = vcmp.lt.s32.totalorder %v1226, 1
      %vm1246 = vcmp.lt.s32.totalorder %v1226, 2
      %vm1247 = vcmp.lt.s32.totalorder %v1226, 3
      %vm1248 = vcmp.lt.s32.totalorder %v1226, 4
      %v1249 = vsel %vm1245, %v1229, %v1232
      %v1250 = vsel %vm1248, %v1238, 2102212464
      %v1251 = vsel %vm1247, %v1235, %v1250
      %v1252 = vsel %vm1246, %v1249, %v1251
      %v1253 = vsel %vm1245, %v1232, %v1235
      %v1254 = vsel %vm1248, %v1241, 920167782
      %v1255 = vsel %vm1247, %v1238, %v1254
      %v1256 = vsel %vm1246, %v1253, %v1255
      %v1257 = vsel %vm1245, %v1235, %v1238
      %v1258 = vsel %vm1248, %v1244, 1326507024
      %v1259 = vsel %vm1247, %v1241, %v1258
      %v1260 = vsel %vm1246, %v1257, %v1259
      %v1261 = vshll.u32 %v1221, 8
      %v1262 = vand.u32 %v1261, 65535
      %v1263 = vshrl.u32 %v1261, 16
      %v1264 = vand.u32 %v1260, 65535
      %v1265 = vshrl.u32 %v1260, 16
      %v1266 = vmul.u32 %v1262, %v1264
      %v1267 = vmul.u32 %v1262, %v1265
      %v1268 = vmul.u32 %v1263, %v1264
      %v1269 = vmul.u32 %v1263, %v1265
      %v1270 = vshll.u32 %v1267, 16
      %v1271 = vshrl.u32 %v1267, 16
      %v1272 = vshll.u32 %v1268, 16
      %v1273 = vshrl.u32 %v1268, 16
      %vm1274 = vc.u32 %v1266, %v1270
      %v1275 = vsel %vm1274, 1, 0
      %v1276 = vadd.s32 %v1266, %v1270
      %v1277 = vadd.s32 %v1269, %v1275
      %vm1278 = vc.u32 %v1276, %v1272
      %v1279 = vsel %vm1278, 1, 0
      %v1280 = vadd.s32 %v1276, %v1272
      %v1281 = vadd.s32 %v1277, %v1279
      %v1282 = vadd.s32 %v1281, %v1271
      %v1283 = vadd.s32 %v1282, %v1273
      %v1284 = vand.u32 %v1261, 65535
      %v1285 = vshrl.u32 %v1261, 16
      %v1286 = vand.u32 %v1256, 65535
      %v1287 = vshrl.u32 %v1256, 16
      %v1288 = vmul.u32 %v1284, %v1286
      %v1289 = vmul.u32 %v1284, %v1287
      %v1290 = vmul.u32 %v1285, %v1286
      %v1291 = vmul.u32 %v1285, %v1287
      %v1292 = vshll.u32 %v1289, 16
      %v1293 = vshrl.u32 %v1289, 16
      %v1294 = vshll.u32 %v1290, 16
      %v1295 = vshrl.u32 %v1290, 16
      %vm1296 = vc.u32 %v1288, %v1292
      %v1297 = vsel %vm1296, 1, 0
      %v1298 = vadd.s32 %v1288, %v1292
      %v1299 = vadd.s32 %v1291, %v1297
      %vm1300 = vc.u32 %v1298, %v1294
      %v1301 = vsel %vm1300, 1, 0
      %v1302 = vadd.s32 %v1298, %v1294
      %v1303 = vadd.s32 %v1299, %v1301
      %v1304 = vadd.s32 %v1303, %v1293
      %v1305 = vadd.s32 %v1304, %v1295
      %v1306 = vmul.u32 %v1261, %v1252
      %v1307 = vadd.s32 %v1283, %v1302
      %vm1308 = vc.u32 %v1283, %v1302
      %v1309 = vadd.s32 %v1305, 1
      %v1310 = vsel %vm1308, %v1309, %v1305
      %v1311 = vadd.s32 %v1306, %v1310
      %v1312 = vadd.s32 %v1311, 536870912
      %v1313 = vshrl.u32 %v1312, 30
      %v1314 = vshll.u32 %v1313, 30
      %v1315 = vsub.s32 %v1311, %v1314
      %vm1316 = vcmp.lt.s32.totalorder %v1315, 0
      %v1317 = vsub.s32 0, %v1315
      %v1318 = vsel %vm1316, %v1317, %v1315
      %v1319 = vclz %v1318
      %v1320 = vsub.s32 %v1319, 2
      %vm1321 = vcmp.gt.s32.totalorder 0, %v1320
      %v1322 = vsel %vm1321, 0, %v1320
      %v1323 = vsub.s32 32, %v1322
      %v1324 = vshll.u32 %v1315, %v1322
      %v1325 = vshrl.u32 %v1307, %v1323
      %v1326 = vor.u32 %v1324, %v1325
      %v1327 = vsub.s32 4294967266, %v1322
      %v1328 = vadd.s32 %v1327, 127
      %v1329 = vshll.u32 %v1328, 23
      %v1330 = vor.u32 4788187, %v1329
      %v1331 = vand.u32 2147483647, %v1330
      %v1333 = vcvt.s32.f32 %v1326
      %v1334 = vmul.f32 %v1333, %v1331
      %v1335 = vxor.u32 %v1334, 2147483648
      %v1336 = vsel %vm1215, %v1335, %v1334
      %v1337 = vsub.s32 4, %v1313
      %v1338 = vsel %vm1215, %v1337, %v1313
      %v1339 = vsel %vm1214, %v1181, %v1336
      %v1340 = vsel %vm1214, 0, %v1338
      %v1341 = vmul.f32 %v1339, %v1339
      %v1342 = vmul.f32 %v1341, -0.001358992
      %v1343 = vadd.f32 %v1342, 0.041655596
      %v1344 = vmul.f32 %v1341, %v1343
      %v1345 = vadd.f32 %v1344, -0.4999988
      %v1346 = vmul.f32 %v1341, %v1345
      %v1347 = vadd.f32 1.0, %v1346
      %v1348 = vmul.f32 %v1339, %v1339
      %v1349 = vmul.f32 %v1348, -0.00019511016
      %v1350 = vadd.f32 %v1349, 0.008332121
      %v1351 = vmul.f32 %v1348, %v1350
      %v1352 = vadd.f32 %v1351, -0.16666654
      %v1353 = vmul.f32 %v1348, %v1352
      %v1354 = vadd.f32 %v1353, 1.0
      %v1355 = vmul.f32 %v1354, %v1339
      %vm1356 = vweird.f32 %v1181
      %v1357 = vadd.s32 %v1340, 3
      %v1358 = vand.u32 %v1357, 3
      %vm1359 = vcmp.lt.s32.totalorder %v1358, 2
      %vm1360 = vcmp.eq.s32.totalorder %v1358, 0
      %v1361 = vxor.u32 %v1355, 2147483648
      %v1362 = vsel %vm1360, %v1347, %v1361
      %vm1363 = vcmp.eq.s32.totalorder %v1358, 2
      %v1364 = vxor.u32 %v1347, 2147483648
      %v1365 = vsel %vm1363, %v1364, %v1355
      %v1366 = vsel %vm1359, %v1362, %v1365
      %v1367 = vsel %vm1356, nan, %v1366
      %v1368 = vand.u32 2147483647, %v1182
      %vm1369 = vcmp.le.f32.partialorder %v1368, 0.7853982
      %vm1370 = vcmp.lt.s32.totalorder %v1182, 0
      %v1371 = vand.u32 %v1182, 2139095040
      %v1372 = vshrl.u32 %v1371, 23
      %v1373 = vsub.s32 %v1372, 127
      %v1374 = vand.u32 2147483647, %v1182
      %v1375 = vand.u32 %v1374, 8388607
      %v1376 = vor.u32 %v1375, 8388608
      %v1377 = vsub.s32 0, %v1376
      %v1378 = vadd.s32 %v1373, 1
      %vm1379 = vcmp.gt.s32.totalorder %v1378, 0
      %v1380 = vsel %vm1379, %v1378, 0
      %v1381 = vshrl.u32 %v1380, 5
      %v1382 = vand.u32 %v1380, 31
      %v1383 = vsub.s32 32, %v1382
      %v1384 = vshrl.u32 683565275, %v1383
      %v1385 = vshll.u32 683565275, %v1382
      %v1386 = vshrl.u32 2475754826, %v1383
      %v1387 = vor.u32 %v1385, %v1386
      %v1388 = vshll.u32 2475754826, %v1382
      %v1389 = vshrl.u32 2131351028, %v1383
      %v1390 = vor.u32 %v1388, %v1389
      %v1391 = vshll.u32 2131351028, %v1382
      %v1392 = vshrl.u32 2102212464, %v1383
      %v1393 = vor.u32 %v1391, %v1392
      %v1394 = vshll.u32 2102212464, %v1382
      %v1395 = vshrl.u32 920167782, %v1383
      %v1396 = vor.u32 %v1394, %v1395
      %v1397 = vshll.u32 920167782, %v1382
      %v1398 = vshrl.u32 1326507024, %v1383
      %v1399 = vor.u32 %v1397, %v1398
      %vm1400 = vcmp.lt.s32.totalorder %v1381, 1
      %vm1401 = vcmp.lt.s32.totalorder %v1381, 2
      %vm1402 = vcmp.lt.s32.totalorder %v1381, 3
      %vm1403 = vcmp.lt.s32.totalorder %v1381, 4
      %v1404 = vsel %vm1400, %v1384, %v1387
      %v1405 = vsel %vm1403, %v1393, 2102212464
      %v1406 = vsel %vm1402, %v1390, %v1405
      %v1407 = vsel %vm1401, %v1404, %v1406
      %v1408 = vsel %vm1400, %v1387, %v1390
      %v1409 = vsel %vm1403, %v1396, 920167782
      %v1410 = vsel %vm1402, %v1393, %v1409
      %v1411 = vsel %vm1401, %v1408, %v1410
      %v1412 = vsel %vm1400, %v1390, %v1393
      %v1413 = vsel %vm1403, %v1399, 1326507024
      %v1414 = vsel %vm1402, %v1396, %v1413
      %v1415 = vsel %vm1401, %v1412, %v1414
      %v1416 = vshll.u32 %v1376, 8
      %v1417 = vand.u32 %v1416, 65535
      %v1418 = vshrl.u32 %v1416, 16
      %v1419 = vand.u32 %v1415, 65535
      %v1420 = vshrl.u32 %v1415, 16
      %v1421 = vmul.u32 %v1417, %v1419
      %v1422 = vmul.u32 %v1417, %v1420
      %v1423 = vmul.u32 %v1418, %v1419
      %v1424 = vmul.u32 %v1418, %v1420
      %v1425 = vshll.u32 %v1422, 16
      %v1426 = vshrl.u32 %v1422, 16
      %v1427 = vshll.u32 %v1423, 16
      %v1428 = vshrl.u32 %v1423, 16
      %vm1429 = vc.u32 %v1421, %v1425
      %v1430 = vsel %vm1429, 1, 0
      %v1431 = vadd.s32 %v1421, %v1425
      %v1432 = vadd.s32 %v1424, %v1430
      %vm1433 = vc.u32 %v1431, %v1427
      %v1434 = vsel %vm1433, 1, 0
      %v1435 = vadd.s32 %v1431, %v1427
      %v1436 = vadd.s32 %v1432, %v1434
      %v1437 = vadd.s32 %v1436, %v1426
      %v1438 = vadd.s32 %v1437, %v1428
      %v1439 = vand.u32 %v1416, 65535
      %v1440 = vshrl.u32 %v1416, 16
      %v1441 = vand.u32 %v1411, 65535
      %v1442 = vshrl.u32 %v1411, 16
      %v1443 = vmul.u32 %v1439, %v1441
      %v1444 = vmul.u32 %v1439, %v1442
      %v1445 = vmul.u32 %v1440, %v1441
      %v1446 = vmul.u32 %v1440, %v1442
      %v1447 = vshll.u32 %v1444, 16
      %v1448 = vshrl.u32 %v1444, 16
      %v1449 = vshll.u32 %v1445, 16
      %v1450 = vshrl.u32 %v1445, 16
      %vm1451 = vc.u32 %v1443, %v1447
      %v1452 = vsel %vm1451, 1, 0
      %v1453 = vadd.s32 %v1443, %v1447
      %v1454 = vadd.s32 %v1446, %v1452
      %vm1455 = vc.u32 %v1453, %v1449
      %v1456 = vsel %vm1455, 1, 0
      %v1457 = vadd.s32 %v1453, %v1449
      %v1458 = vadd.s32 %v1454, %v1456
      %v1459 = vadd.s32 %v1458, %v1448
      %v1460 = vadd.s32 %v1459, %v1450
      %v1461 = vmul.u32 %v1416, %v1407
      %v1462 = vadd.s32 %v1438, %v1457
      %vm1463 = vc.u32 %v1438, %v1457
      %v1464 = vadd.s32 %v1460, 1
      %v1465 = vsel %vm1463, %v1464, %v1460
      %v1466 = vadd.s32 %v1461, %v1465
      %v1467 = vadd.s32 %v1466, 536870912
      %v1468 = vshrl.u32 %v1467, 30
      %v1469 = vshll.u32 %v1468, 30
      %v1470 = vsub.s32 %v1466, %v1469
      %vm1471 = vcmp.lt.s32.totalorder %v1470, 0
      %v1472 = vsub.s32 0, %v1470
      %v1473 = vsel %vm1471, %v1472, %v1470
      %v1474 = vclz %v1473
      %v1475 = vsub.s32 %v1474, 2
      %vm1476 = vcmp.gt.s32.totalorder 0, %v1475
      %v1477 = vsel %vm1476, 0, %v1475
      %v1478 = vsub.s32 32, %v1477
      %v1479 = vshll.u32 %v1470, %v1477
      %v1480 = vshrl.u32 %v1462, %v1478
      %v1481 = vor.u32 %v1479, %v1480
      %v1482 = vsub.s32 4294967266, %v1477
      %v1483 = vadd.s32 %v1482, 127
      %v1484 = vshll.u32 %v1483, 23
      %v1485 = vor.u32 4788187, %v1484
      %v1486 = vand.u32 2147483647, %v1485
      %v1488 = vcvt.s32.f32 %v1481
      %v1489 = vmul.f32 %v1488, %v1486
      %v1490 = vxor.u32 %v1489, 2147483648
      %v1491 = vsel %vm1370, %v1490, %v1489
      %v1492 = vsub.s32 4, %v1468
      %v1493 = vsel %vm1370, %v1492, %v1468
      %v1494 = vsel %vm1369, %v1182, %v1491
      %v1495 = vsel %vm1369, 0, %v1493
      %v1496 = vmul.f32 %v1494, %v1494
      %v1497 = vmul.f32 %v1496, -0.001358992
      %v1498 = vadd.f32 %v1497, 0.041655596
      %v1499 = vmul.f32 %v1496, %v1498
      %v1500 = vadd.f32 %v1499, -0.4999988
      %v1501 = vmul.f32 %v1496, %v1500
      %v1502 = vadd.f32 1.0, %v1501
      %v1503 = vmul.f32 %v1494, %v1494
      %v1504 = vmul.f32 %v1503, -0.00019511016
      %v1505 = vadd.f32 %v1504, 0.008332121
      %v1506 = vmul.f32 %v1503, %v1505
      %v1507 = vadd.f32 %v1506, -0.16666654
      %v1508 = vmul.f32 %v1503, %v1507
      %v1509 = vadd.f32 %v1508, 1.0
      %v1510 = vmul.f32 %v1509, %v1494
      %vm1511 = vweird.f32 %v1182
      %v1512 = vadd.s32 %v1495, 3
      %v1513 = vand.u32 %v1512, 3
      %vm1514 = vcmp.lt.s32.totalorder %v1513, 2
      %vm1515 = vcmp.eq.s32.totalorder %v1513, 0
      %v1516 = vxor.u32 %v1510, 2147483648
      %v1517 = vsel %vm1515, %v1502, %v1516
      %vm1518 = vcmp.eq.s32.totalorder %v1513, 2
      %v1519 = vxor.u32 %v1502, 2147483648
      %v1520 = vsel %vm1518, %v1519, %v1510
      %v1521 = vsel %vm1514, %v1517, %v1520
      %v1522 = vsel %vm1511, nan, %v1521
      %v1523 = vand.u32 2147483647, %v1183
      %vm1524 = vcmp.le.f32.partialorder %v1523, 0.7853982
      %vm1525 = vcmp.lt.s32.totalorder %v1183, 0
      %v1526 = vand.u32 %v1183, 2139095040
      %v1527 = vshrl.u32 %v1526, 23
      %v1528 = vsub.s32 %v1527, 127
      %v1529 = vand.u32 2147483647, %v1183
      %v1530 = vand.u32 %v1529, 8388607
      %v1531 = vor.u32 %v1530, 8388608
      %v1532 = vsub.s32 0, %v1531
      %v1533 = vadd.s32 %v1528, 1
      %vm1534 = vcmp.gt.s32.totalorder %v1533, 0
      %v1535 = vsel %vm1534, %v1533, 0
      %v1536 = vshrl.u32 %v1535, 5
      %v1537 = vand.u32 %v1535, 31
      %v1538 = vsub.s32 32, %v1537
      %v1539 = vshrl.u32 683565275, %v1538
      %v1540 = vshll.u32 683565275, %v1537
      %v1541 = vshrl.u32 2475754826, %v1538
      %v1542 = vor.u32 %v1540, %v1541
      %v1543 = vshll.u32 2475754826, %v1537
      %v1544 = vshrl.u32 2131351028, %v1538
      %v1545 = vor.u32 %v1543, %v1544
      %v1546 = vshll.u32 2131351028, %v1537
      %v1547 = vshrl.u32 2102212464, %v1538
      %v1548 = vor.u32 %v1546, %v1547
      %v1549 = vshll.u32 2102212464, %v1537
      %v1550 = vshrl.u32 920167782, %v1538
      %v1551 = vor.u32 %v1549, %v1550
      %v1552 = vshll.u32 920167782, %v1537
      %v1553 = vshrl.u32 1326507024, %v1538
      %v1554 = vor.u32 %v1552, %v1553
      %vm1555 = vcmp.lt.s32.totalorder %v1536, 1
      %vm1556 = vcmp.lt.s32.totalorder %v1536, 2
      %vm1557 = vcmp.lt.s32.totalorder %v1536, 3
      %vm1558 = vcmp.lt.s32.totalorder %v1536, 4
      %v1559 = vsel %vm1555, %v1539, %v1542
      %v1560 = vsel %vm1558, %v1548, 2102212464
      %v1561 = vsel %vm1557, %v1545, %v1560
      %v1562 = vsel %vm1556, %v1559, %v1561
      %v1563 = vsel %vm1555, %v1542, %v1545
      %v1564 = vsel %vm1558, %v1551, 920167782
      %v1565 = vsel %vm1557, %v1548, %v1564
      %v1566 = vsel %vm1556, %v1563, %v1565
      %v1567 = vsel %vm1555, %v1545, %v1548
      %v1568 = vsel %vm1558, %v1554, 1326507024
      %v1569 = vsel %vm1557, %v1551, %v1568
      %v1570 = vsel %vm1556, %v1567, %v1569
      %v1571 = vshll.u32 %v1531, 8
      %v1572 = vand.u32 %v1571, 65535
      %v1573 = vshrl.u32 %v1571, 16
      %v1574 = vand.u32 %v1570, 65535
      %v1575 = vshrl.u32 %v1570, 16
      %v1576 = vmul.u32 %v1572, %v1574
      %v1577 = vmul.u32 %v1572, %v1575
      %v1578 = vmul.u32 %v1573, %v1574
      %v1579 = vmul.u32 %v1573, %v1575
      %v1580 = vshll.u32 %v1577, 16
      %v1581 = vshrl.u32 %v1577, 16
      %v1582 = vshll.u32 %v1578, 16
      %v1583 = vshrl.u32 %v1578, 16
      %vm1584 = vc.u32 %v1576, %v1580
      %v1585 = vsel %vm1584, 1, 0
      %v1586 = vadd.s32 %v1576, %v1580
      %v1587 = vadd.s32 %v1579, %v1585
      %vm1588 = vc.u32 %v1586, %v1582
      %v1589 = vsel %vm1588, 1, 0
      %v1590 = vadd.s32 %v1586, %v1582
      %v1591 = vadd.s32 %v1587, %v1589
      %v1592 = vadd.s32 %v1591, %v1581
      %v1593 = vadd.s32 %v1592, %v1583
      %v1594 = vand.u32 %v1571, 65535
      %v1595 = vshrl.u32 %v1571, 16
      %v1596 = vand.u32 %v1566, 65535
      %v1597 = vshrl.u32 %v1566, 16
      %v1598 = vmul.u32 %v1594, %v1596
      %v1599 = vmul.u32 %v1594, %v1597
      %v1600 = vmul.u32 %v1595, %v1596
      %v1601 = vmul.u32 %v1595, %v1597
      %v1602 = vshll.u32 %v1599, 16
      %v1603 = vshrl.u32 %v1599, 16
      %v1604 = vshll.u32 %v1600, 16
      %v1605 = vshrl.u32 %v1600, 16
      %vm1606 = vc.u32 %v1598, %v1602
      %v1607 = vsel %vm1606, 1, 0
      %v1608 = vadd.s32 %v1598, %v1602
      %v1609 = vadd.s32 %v1601, %v1607
      %vm1610 = vc.u32 %v1608, %v1604
      %v1611 = vsel %vm1610, 1, 0
      %v1612 = vadd.s32 %v1608, %v1604
      %v1613 = vadd.s32 %v1609, %v1611
      %v1614 = vadd.s32 %v1613, %v1603
      %v1615 = vadd.s32 %v1614, %v1605
      %v1616 = vmul.u32 %v1571, %v1562
      %v1617 = vadd.s32 %v1593, %v1612
      %vm1618 = vc.u32 %v1593, %v1612
      %v1619 = vadd.s32 %v1615, 1
      %v1620 = vsel %vm1618, %v1619, %v1615
      %v1621 = vadd.s32 %v1616, %v1620
      %v1622 = vadd.s32 %v1621, 536870912
      %v1623 = vshrl.u32 %v1622, 30
      %v1624 = vshll.u32 %v1623, 30
      %v1625 = vsub.s32 %v1621, %v1624
      %vm1626 = vcmp.lt.s32.totalorder %v1625, 0
      %v1627 = vsub.s32 0, %v1625
      %v1628 = vsel %vm1626, %v1627, %v1625
      %v1629 = vclz %v1628
      %v1630 = vsub.s32 %v1629, 2
      %vm1631 = vcmp.gt.s32.totalorder 0, %v1630
      %v1632 = vsel %vm1631, 0, %v1630
      %v1633 = vsub.s32 32, %v1632
      %v1634 = vshll.u32 %v1625, %v1632
      %v1635 = vshrl.u32 %v1617, %v1633
      %v1636 = vor.u32 %v1634, %v1635
      %v1637 = vsub.s32 4294967266, %v1632
      %v1638 = vadd.s32 %v1637, 127
      %v1639 = vshll.u32 %v1638, 23
      %v1640 = vor.u32 4788187, %v1639
      %v1641 = vand.u32 2147483647, %v1640
      %v1643 = vcvt.s32.f32 %v1636
      %v1644 = vmul.f32 %v1643, %v1641
      %v1645 = vxor.u32 %v1644, 2147483648
      %v1646 = vsel %vm1525, %v1645, %v1644
      %v1647 = vsub.s32 4, %v1623
      %v1648 = vsel %vm1525, %v1647, %v1623
      %v1649 = vsel %vm1524, %v1183, %v1646
      %v1650 = vsel %vm1524, 0, %v1648
      %v1651 = vmul.f32 %v1649, %v1649
      %v1652 = vmul.f32 %v1651, -0.001358992
      %v1653 = vadd.f32 %v1652, 0.041655596
      %v1654 = vmul.f32 %v1651, %v1653
      %v1655 = vadd.f32 %v1654, -0.4999988
      %v1656 = vmul.f32 %v1651, %v1655
      %v1657 = vadd.f32 1.0, %v1656
      %v1658 = vmul.f32 %v1649, %v1649
      %v1659 = vmul.f32 %v1658, -0.00019511016
      %v1660 = vadd.f32 %v1659, 0.008332121
      %v1661 = vmul.f32 %v1658, %v1660
      %v1662 = vadd.f32 %v1661, -0.16666654
      %v1663 = vmul.f32 %v1658, %v1662
      %v1664 = vadd.f32 %v1663, 1.0
      %v1665 = vmul.f32 %v1664, %v1649
      %vm1666 = vweird.f32 %v1183
      %v1667 = vadd.s32 %v1650, 3
      %v1668 = vand.u32 %v1667, 3
      %vm1669 = vcmp.lt.s32.totalorder %v1668, 2
      %vm1670 = vcmp.eq.s32.totalorder %v1668, 0
      %v1671 = vxor.u32 %v1665, 2147483648
      %v1672 = vsel %vm1670, %v1657, %v1671
      %vm1673 = vcmp.eq.s32.totalorder %v1668, 2
      %v1674 = vxor.u32 %v1657, 2147483648
      %v1675 = vsel %vm1673, %v1674, %v1665
      %v1676 = vsel %vm1669, %v1672, %v1675
      %v1677 = vsel %vm1666, nan, %v1676
      %v1678 = vand.u32 2147483647, %v1184
      %vm1679 = vcmp.le.f32.partialorder %v1678, 0.7853982
      %vm1680 = vcmp.lt.s32.totalorder %v1184, 0
      %v1681 = vand.u32 %v1184, 2139095040
      %v1682 = vshrl.u32 %v1681, 23
      %v1683 = vsub.s32 %v1682, 127
      %v1684 = vand.u32 2147483647, %v1184
      %v1685 = vand.u32 %v1684, 8388607
      %v1686 = vor.u32 %v1685, 8388608
      %v1687 = vsub.s32 0, %v1686
      %v1688 = vadd.s32 %v1683, 1
      %vm1689 = vcmp.gt.s32.totalorder %v1688, 0
      %v1690 = vsel %vm1689, %v1688, 0
      %v1691 = vshrl.u32 %v1690, 5
      %v1692 = vand.u32 %v1690, 31
      %v1693 = vsub.s32 32, %v1692
      %v1694 = vshrl.u32 683565275, %v1693
      %v1695 = vshll.u32 683565275, %v1692
      %v1696 = vshrl.u32 2475754826, %v1693
      %v1697 = vor.u32 %v1695, %v1696
      %v1698 = vshll.u32 2475754826, %v1692
      %v1699 = vshrl.u32 2131351028, %v1693
      %v1700 = vor.u32 %v1698, %v1699
      %v1701 = vshll.u32 2131351028, %v1692
      %v1702 = vshrl.u32 2102212464, %v1693
      %v1703 = vor.u32 %v1701, %v1702
      %v1704 = vshll.u32 2102212464, %v1692
      %v1705 = vshrl.u32 920167782, %v1693
      %v1706 = vor.u32 %v1704, %v1705
      %v1707 = vshll.u32 920167782, %v1692
      %v1708 = vshrl.u32 1326507024, %v1693
      %v1709 = vor.u32 %v1707, %v1708
      %vm1710 = vcmp.lt.s32.totalorder %v1691, 1
      %vm1711 = vcmp.lt.s32.totalorder %v1691, 2
      %vm1712 = vcmp.lt.s32.totalorder %v1691, 3
      %vm1713 = vcmp.lt.s32.totalorder %v1691, 4
      %v1714 = vsel %vm1710, %v1694, %v1697
      %v1715 = vsel %vm1713, %v1703, 2102212464
      %v1716 = vsel %vm1712, %v1700, %v1715
      %v1717 = vsel %vm1711, %v1714, %v1716
      %v1718 = vsel %vm1710, %v1697, %v1700
      %v1719 = vsel %vm1713, %v1706, 920167782
      %v1720 = vsel %vm1712, %v1703, %v1719
      %v1721 = vsel %vm1711, %v1718, %v1720
      %v1722 = vsel %vm1710, %v1700, %v1703
      %v1723 = vsel %vm1713, %v1709, 1326507024
      %v1724 = vsel %vm1712, %v1706, %v1723
      %v1725 = vsel %vm1711, %v1722, %v1724
      %v1726 = vshll.u32 %v1686, 8
      %v1727 = vand.u32 %v1726, 65535
      %v1728 = vshrl.u32 %v1726, 16
      %v1729 = vand.u32 %v1725, 65535
      %v1730 = vshrl.u32 %v1725, 16
      %v1731 = vmul.u32 %v1727, %v1729
      %v1732 = vmul.u32 %v1727, %v1730
      %v1733 = vmul.u32 %v1728, %v1729
      %v1734 = vmul.u32 %v1728, %v1730
      %v1735 = vshll.u32 %v1732, 16
      %v1736 = vshrl.u32 %v1732, 16
      %v1737 = vshll.u32 %v1733, 16
      %v1738 = vshrl.u32 %v1733, 16
      %vm1739 = vc.u32 %v1731, %v1735
      %v1740 = vsel %vm1739, 1, 0
      %v1741 = vadd.s32 %v1731, %v1735
      %v1742 = vadd.s32 %v1734, %v1740
      %vm1743 = vc.u32 %v1741, %v1737
      %v1744 = vsel %vm1743, 1, 0
      %v1745 = vadd.s32 %v1741, %v1737
      %v1746 = vadd.s32 %v1742, %v1744
      %v1747 = vadd.s32 %v1746, %v1736
      %v1748 = vadd.s32 %v1747, %v1738
      %v1749 = vand.u32 %v1726, 65535
      %v1750 = vshrl.u32 %v1726, 16
      %v1751 = vand.u32 %v1721, 65535
      %v1752 = vshrl.u32 %v1721, 16
      %v1753 = vmul.u32 %v1749, %v1751
      %v1754 = vmul.u32 %v1749, %v1752
      %v1755 = vmul.u32 %v1750, %v1751
      %v1756 = vmul.u32 %v1750, %v1752
      %v1757 = vshll.u32 %v1754, 16
      %v1758 = vshrl.u32 %v1754, 16
      %v1759 = vshll.u32 %v1755, 16
      %v1760 = vshrl.u32 %v1755, 16
      %vm1761 = vc.u32 %v1753, %v1757
      %v1762 = vsel %vm1761, 1, 0
      %v1763 = vadd.s32 %v1753, %v1757
      %v1764 = vadd.s32 %v1756, %v1762
      %vm1765 = vc.u32 %v1763, %v1759
      %v1766 = vsel %vm1765, 1, 0
      %v1767 = vadd.s32 %v1763, %v1759
      %v1768 = vadd.s32 %v1764, %v1766
      %v1769 = vadd.s32 %v1768, %v1758
      %v1770 = vadd.s32 %v1769, %v1760
      %v1771 = vmul.u32 %v1726, %v1717
      %v1772 = vadd.s32 %v1748, %v1767
      %vm1773 = vc.u32 %v1748, %v1767
      %v1774 = vadd.s32 %v1770, 1
      %v1775 = vsel %vm1773, %v1774, %v1770
      %v1776 = vadd.s32 %v1771, %v1775
      %v1777 = vadd.s32 %v1776, 536870912
      %v1778 = vshrl.u32 %v1777, 30
      %v1779 = vshll.u32 %v1778, 30
      %v1780 = vsub.s32 %v1776, %v1779
      %vm1781 = vcmp.lt.s32.totalorder %v1780, 0
      %v1782 = vsub.s32 0, %v1780
      %v1783 = vsel %vm1781, %v1782, %v1780
      %v1784 = vclz %v1783
      %v1785 = vsub.s32 %v1784, 2
      %vm1786 = vcmp.gt.s32.totalorder 0, %v1785
      %v1787 = vsel %vm1786, 0, %v1785
      %v1788 = vsub.s32 32, %v1787
      %v1789 = vshll.u32 %v1780, %v1787
      %v1790 = vshrl.u32 %v1772, %v1788
      %v1791 = vor.u32 %v1789, %v1790
      %v1792 = vsub.s32 4294967266, %v1787
      %v1793 = vadd.s32 %v1792, 127
      %v1794 = vshll.u32 %v1793, 23
      %v1795 = vor.u32 4788187, %v1794
      %v1796 = vand.u32 2147483647, %v1795
      %v1798 = vcvt.s32.f32 %v1791
      %v1799 = vmul.f32 %v1798, %v1796
      %v1800 = vxor.u32 %v1799, 2147483648
      %v1801 = vsel %vm1680, %v1800, %v1799
      %v1802 = vsub.s32 4, %v1778
      %v1803 = vsel %vm1680, %v1802, %v1778
      %v1804 = vsel %vm1679, %v1184, %v1801
      %v1805 = vsel %vm1679, 0, %v1803
      %v1806 = vmul.f32 %v1804, %v1804
      %v1807 = vmul.f32 %v1806, -0.001358992
      %v1808 = vadd.f32 %v1807, 0.041655596
      %v1809 = vmul.f32 %v1806, %v1808
      %v1810 = vadd.f32 %v1809, -0.4999988
      %v1811 = vmul.f32 %v1806, %v1810
      %v1812 = vadd.f32 1.0, %v1811
      %v1813 = vmul.f32 %v1804, %v1804
      %v1814 = vmul.f32 %v1813, -0.00019511016
      %v1815 = vadd.f32 %v1814, 0.008332121
      %v1816 = vmul.f32 %v1813, %v1815
      %v1817 = vadd.f32 %v1816, -0.16666654
      %v1818 = vmul.f32 %v1813, %v1817
      %v1819 = vadd.f32 %v1818, 1.0
      %v1820 = vmul.f32 %v1819, %v1804
      %vm1821 = vweird.f32 %v1184
      %v1822 = vadd.s32 %v1805, 3
      %v1823 = vand.u32 %v1822, 3
      %vm1824 = vcmp.lt.s32.totalorder %v1823, 2
      %vm1825 = vcmp.eq.s32.totalorder %v1823, 0
      %v1826 = vxor.u32 %v1820, 2147483648
      %v1827 = vsel %vm1825, %v1812, %v1826
      %vm1828 = vcmp.eq.s32.totalorder %v1823, 2
      %v1829 = vxor.u32 %v1812, 2147483648
      %v1830 = vsel %vm1828, %v1829, %v1820
      %v1831 = vsel %vm1824, %v1827, %v1830
      %v1832 = vsel %vm1821, nan, %v1831
      %v1833 = vand.u32 2147483647, %v1185
      %vm1834 = vcmp.le.f32.partialorder %v1833, 0.7853982
      %vm1835 = vcmp.lt.s32.totalorder %v1185, 0
      %v1836 = vand.u32 %v1185, 2139095040
      %v1837 = vshrl.u32 %v1836, 23
      %v1838 = vsub.s32 %v1837, 127
      %v1839 = vand.u32 2147483647, %v1185
      %v1840 = vand.u32 %v1839, 8388607
      %v1841 = vor.u32 %v1840, 8388608
      %v1842 = vsub.s32 0, %v1841
      %v1843 = vadd.s32 %v1838, 1
      %vm1844 = vcmp.gt.s32.totalorder %v1843, 0
      %v1845 = vsel %vm1844, %v1843, 0
      %v1846 = vshrl.u32 %v1845, 5
      %v1847 = vand.u32 %v1845, 31
      %v1848 = vsub.s32 32, %v1847
      %v1849 = vshrl.u32 683565275, %v1848
      %v1850 = vshll.u32 683565275, %v1847
      %v1851 = vshrl.u32 2475754826, %v1848
      %v1852 = vor.u32 %v1850, %v1851
      %v1853 = vshll.u32 2475754826, %v1847
      %v1854 = vshrl.u32 2131351028, %v1848
      %v1855 = vor.u32 %v1853, %v1854
      %v1856 = vshll.u32 2131351028, %v1847
      %v1857 = vshrl.u32 2102212464, %v1848
      %v1858 = vor.u32 %v1856, %v1857
      %v1859 = vshll.u32 2102212464, %v1847
      %v1860 = vshrl.u32 920167782, %v1848
      %v1861 = vor.u32 %v1859, %v1860
      %v1862 = vshll.u32 920167782, %v1847
      %v1863 = vshrl.u32 1326507024, %v1848
      %v1864 = vor.u32 %v1862, %v1863
      %vm1865 = vcmp.lt.s32.totalorder %v1846, 1
      %vm1866 = vcmp.lt.s32.totalorder %v1846, 2
      %vm1867 = vcmp.lt.s32.totalorder %v1846, 3
      %vm1868 = vcmp.lt.s32.totalorder %v1846, 4
      %v1869 = vsel %vm1865, %v1849, %v1852
      %v1870 = vsel %vm1868, %v1858, 2102212464
      %v1871 = vsel %vm1867, %v1855, %v1870
      %v1872 = vsel %vm1866, %v1869, %v1871
      %v1873 = vsel %vm1865, %v1852, %v1855
      %v1874 = vsel %vm1868, %v1861, 920167782
      %v1875 = vsel %vm1867, %v1858, %v1874
      %v1876 = vsel %vm1866, %v1873, %v1875
      %v1877 = vsel %vm1865, %v1855, %v1858
      %v1878 = vsel %vm1868, %v1864, 1326507024
      %v1879 = vsel %vm1867, %v1861, %v1878
      %v1880 = vsel %vm1866, %v1877, %v1879
      %v1881 = vshll.u32 %v1841, 8
      %v1882 = vand.u32 %v1881, 65535
      %v1883 = vshrl.u32 %v1881, 16
      %v1884 = vand.u32 %v1880, 65535
      %v1885 = vshrl.u32 %v1880, 16
      %v1886 = vmul.u32 %v1882, %v1884
      %v1887 = vmul.u32 %v1882, %v1885
      %v1888 = vmul.u32 %v1883, %v1884
      %v1889 = vmul.u32 %v1883, %v1885
      %v1890 = vshll.u32 %v1887, 16
      %v1891 = vshrl.u32 %v1887, 16
      %v1892 = vshll.u32 %v1888, 16
      %v1893 = vshrl.u32 %v1888, 16
      %vm1894 = vc.u32 %v1886, %v1890
      %v1895 = vsel %vm1894, 1, 0
      %v1896 = vadd.s32 %v1886, %v1890
      %v1897 = vadd.s32 %v1889, %v1895
      %vm1898 = vc.u32 %v1896, %v1892
      %v1899 = vsel %vm1898, 1, 0
      %v1900 = vadd.s32 %v1896, %v1892
      %v1901 = vadd.s32 %v1897, %v1899
      %v1902 = vadd.s32 %v1901, %v1891
      %v1903 = vadd.s32 %v1902, %v1893
      %v1904 = vand.u32 %v1881, 65535
      %v1905 = vshrl.u32 %v1881, 16
      %v1906 = vand.u32 %v1876, 65535
      %v1907 = vshrl.u32 %v1876, 16
      %v1908 = vmul.u32 %v1904, %v1906
      %v1909 = vmul.u32 %v1904, %v1907
      %v1910 = vmul.u32 %v1905, %v1906
      %v1911 = vmul.u32 %v1905, %v1907
      %v1912 = vshll.u32 %v1909, 16
      %v1913 = vshrl.u32 %v1909, 16
      %v1914 = vshll.u32 %v1910, 16
      %v1915 = vshrl.u32 %v1910, 16
      %vm1916 = vc.u32 %v1908, %v1912
      %v1917 = vsel %vm1916, 1, 0
      %v1918 = vadd.s32 %v1908, %v1912
      %v1919 = vadd.s32 %v1911, %v1917
      %vm1920 = vc.u32 %v1918, %v1914
      %v1921 = vsel %vm1920, 1, 0
      %v1922 = vadd.s32 %v1918, %v1914
      %v1923 = vadd.s32 %v1919, %v1921
      %v1924 = vadd.s32 %v1923, %v1913
      %v1925 = vadd.s32 %v1924, %v1915
      %v1926 = vmul.u32 %v1881, %v1872
      %v1927 = vadd.s32 %v1903, %v1922
      %vm1928 = vc.u32 %v1903, %v1922
      %v1929 = vadd.s32 %v1925, 1
      %v1930 = vsel %vm1928, %v1929, %v1925
      %v1931 = vadd.s32 %v1926, %v1930
      %v1932 = vadd.s32 %v1931, 536870912
      %v1933 = vshrl.u32 %v1932, 30
      %v1934 = vshll.u32 %v1933, 30
      %v1935 = vsub.s32 %v1931, %v1934
      %vm1936 = vcmp.lt.s32.totalorder %v1935, 0
      %v1937 = vsub.s32 0, %v1935
      %v1938 = vsel %vm1936, %v1937, %v1935
      %v1939 = vclz %v1938
      %v1940 = vsub.s32 %v1939, 2
      %vm1941 = vcmp.gt.s32.totalorder 0, %v1940
      %v1942 = vsel %vm1941, 0, %v1940
      %v1943 = vsub.s32 32, %v1942
      %v1944 = vshll.u32 %v1935, %v1942
      %v1945 = vshrl.u32 %v1927, %v1943
      %v1946 = vor.u32 %v1944, %v1945
      %v1947 = vsub.s32 4294967266, %v1942
      %v1948 = vadd.s32 %v1947, 127
      %v1949 = vshll.u32 %v1948, 23
      %v1950 = vor.u32 4788187, %v1949
      %v1951 = vand.u32 2147483647, %v1950
      %v1953 = vcvt.s32.f32 %v1946
      %v1954 = vmul.f32 %v1953, %v1951
      %v1955 = vxor.u32 %v1954, 2147483648
      %v1956 = vsel %vm1835, %v1955, %v1954
      %v1957 = vsub.s32 4, %v1933
      %v1958 = vsel %vm1835, %v1957, %v1933
      %v1959 = vsel %vm1834, %v1185, %v1956
      %v1960 = vsel %vm1834, 0, %v1958
      %v1961 = vmul.f32 %v1959, %v1959
      %v1962 = vmul.f32 %v1961, -0.001358992
      %v1963 = vadd.f32 %v1962, 0.041655596
      %v1964 = vmul.f32 %v1961, %v1963
      %v1965 = vadd.f32 %v1964, -0.4999988
      %v1966 = vmul.f32 %v1961, %v1965
      %v1967 = vadd.f32 1.0, %v1966
      %v1968 = vmul.f32 %v1959, %v1959
      %v1969 = vmul.f32 %v1968, -0.00019511016
      %v1970 = vadd.f32 %v1969, 0.008332121
      %v1971 = vmul.f32 %v1968, %v1970
      %v1972 = vadd.f32 %v1971, -0.16666654
      %v1973 = vmul.f32 %v1968, %v1972
      %v1974 = vadd.f32 %v1973, 1.0
      %v1975 = vmul.f32 %v1974, %v1959
      %vm1976 = vweird.f32 %v1185
      %v1977 = vadd.s32 %v1960, 3
      %v1978 = vand.u32 %v1977, 3
      %vm1979 = vcmp.lt.s32.totalorder %v1978, 2
      %vm1980 = vcmp.eq.s32.totalorder %v1978, 0
      %v1981 = vxor.u32 %v1975, 2147483648
      %v1982 = vsel %vm1980, %v1967, %v1981
      %vm1983 = vcmp.eq.s32.totalorder %v1978, 2
      %v1984 = vxor.u32 %v1967, 2147483648
      %v1985 = vsel %vm1983, %v1984, %v1975
      %v1986 = vsel %vm1979, %v1982, %v1985
      %v1987 = vsel %vm1976, nan, %v1986
      %v1988 = vand.u32 2147483647, %v1186
      %vm1989 = vcmp.le.f32.partialorder %v1988, 0.7853982
      %vm1990 = vcmp.lt.s32.totalorder %v1186, 0
      %v1991 = vand.u32 %v1186, 2139095040
      %v1992 = vshrl.u32 %v1991, 23
      %v1993 = vsub.s32 %v1992, 127
      %v1994 = vand.u32 2147483647, %v1186
      %v1995 = vand.u32 %v1994, 8388607
      %v1996 = vor.u32 %v1995, 8388608
      %v1997 = vsub.s32 0, %v1996
      %v1998 = vadd.s32 %v1993, 1
      %vm1999 = vcmp.gt.s32.totalorder %v1998, 0
      %v2000 = vsel %vm1999, %v1998, 0
      %v2001 = vshrl.u32 %v2000, 5
      %v2002 = vand.u32 %v2000, 31
      %v2003 = vsub.s32 32, %v2002
      %v2004 = vshrl.u32 683565275, %v2003
      %v2005 = vshll.u32 683565275, %v2002
      %v2006 = vshrl.u32 2475754826, %v2003
      %v2007 = vor.u32 %v2005, %v2006
      %v2008 = vshll.u32 2475754826, %v2002
      %v2009 = vshrl.u32 2131351028, %v2003
      %v2010 = vor.u32 %v2008, %v2009
      %v2011 = vshll.u32 2131351028, %v2002
      %v2012 = vshrl.u32 2102212464, %v2003
      %v2013 = vor.u32 %v2011, %v2012
      %v2014 = vshll.u32 2102212464, %v2002
      %v2015 = vshrl.u32 920167782, %v2003
      %v2016 = vor.u32 %v2014, %v2015
      %v2017 = vshll.u32 920167782, %v2002
      %v2018 = vshrl.u32 1326507024, %v2003
      %v2019 = vor.u32 %v2017, %v2018
      %vm2020 = vcmp.lt.s32.totalorder %v2001, 1
      %vm2021 = vcmp.lt.s32.totalorder %v2001, 2
      %vm2022 = vcmp.lt.s32.totalorder %v2001, 3
      %vm2023 = vcmp.lt.s32.totalorder %v2001, 4
      %v2024 = vsel %vm2020, %v2004, %v2007
      %v2025 = vsel %vm2023, %v2013, 2102212464
      %v2026 = vsel %vm2022, %v2010, %v2025
      %v2027 = vsel %vm2021, %v2024, %v2026
      %v2028 = vsel %vm2020, %v2007, %v2010
      %v2029 = vsel %vm2023, %v2016, 920167782
      %v2030 = vsel %vm2022, %v2013, %v2029
      %v2031 = vsel %vm2021, %v2028, %v2030
      %v2032 = vsel %vm2020, %v2010, %v2013
      %v2033 = vsel %vm2023, %v2019, 1326507024
      %v2034 = vsel %vm2022, %v2016, %v2033
      %v2035 = vsel %vm2021, %v2032, %v2034
      %v2036 = vshll.u32 %v1996, 8
      %v2037 = vand.u32 %v2036, 65535
      %v2038 = vshrl.u32 %v2036, 16
      %v2039 = vand.u32 %v2035, 65535
      %v2040 = vshrl.u32 %v2035, 16
      %v2041 = vmul.u32 %v2037, %v2039
      %v2042 = vmul.u32 %v2037, %v2040
      %v2043 = vmul.u32 %v2038, %v2039
      %v2044 = vmul.u32 %v2038, %v2040
      %v2045 = vshll.u32 %v2042, 16
      %v2046 = vshrl.u32 %v2042, 16
      %v2047 = vshll.u32 %v2043, 16
      %v2048 = vshrl.u32 %v2043, 16
      %vm2049 = vc.u32 %v2041, %v2045
      %v2050 = vsel %vm2049, 1, 0
      %v2051 = vadd.s32 %v2041, %v2045
      %v2052 = vadd.s32 %v2044, %v2050
      %vm2053 = vc.u32 %v2051, %v2047
      %v2054 = vsel %vm2053, 1, 0
      %v2055 = vadd.s32 %v2051, %v2047
      %v2056 = vadd.s32 %v2052, %v2054
      %v2057 = vadd.s32 %v2056, %v2046
      %v2058 = vadd.s32 %v2057, %v2048
      %v2059 = vand.u32 %v2036, 65535
      %v2060 = vshrl.u32 %v2036, 16
      %v2061 = vand.u32 %v2031, 65535
      %v2062 = vshrl.u32 %v2031, 16
      %v2063 = vmul.u32 %v2059, %v2061
      %v2064 = vmul.u32 %v2059, %v2062
      %v2065 = vmul.u32 %v2060, %v2061
      %v2066 = vmul.u32 %v2060, %v2062
      %v2067 = vshll.u32 %v2064, 16
      %v2068 = vshrl.u32 %v2064, 16
      %v2069 = vshll.u32 %v2065, 16
      %v2070 = vshrl.u32 %v2065, 16
      %vm2071 = vc.u32 %v2063, %v2067
      %v2072 = vsel %vm2071, 1, 0
      %v2073 = vadd.s32 %v2063, %v2067
      %v2074 = vadd.s32 %v2066, %v2072
      %vm2075 = vc.u32 %v2073, %v2069
      %v2076 = vsel %vm2075, 1, 0
      %v2077 = vadd.s32 %v2073, %v2069
      %v2078 = vadd.s32 %v2074, %v2076
      %v2079 = vadd.s32 %v2078, %v2068
      %v2080 = vadd.s32 %v2079, %v2070
      %v2081 = vmul.u32 %v2036, %v2027
      %v2082 = vadd.s32 %v2058, %v2077
      %vm2083 = vc.u32 %v2058, %v2077
      %v2084 = vadd.s32 %v2080, 1
      %v2085 = vsel %vm2083, %v2084, %v2080
      %v2086 = vadd.s32 %v2081, %v2085
      %v2087 = vadd.s32 %v2086, 536870912
      %v2088 = vshrl.u32 %v2087, 30
      %v2089 = vshll.u32 %v2088, 30
      %v2090 = vsub.s32 %v2086, %v2089
      %vm2091 = vcmp.lt.s32.totalorder %v2090, 0
      %v2092 = vsub.s32 0, %v2090
      %v2093 = vsel %vm2091, %v2092, %v2090
      %v2094 = vclz %v2093
      %v2095 = vsub.s32 %v2094, 2
      %vm2096 = vcmp.gt.s32.totalorder 0, %v2095
      %v2097 = vsel %vm2096, 0, %v2095
      %v2098 = vsub.s32 32, %v2097
      %v2099 = vshll.u32 %v2090, %v2097
      %v2100 = vshrl.u32 %v2082, %v2098
      %v2101 = vor.u32 %v2099, %v2100
      %v2102 = vsub.s32 4294967266, %v2097
      %v2103 = vadd.s32 %v2102, 127
      %v2104 = vshll.u32 %v2103, 23
      %v2105 = vor.u32 4788187, %v2104
      %v2106 = vand.u32 2147483647, %v2105
      %v2108 = vcvt.s32.f32 %v2101
      %v2109 = vmul.f32 %v2108, %v2106
      %v2110 = vxor.u32 %v2109, 2147483648
      %v2111 = vsel %vm1990, %v2110, %v2109
      %v2112 = vsub.s32 4, %v2088
      %v2113 = vsel %vm1990, %v2112, %v2088
      %v2114 = vsel %vm1989, %v1186, %v2111
      %v2115 = vsel %vm1989, 0, %v2113
      %v2116 = vmul.f32 %v2114, %v2114
      %v2117 = vmul.f32 %v2116, -0.001358992
      %v2118 = vadd.f32 %v2117, 0.041655596
      %v2119 = vmul.f32 %v2116, %v2118
      %v2120 = vadd.f32 %v2119, -0.4999988
      %v2121 = vmul.f32 %v2116, %v2120
      %v2122 = vadd.f32 1.0, %v2121
      %v2123 = vmul.f32 %v2114, %v2114
      %v2124 = vmul.f32 %v2123, -0.00019511016
      %v2125 = vadd.f32 %v2124, 0.008332121
      %v2126 = vmul.f32 %v2123, %v2125
      %v2127 = vadd.f32 %v2126, -0.16666654
      %v2128 = vmul.f32 %v2123, %v2127
      %v2129 = vadd.f32 %v2128, 1.0
      %v2130 = vmul.f32 %v2129, %v2114
      %vm2131 = vweird.f32 %v1186
      %v2132 = vadd.s32 %v2115, 3
      %v2133 = vand.u32 %v2132, 3
      %vm2134 = vcmp.lt.s32.totalorder %v2133, 2
      %vm2135 = vcmp.eq.s32.totalorder %v2133, 0
      %v2136 = vxor.u32 %v2130, 2147483648
      %v2137 = vsel %vm2135, %v2122, %v2136
      %vm2138 = vcmp.eq.s32.totalorder %v2133, 2
      %v2139 = vxor.u32 %v2122, 2147483648
      %v2140 = vsel %vm2138, %v2139, %v2130
      %v2141 = vsel %vm2134, %v2137, %v2140
      %v2142 = vsel %vm2131, nan, %v2141
      %v2143 = vand.u32 2147483647, %v1187
      %vm2144 = vcmp.le.f32.partialorder %v2143, 0.7853982
      %vm2145 = vcmp.lt.s32.totalorder %v1187, 0
      %v2146 = vand.u32 %v1187, 2139095040
      %v2147 = vshrl.u32 %v2146, 23
      %v2148 = vsub.s32 %v2147, 127
      %v2149 = vand.u32 2147483647, %v1187
      %v2150 = vand.u32 %v2149, 8388607
      %v2151 = vor.u32 %v2150, 8388608
      %v2152 = vsub.s32 0, %v2151
      %v2153 = vadd.s32 %v2148, 1
      %vm2154 = vcmp.gt.s32.totalorder %v2153, 0
      %v2155 = vsel %vm2154, %v2153, 0
      %v2156 = vshrl.u32 %v2155, 5
      %v2157 = vand.u32 %v2155, 31
      %v2158 = vsub.s32 32, %v2157
      %v2159 = vshrl.u32 683565275, %v2158
      %v2160 = vshll.u32 683565275, %v2157
      %v2161 = vshrl.u32 2475754826, %v2158
      %v2162 = vor.u32 %v2160, %v2161
      %v2163 = vshll.u32 2475754826, %v2157
      %v2164 = vshrl.u32 2131351028, %v2158
      %v2165 = vor.u32 %v2163, %v2164
      %v2166 = vshll.u32 2131351028, %v2157
      %v2167 = vshrl.u32 2102212464, %v2158
      %v2168 = vor.u32 %v2166, %v2167
      %v2169 = vshll.u32 2102212464, %v2157
      %v2170 = vshrl.u32 920167782, %v2158
      %v2171 = vor.u32 %v2169, %v2170
      %v2172 = vshll.u32 920167782, %v2157
      %v2173 = vshrl.u32 1326507024, %v2158
      %v2174 = vor.u32 %v2172, %v2173
      %vm2175 = vcmp.lt.s32.totalorder %v2156, 1
      %vm2176 = vcmp.lt.s32.totalorder %v2156, 2
      %vm2177 = vcmp.lt.s32.totalorder %v2156, 3
      %vm2178 = vcmp.lt.s32.totalorder %v2156, 4
      %v2179 = vsel %vm2175, %v2159, %v2162
      %v2180 = vsel %vm2178, %v2168, 2102212464
      %v2181 = vsel %vm2177, %v2165, %v2180
      %v2182 = vsel %vm2176, %v2179, %v2181
      %v2183 = vsel %vm2175, %v2162, %v2165
      %v2184 = vsel %vm2178, %v2171, 920167782
      %v2185 = vsel %vm2177, %v2168, %v2184
      %v2186 = vsel %vm2176, %v2183, %v2185
      %v2187 = vsel %vm2175, %v2165, %v2168
      %v2188 = vsel %vm2178, %v2174, 1326507024
      %v2189 = vsel %vm2177, %v2171, %v2188
      %v2190 = vsel %vm2176, %v2187, %v2189
      %v2191 = vshll.u32 %v2151, 8
      %v2192 = vand.u32 %v2191, 65535
      %v2193 = vshrl.u32 %v2191, 16
      %v2194 = vand.u32 %v2190, 65535
      %v2195 = vshrl.u32 %v2190, 16
      %v2196 = vmul.u32 %v2192, %v2194
      %v2197 = vmul.u32 %v2192, %v2195
      %v2198 = vmul.u32 %v2193, %v2194
      %v2199 = vmul.u32 %v2193, %v2195
      %v2200 = vshll.u32 %v2197, 16
      %v2201 = vshrl.u32 %v2197, 16
      %v2202 = vshll.u32 %v2198, 16
      %v2203 = vshrl.u32 %v2198, 16
      %vm2204 = vc.u32 %v2196, %v2200
      %v2205 = vsel %vm2204, 1, 0
      %v2206 = vadd.s32 %v2196, %v2200
      %v2207 = vadd.s32 %v2199, %v2205
      %vm2208 = vc.u32 %v2206, %v2202
      %v2209 = vsel %vm2208, 1, 0
      %v2210 = vadd.s32 %v2206, %v2202
      %v2211 = vadd.s32 %v2207, %v2209
      %v2212 = vadd.s32 %v2211, %v2201
      %v2213 = vadd.s32 %v2212, %v2203
      %v2214 = vand.u32 %v2191, 65535
      %v2215 = vshrl.u32 %v2191, 16
      %v2216 = vand.u32 %v2186, 65535
      %v2217 = vshrl.u32 %v2186, 16
      %v2218 = vmul.u32 %v2214, %v2216
      %v2219 = vmul.u32 %v2214, %v2217
      %v2220 = vmul.u32 %v2215, %v2216
      %v2221 = vmul.u32 %v2215, %v2217
      %v2222 = vshll.u32 %v2219, 16
      %v2223 = vshrl.u32 %v2219, 16
      %v2224 = vshll.u32 %v2220, 16
      %v2225 = vshrl.u32 %v2220, 16
      %vm2226 = vc.u32 %v2218, %v2222
      %v2227 = vsel %vm2226, 1, 0
      %v2228 = vadd.s32 %v2218, %v2222
      %v2229 = vadd.s32 %v2221, %v2227
      %vm2230 = vc.u32 %v2228, %v2224
      %v2231 = vsel %vm2230, 1, 0
      %v2232 = vadd.s32 %v2228, %v2224
      %v2233 = vadd.s32 %v2229, %v2231
      %v2234 = vadd.s32 %v2233, %v2223
      %v2235 = vadd.s32 %v2234, %v2225
      %v2236 = vmul.u32 %v2191, %v2182
      %v2237 = vadd.s32 %v2213, %v2232
      %vm2238 = vc.u32 %v2213, %v2232
      %v2239 = vadd.s32 %v2235, 1
      %v2240 = vsel %vm2238, %v2239, %v2235
      %v2241 = vadd.s32 %v2236, %v2240
      %v2242 = vadd.s32 %v2241, 536870912
      %v2243 = vshrl.u32 %v2242, 30
      %v2244 = vshll.u32 %v2243, 30
      %v2245 = vsub.s32 %v2241, %v2244
      %vm2246 = vcmp.lt.s32.totalorder %v2245, 0
      %v2247 = vsub.s32 0, %v2245
      %v2248 = vsel %vm2246, %v2247, %v2245
      %v2249 = vclz %v2248
      %v2250 = vsub.s32 %v2249, 2
      %vm2251 = vcmp.gt.s32.totalorder 0, %v2250
      %v2252 = vsel %vm2251, 0, %v2250
      %v2253 = vsub.s32 32, %v2252
      %v2254 = vshll.u32 %v2245, %v2252
      %v2255 = vshrl.u32 %v2237, %v2253
      %v2256 = vor.u32 %v2254, %v2255
      %v2257 = vsub.s32 4294967266, %v2252
      %v2258 = vadd.s32 %v2257, 127
      %v2259 = vshll.u32 %v2258, 23
      %v2260 = vor.u32 4788187, %v2259
      %v2261 = vand.u32 2147483647, %v2260
      %v2263 = vcvt.s32.f32 %v2256
      %v2264 = vmul.f32 %v2263, %v2261
      %v2265 = vxor.u32 %v2264, 2147483648
      %v2266 = vsel %vm2145, %v2265, %v2264
      %v2267 = vsub.s32 4, %v2243
      %v2268 = vsel %vm2145, %v2267, %v2243
      %v2269 = vsel %vm2144, %v1187, %v2266
      %v2270 = vsel %vm2144, 0, %v2268
      %v2271 = vmul.f32 %v2269, %v2269
      %v2272 = vmul.f32 %v2271, -0.001358992
      %v2273 = vadd.f32 %v2272, 0.041655596
      %v2274 = vmul.f32 %v2271, %v2273
      %v2275 = vadd.f32 %v2274, -0.4999988
      %v2276 = vmul.f32 %v2271, %v2275
      %v2277 = vadd.f32 1.0, %v2276
      %v2278 = vmul.f32 %v2269, %v2269
      %v2279 = vmul.f32 %v2278, -0.00019511016
      %v2280 = vadd.f32 %v2279, 0.008332121
      %v2281 = vmul.f32 %v2278, %v2280
      %v2282 = vadd.f32 %v2281, -0.16666654
      %v2283 = vmul.f32 %v2278, %v2282
      %v2284 = vadd.f32 %v2283, 1.0
      %v2285 = vmul.f32 %v2284, %v2269
      %vm2286 = vweird.f32 %v1187
      %v2287 = vadd.s32 %v2270, 3
      %v2288 = vand.u32 %v2287, 3
      %vm2289 = vcmp.lt.s32.totalorder %v2288, 2
      %vm2290 = vcmp.eq.s32.totalorder %v2288, 0
      %v2291 = vxor.u32 %v2285, 2147483648
      %v2292 = vsel %vm2290, %v2277, %v2291
      %vm2293 = vcmp.eq.s32.totalorder %v2288, 2
      %v2294 = vxor.u32 %v2277, 2147483648
      %v2295 = vsel %vm2293, %v2294, %v2285
      %v2296 = vsel %vm2289, %v2292, %v2295
      %v2297 = vsel %vm2286, nan, %v2296
      %v2298 = vand.u32 2147483647, %v1188
      %vm2299 = vcmp.le.f32.partialorder %v2298, 0.7853982
      %vm2300 = vcmp.lt.s32.totalorder %v1188, 0
      %v2301 = vand.u32 %v1188, 2139095040
      %v2302 = vshrl.u32 %v2301, 23
      %v2303 = vsub.s32 %v2302, 127
      %v2304 = vand.u32 2147483647, %v1188
      %v2305 = vand.u32 %v2304, 8388607
      %v2306 = vor.u32 %v2305, 8388608
      %v2307 = vsub.s32 0, %v2306
      %v2308 = vadd.s32 %v2303, 1
      %vm2309 = vcmp.gt.s32.totalorder %v2308, 0
      %v2310 = vsel %vm2309, %v2308, 0
      %v2311 = vshrl.u32 %v2310, 5
      %v2312 = vand.u32 %v2310, 31
      %v2313 = vsub.s32 32, %v2312
      %v2314 = vshrl.u32 683565275, %v2313
      %v2315 = vshll.u32 683565275, %v2312
      %v2316 = vshrl.u32 2475754826, %v2313
      %v2317 = vor.u32 %v2315, %v2316
      %v2318 = vshll.u32 2475754826, %v2312
      %v2319 = vshrl.u32 2131351028, %v2313
      %v2320 = vor.u32 %v2318, %v2319
      %v2321 = vshll.u32 2131351028, %v2312
      %v2322 = vshrl.u32 2102212464, %v2313
      %v2323 = vor.u32 %v2321, %v2322
      %v2324 = vshll.u32 2102212464, %v2312
      %v2325 = vshrl.u32 920167782, %v2313
      %v2326 = vor.u32 %v2324, %v2325
      %v2327 = vshll.u32 920167782, %v2312
      %v2328 = vshrl.u32 1326507024, %v2313
      %v2329 = vor.u32 %v2327, %v2328
      %vm2330 = vcmp.lt.s32.totalorder %v2311, 1
      %vm2331 = vcmp.lt.s32.totalorder %v2311, 2
      %vm2332 = vcmp.lt.s32.totalorder %v2311, 3
      %vm2333 = vcmp.lt.s32.totalorder %v2311, 4
      %v2334 = vsel %vm2330, %v2314, %v2317
      %v2335 = vsel %vm2333, %v2323, 2102212464
      %v2336 = vsel %vm2332, %v2320, %v2335
      %v2337 = vsel %vm2331, %v2334, %v2336
      %v2338 = vsel %vm2330, %v2317, %v2320
      %v2339 = vsel %vm2333, %v2326, 920167782
      %v2340 = vsel %vm2332, %v2323, %v2339
      %v2341 = vsel %vm2331, %v2338, %v2340
      %v2342 = vsel %vm2330, %v2320, %v2323
      %v2343 = vsel %vm2333, %v2329, 1326507024
      %v2344 = vsel %vm2332, %v2326, %v2343
      %v2345 = vsel %vm2331, %v2342, %v2344
      %v2346 = vshll.u32 %v2306, 8
      %v2347 = vand.u32 %v2346, 65535
      %v2348 = vshrl.u32 %v2346, 16
      %v2349 = vand.u32 %v2345, 65535
      %v2350 = vshrl.u32 %v2345, 16
      %v2351 = vmul.u32 %v2347, %v2349
      %v2352 = vmul.u32 %v2347, %v2350
      %v2353 = vmul.u32 %v2348, %v2349
      %v2354 = vmul.u32 %v2348, %v2350
      %v2355 = vshll.u32 %v2352, 16
      %v2356 = vshrl.u32 %v2352, 16
      %v2357 = vshll.u32 %v2353, 16
      %v2358 = vshrl.u32 %v2353, 16
      %vm2359 = vc.u32 %v2351, %v2355
      %v2360 = vsel %vm2359, 1, 0
      %v2361 = vadd.s32 %v2351, %v2355
      %v2362 = vadd.s32 %v2354, %v2360
      %vm2363 = vc.u32 %v2361, %v2357
      %v2364 = vsel %vm2363, 1, 0
      %v2365 = vadd.s32 %v2361, %v2357
      %v2366 = vadd.s32 %v2362, %v2364
      %v2367 = vadd.s32 %v2366, %v2356
      %v2368 = vadd.s32 %v2367, %v2358
      %v2369 = vand.u32 %v2346, 65535
      %v2370 = vshrl.u32 %v2346, 16
      %v2371 = vand.u32 %v2341, 65535
      %v2372 = vshrl.u32 %v2341, 16
      %v2373 = vmul.u32 %v2369, %v2371
      %v2374 = vmul.u32 %v2369, %v2372
      %v2375 = vmul.u32 %v2370, %v2371
      %v2376 = vmul.u32 %v2370, %v2372
      %v2377 = vshll.u32 %v2374, 16
      %v2378 = vshrl.u32 %v2374, 16
      %v2379 = vshll.u32 %v2375, 16
      %v2380 = vshrl.u32 %v2375, 16
      %vm2381 = vc.u32 %v2373, %v2377
      %v2382 = vsel %vm2381, 1, 0
      %v2383 = vadd.s32 %v2373, %v2377
      %v2384 = vadd.s32 %v2376, %v2382
      %vm2385 = vc.u32 %v2383, %v2379
      %v2386 = vsel %vm2385, 1, 0
      %v2387 = vadd.s32 %v2383, %v2379
      %v2388 = vadd.s32 %v2384, %v2386
      %v2389 = vadd.s32 %v2388, %v2378
      %v2390 = vadd.s32 %v2389, %v2380
      %v2391 = vmul.u32 %v2346, %v2337
      %v2392 = vadd.s32 %v2368, %v2387
      %vm2393 = vc.u32 %v2368, %v2387
      %v2394 = vadd.s32 %v2390, 1
      %v2395 = vsel %vm2393, %v2394, %v2390
      %v2396 = vadd.s32 %v2391, %v2395
      %v2397 = vadd.s32 %v2396, 536870912
      %v2398 = vshrl.u32 %v2397, 30
      %v2399 = vshll.u32 %v2398, 30
      %v2400 = vsub.s32 %v2396, %v2399
      %vm2401 = vcmp.lt.s32.totalorder %v2400, 0
      %v2402 = vsub.s32 0, %v2400
      %v2403 = vsel %vm2401, %v2402, %v2400
      %v2404 = vclz %v2403
      %v2405 = vsub.s32 %v2404, 2
      %vm2406 = vcmp.gt.s32.totalorder 0, %v2405
      %v2407 = vsel %vm2406, 0, %v2405
      %v2408 = vsub.s32 32, %v2407
      %v2409 = vshll.u32 %v2400, %v2407
      %v2410 = vshrl.u32 %v2392, %v2408
      %v2411 = vor.u32 %v2409, %v2410
      %v2412 = vsub.s32 4294967266, %v2407
      %v2413 = vadd.s32 %v2412, 127
      %v2414 = vshll.u32 %v2413, 23
      %v2415 = vor.u32 4788187, %v2414
      %v2416 = vand.u32 2147483647, %v2415
      %v2418 = vcvt.s32.f32 %v2411
      %v2419 = vmul.f32 %v2418, %v2416
      %v2420 = vxor.u32 %v2419, 2147483648
      %v2421 = vsel %vm2300, %v2420, %v2419
      %v2422 = vsub.s32 4, %v2398
      %v2423 = vsel %vm2300, %v2422, %v2398
      %v2424 = vsel %vm2299, %v1188, %v2421
      %v2425 = vsel %vm2299, 0, %v2423
      %v2426 = vmul.f32 %v2424, %v2424
      %v2427 = vmul.f32 %v2426, -0.001358992
      %v2428 = vadd.f32 %v2427, 0.041655596
      %v2429 = vmul.f32 %v2426, %v2428
      %v2430 = vadd.f32 %v2429, -0.4999988
      %v2431 = vmul.f32 %v2426, %v2430
      %v2432 = vadd.f32 1.0, %v2431
      %v2433 = vmul.f32 %v2424, %v2424
      %v2434 = vmul.f32 %v2433, -0.00019511016
      %v2435 = vadd.f32 %v2434, 0.008332121
      %v2436 = vmul.f32 %v2433, %v2435
      %v2437 = vadd.f32 %v2436, -0.16666654
      %v2438 = vmul.f32 %v2433, %v2437
      %v2439 = vadd.f32 %v2438, 1.0
      %v2440 = vmul.f32 %v2439, %v2424
      %vm2441 = vweird.f32 %v1188
      %v2442 = vadd.s32 %v2425, 3
      %v2443 = vand.u32 %v2442, 3
      %vm2444 = vcmp.lt.s32.totalorder %v2443, 2
      %vm2445 = vcmp.eq.s32.totalorder %v2443, 0
      %v2446 = vxor.u32 %v2440, 2147483648
      %v2447 = vsel %vm2445, %v2432, %v2446
      %vm2448 = vcmp.eq.s32.totalorder %v2443, 2
      %v2449 = vxor.u32 %v2432, 2147483648
      %v2450 = vsel %vm2448, %v2449, %v2440
      %v2451 = vsel %vm2444, %v2447, %v2450
      %v2452 = vsel %vm2441, nan, %v2451
      %v2453 = vand.u32 2147483647, %v1189
      %vm2454 = vcmp.le.f32.partialorder %v2453, 0.7853982
      %vm2455 = vcmp.lt.s32.totalorder %v1189, 0
      %v2456 = vand.u32 %v1189, 2139095040
      %v2457 = vshrl.u32 %v2456, 23
      %v2458 = vsub.s32 %v2457, 127
      %v2459 = vand.u32 2147483647, %v1189
      %v2460 = vand.u32 %v2459, 8388607
      %v2461 = vor.u32 %v2460, 8388608
      %v2462 = vsub.s32 0, %v2461
      %v2463 = vadd.s32 %v2458, 1
      %vm2464 = vcmp.gt.s32.totalorder %v2463, 0
      %v2465 = vsel %vm2464, %v2463, 0
      %v2466 = vshrl.u32 %v2465, 5
      %v2467 = vand.u32 %v2465, 31
      %v2468 = vsub.s32 32, %v2467
      %v2469 = vshrl.u32 683565275, %v2468
      %v2470 = vshll.u32 683565275, %v2467
      %v2471 = vshrl.u32 2475754826, %v2468
      %v2472 = vor.u32 %v2470, %v2471
      %v2473 = vshll.u32 2475754826, %v2467
      %v2474 = vshrl.u32 2131351028, %v2468
      %v2475 = vor.u32 %v2473, %v2474
      %v2476 = vshll.u32 2131351028, %v2467
      %v2477 = vshrl.u32 2102212464, %v2468
      %v2478 = vor.u32 %v2476, %v2477
      %v2479 = vshll.u32 2102212464, %v2467
      %v2480 = vshrl.u32 920167782, %v2468
      %v2481 = vor.u32 %v2479, %v2480
      %v2482 = vshll.u32 920167782, %v2467
      %v2483 = vshrl.u32 1326507024, %v2468
      %v2484 = vor.u32 %v2482, %v2483
      %vm2485 = vcmp.lt.s32.totalorder %v2466, 1
      %vm2486 = vcmp.lt.s32.totalorder %v2466, 2
      %vm2487 = vcmp.lt.s32.totalorder %v2466, 3
      %vm2488 = vcmp.lt.s32.totalorder %v2466, 4
      %v2489 = vsel %vm2485, %v2469, %v2472
      %v2490 = vsel %vm2488, %v2478, 2102212464
      %v2491 = vsel %vm2487, %v2475, %v2490
      %v2492 = vsel %vm2486, %v2489, %v2491
      %v2493 = vsel %vm2485, %v2472, %v2475
      %v2494 = vsel %vm2488, %v2481, 920167782
      %v2495 = vsel %vm2487, %v2478, %v2494
      %v2496 = vsel %vm2486, %v2493, %v2495
      %v2497 = vsel %vm2485, %v2475, %v2478
      %v2498 = vsel %vm2488, %v2484, 1326507024
      %v2499 = vsel %vm2487, %v2481, %v2498
      %v2500 = vsel %vm2486, %v2497, %v2499
      %v2501 = vshll.u32 %v2461, 8
      %v2502 = vand.u32 %v2501, 65535
      %v2503 = vshrl.u32 %v2501, 16
      %v2504 = vand.u32 %v2500, 65535
      %v2505 = vshrl.u32 %v2500, 16
      %v2506 = vmul.u32 %v2502, %v2504
      %v2507 = vmul.u32 %v2502, %v2505
      %v2508 = vmul.u32 %v2503, %v2504
      %v2509 = vmul.u32 %v2503, %v2505
      %v2510 = vshll.u32 %v2507, 16
      %v2511 = vshrl.u32 %v2507, 16
      %v2512 = vshll.u32 %v2508, 16
      %v2513 = vshrl.u32 %v2508, 16
      %vm2514 = vc.u32 %v2506, %v2510
      %v2515 = vsel %vm2514, 1, 0
      %v2516 = vadd.s32 %v2506, %v2510
      %v2517 = vadd.s32 %v2509, %v2515
      %vm2518 = vc.u32 %v2516, %v2512
      %v2519 = vsel %vm2518, 1, 0
      %v2520 = vadd.s32 %v2516, %v2512
      %v2521 = vadd.s32 %v2517, %v2519
      %v2522 = vadd.s32 %v2521, %v2511
      %v2523 = vadd.s32 %v2522, %v2513
      %v2524 = vand.u32 %v2501, 65535
      %v2525 = vshrl.u32 %v2501, 16
      %v2526 = vand.u32 %v2496, 65535
      %v2527 = vshrl.u32 %v2496, 16
      %v2528 = vmul.u32 %v2524, %v2526
      %v2529 = vmul.u32 %v2524, %v2527
      %v2530 = vmul.u32 %v2525, %v2526
      %v2531 = vmul.u32 %v2525, %v2527
      %v2532 = vshll.u32 %v2529, 16
      %v2533 = vshrl.u32 %v2529, 16
      %v2534 = vshll.u32 %v2530, 16
      %v2535 = vshrl.u32 %v2530, 16
      %vm2536 = vc.u32 %v2528, %v2532
      %v2537 = vsel %vm2536, 1, 0
      %v2538 = vadd.s32 %v2528, %v2532
      %v2539 = vadd.s32 %v2531, %v2537
      %vm2540 = vc.u32 %v2538, %v2534
      %v2541 = vsel %vm2540, 1, 0
      %v2542 = vadd.s32 %v2538, %v2534
      %v2543 = vadd.s32 %v2539, %v2541
      %v2544 = vadd.s32 %v2543, %v2533
      %v2545 = vadd.s32 %v2544, %v2535
      %v2546 = vmul.u32 %v2501, %v2492
      %v2547 = vadd.s32 %v2523, %v2542
      %vm2548 = vc.u32 %v2523, %v2542
      %v2549 = vadd.s32 %v2545, 1
      %v2550 = vsel %vm2548, %v2549, %v2545
      %v2551 = vadd.s32 %v2546, %v2550
      %v2552 = vadd.s32 %v2551, 536870912
      %v2553 = vshrl.u32 %v2552, 30
      %v2554 = vshll.u32 %v2553, 30
      %v2555 = vsub.s32 %v2551, %v2554
      %vm2556 = vcmp.lt.s32.totalorder %v2555, 0
      %v2557 = vsub.s32 0, %v2555
      %v2558 = vsel %vm2556, %v2557, %v2555
      %v2559 = vclz %v2558
      %v2560 = vsub.s32 %v2559, 2
      %vm2561 = vcmp.gt.s32.totalorder 0, %v2560
      %v2562 = vsel %vm2561, 0, %v2560
      %v2563 = vsub.s32 32, %v2562
      %v2564 = vshll.u32 %v2555, %v2562
      %v2565 = vshrl.u32 %v2547, %v2563
      %v2566 = vor.u32 %v2564, %v2565
      %v2567 = vsub.s32 4294967266, %v2562
      %v2568 = vadd.s32 %v2567, 127
      %v2569 = vshll.u32 %v2568, 23
      %v2570 = vor.u32 4788187, %v2569
      %v2571 = vand.u32 2147483647, %v2570
      %v2573 = vcvt.s32.f32 %v2566
      %v2574 = vmul.f32 %v2573, %v2571
      %v2575 = vxor.u32 %v2574, 2147483648
      %v2576 = vsel %vm2455, %v2575, %v2574
      %v2577 = vsub.s32 4, %v2553
      %v2578 = vsel %vm2455, %v2577, %v2553
      %v2579 = vsel %vm2454, %v1189, %v2576
      %v2580 = vsel %vm2454, 0, %v2578
      %v2581 = vmul.f32 %v2579, %v2579
      %v2582 = vmul.f32 %v2581, -0.001358992
      %v2583 = vadd.f32 %v2582, 0.041655596
      %v2584 = vmul.f32 %v2581, %v2583
      %v2585 = vadd.f32 %v2584, -0.4999988
      %v2586 = vmul.f32 %v2581, %v2585
      %v2587 = vadd.f32 1.0, %v2586
      %v2588 = vmul.f32 %v2579, %v2579
      %v2589 = vmul.f32 %v2588, -0.00019511016
      %v2590 = vadd.f32 %v2589, 0.008332121
      %v2591 = vmul.f32 %v2588, %v2590
      %v2592 = vadd.f32 %v2591, -0.16666654
      %v2593 = vmul.f32 %v2588, %v2592
      %v2594 = vadd.f32 %v2593, 1.0
      %v2595 = vmul.f32 %v2594, %v2579
      %vm2596 = vweird.f32 %v1189
      %v2597 = vadd.s32 %v2580, 3
      %v2598 = vand.u32 %v2597, 3
      %vm2599 = vcmp.lt.s32.totalorder %v2598, 2
      %vm2600 = vcmp.eq.s32.totalorder %v2598, 0
      %v2601 = vxor.u32 %v2595, 2147483648
      %v2602 = vsel %vm2600, %v2587, %v2601
      %vm2603 = vcmp.eq.s32.totalorder %v2598, 2
      %v2604 = vxor.u32 %v2587, 2147483648
      %v2605 = vsel %vm2603, %v2604, %v2595
      %v2606 = vsel %vm2599, %v2602, %v2605
      %v2607 = vsel %vm2596, nan, %v2606
      %v2608 = vand.u32 2147483647, %v1190
      %vm2609 = vcmp.le.f32.partialorder %v2608, 0.7853982
      %vm2610 = vcmp.lt.s32.totalorder %v1190, 0
      %v2611 = vand.u32 %v1190, 2139095040
      %v2612 = vshrl.u32 %v2611, 23
      %v2613 = vsub.s32 %v2612, 127
      %v2614 = vand.u32 2147483647, %v1190
      %v2615 = vand.u32 %v2614, 8388607
      %v2616 = vor.u32 %v2615, 8388608
      %v2617 = vsub.s32 0, %v2616
      %v2618 = vadd.s32 %v2613, 1
      %vm2619 = vcmp.gt.s32.totalorder %v2618, 0
      %v2620 = vsel %vm2619, %v2618, 0
      %v2621 = vshrl.u32 %v2620, 5
      %v2622 = vand.u32 %v2620, 31
      %v2623 = vsub.s32 32, %v2622
      %v2624 = vshrl.u32 683565275, %v2623
      %v2625 = vshll.u32 683565275, %v2622
      %v2626 = vshrl.u32 2475754826, %v2623
      %v2627 = vor.u32 %v2625, %v2626
      %v2628 = vshll.u32 2475754826, %v2622
      %v2629 = vshrl.u32 2131351028, %v2623
      %v2630 = vor.u32 %v2628, %v2629
      %v2631 = vshll.u32 2131351028, %v2622
      %v2632 = vshrl.u32 2102212464, %v2623
      %v2633 = vor.u32 %v2631, %v2632
      %v2634 = vshll.u32 2102212464, %v2622
      %v2635 = vshrl.u32 920167782, %v2623
      %v2636 = vor.u32 %v2634, %v2635
      %v2637 = vshll.u32 920167782, %v2622
      %v2638 = vshrl.u32 1326507024, %v2623
      %v2639 = vor.u32 %v2637, %v2638
      %vm2640 = vcmp.lt.s32.totalorder %v2621, 1
      %vm2641 = vcmp.lt.s32.totalorder %v2621, 2
      %vm2642 = vcmp.lt.s32.totalorder %v2621, 3
      %vm2643 = vcmp.lt.s32.totalorder %v2621, 4
      %v2644 = vsel %vm2640, %v2624, %v2627
      %v2645 = vsel %vm2643, %v2633, 2102212464
      %v2646 = vsel %vm2642, %v2630, %v2645
      %v2647 = vsel %vm2641, %v2644, %v2646
      %v2648 = vsel %vm2640, %v2627, %v2630
      %v2649 = vsel %vm2643, %v2636, 920167782
      %v2650 = vsel %vm2642, %v2633, %v2649
      %v2651 = vsel %vm2641, %v2648, %v2650
      %v2652 = vsel %vm2640, %v2630, %v2633
      %v2653 = vsel %vm2643, %v2639, 1326507024
      %v2654 = vsel %vm2642, %v2636, %v2653
      %v2655 = vsel %vm2641, %v2652, %v2654
      %v2656 = vshll.u32 %v2616, 8
      %v2657 = vand.u32 %v2656, 65535
      %v2658 = vshrl.u32 %v2656, 16
      %v2659 = vand.u32 %v2655, 65535
      %v2660 = vshrl.u32 %v2655, 16
      %v2661 = vmul.u32 %v2657, %v2659
      %v2662 = vmul.u32 %v2657, %v2660
      %v2663 = vmul.u32 %v2658, %v2659
      %v2664 = vmul.u32 %v2658, %v2660
      %v2665 = vshll.u32 %v2662, 16
      %v2666 = vshrl.u32 %v2662, 16
      %v2667 = vshll.u32 %v2663, 16
      %v2668 = vshrl.u32 %v2663, 16
      %vm2669 = vc.u32 %v2661, %v2665
      %v2670 = vsel %vm2669, 1, 0
      %v2671 = vadd.s32 %v2661, %v2665
      %v2672 = vadd.s32 %v2664, %v2670
      %vm2673 = vc.u32 %v2671, %v2667
      %v2674 = vsel %vm2673, 1, 0
      %v2675 = vadd.s32 %v2671, %v2667
      %v2676 = vadd.s32 %v2672, %v2674
      %v2677 = vadd.s32 %v2676, %v2666
      %v2678 = vadd.s32 %v2677, %v2668
      %v2679 = vand.u32 %v2656, 65535
      %v2680 = vshrl.u32 %v2656, 16
      %v2681 = vand.u32 %v2651, 65535
      %v2682 = vshrl.u32 %v2651, 16
      %v2683 = vmul.u32 %v2679, %v2681
      %v2684 = vmul.u32 %v2679, %v2682
      %v2685 = vmul.u32 %v2680, %v2681
      %v2686 = vmul.u32 %v2680, %v2682
      %v2687 = vshll.u32 %v2684, 16
      %v2688 = vshrl.u32 %v2684, 16
      %v2689 = vshll.u32 %v2685, 16
      %v2690 = vshrl.u32 %v2685, 16
      %vm2691 = vc.u32 %v2683, %v2687
      %v2692 = vsel %vm2691, 1, 0
      %v2693 = vadd.s32 %v2683, %v2687
      %v2694 = vadd.s32 %v2686, %v2692
      %vm2695 = vc.u32 %v2693, %v2689
      %v2696 = vsel %vm2695, 1, 0
      %v2697 = vadd.s32 %v2693, %v2689
      %v2698 = vadd.s32 %v2694, %v2696
      %v2699 = vadd.s32 %v2698, %v2688
      %v2700 = vadd.s32 %v2699, %v2690
      %v2701 = vmul.u32 %v2656, %v2647
      %v2702 = vadd.s32 %v2678, %v2697
      %vm2703 = vc.u32 %v2678, %v2697
      %v2704 = vadd.s32 %v2700, 1
      %v2705 = vsel %vm2703, %v2704, %v2700
      %v2706 = vadd.s32 %v2701, %v2705
      %v2707 = vadd.s32 %v2706, 536870912
      %v2708 = vshrl.u32 %v2707, 30
      %v2709 = vshll.u32 %v2708, 30
      %v2710 = vsub.s32 %v2706, %v2709
      %vm2711 = vcmp.lt.s32.totalorder %v2710, 0
      %v2712 = vsub.s32 0, %v2710
      %v2713 = vsel %vm2711, %v2712, %v2710
      %v2714 = vclz %v2713
      %v2715 = vsub.s32 %v2714, 2
      %vm2716 = vcmp.gt.s32.totalorder 0, %v2715
      %v2717 = vsel %vm2716, 0, %v2715
      %v2718 = vsub.s32 32, %v2717
      %v2719 = vshll.u32 %v2710, %v2717
      %v2720 = vshrl.u32 %v2702, %v2718
      %v2721 = vor.u32 %v2719, %v2720
      %v2722 = vsub.s32 4294967266, %v2717
      %v2723 = vadd.s32 %v2722, 127
      %v2724 = vshll.u32 %v2723, 23
      %v2725 = vor.u32 4788187, %v2724
      %v2726 = vand.u32 2147483647, %v2725
      %v2728 = vcvt.s32.f32 %v2721
      %v2729 = vmul.f32 %v2728, %v2726
      %v2730 = vxor.u32 %v2729, 2147483648
      %v2731 = vsel %vm2610, %v2730, %v2729
      %v2732 = vsub.s32 4, %v2708
      %v2733 = vsel %vm2610, %v2732, %v2708
      %v2734 = vsel %vm2609, %v1190, %v2731
      %v2735 = vsel %vm2609, 0, %v2733
      %v2736 = vmul.f32 %v2734, %v2734
      %v2737 = vmul.f32 %v2736, -0.001358992
      %v2738 = vadd.f32 %v2737, 0.041655596
      %v2739 = vmul.f32 %v2736, %v2738
      %v2740 = vadd.f32 %v2739, -0.4999988
      %v2741 = vmul.f32 %v2736, %v2740
      %v2742 = vadd.f32 1.0, %v2741
      %v2743 = vmul.f32 %v2734, %v2734
      %v2744 = vmul.f32 %v2743, -0.00019511016
      %v2745 = vadd.f32 %v2744, 0.008332121
      %v2746 = vmul.f32 %v2743, %v2745
      %v2747 = vadd.f32 %v2746, -0.16666654
      %v2748 = vmul.f32 %v2743, %v2747
      %v2749 = vadd.f32 %v2748, 1.0
      %v2750 = vmul.f32 %v2749, %v2734
      %vm2751 = vweird.f32 %v1190
      %v2752 = vadd.s32 %v2735, 3
      %v2753 = vand.u32 %v2752, 3
      %vm2754 = vcmp.lt.s32.totalorder %v2753, 2
      %vm2755 = vcmp.eq.s32.totalorder %v2753, 0
      %v2756 = vxor.u32 %v2750, 2147483648
      %v2757 = vsel %vm2755, %v2742, %v2756
      %vm2758 = vcmp.eq.s32.totalorder %v2753, 2
      %v2759 = vxor.u32 %v2742, 2147483648
      %v2760 = vsel %vm2758, %v2759, %v2750
      %v2761 = vsel %vm2754, %v2757, %v2760
      %v2762 = vsel %vm2751, nan, %v2761
      %v2763 = vand.u32 2147483647, %v1191
      %vm2764 = vcmp.le.f32.partialorder %v2763, 0.7853982
      %vm2765 = vcmp.lt.s32.totalorder %v1191, 0
      %v2766 = vand.u32 %v1191, 2139095040
      %v2767 = vshrl.u32 %v2766, 23
      %v2768 = vsub.s32 %v2767, 127
      %v2769 = vand.u32 2147483647, %v1191
      %v2770 = vand.u32 %v2769, 8388607
      %v2771 = vor.u32 %v2770, 8388608
      %v2772 = vsub.s32 0, %v2771
      %v2773 = vadd.s32 %v2768, 1
      %vm2774 = vcmp.gt.s32.totalorder %v2773, 0
      %v2775 = vsel %vm2774, %v2773, 0
      %v2776 = vshrl.u32 %v2775, 5
      %v2777 = vand.u32 %v2775, 31
      %v2778 = vsub.s32 32, %v2777
      %v2779 = vshrl.u32 683565275, %v2778
      %v2780 = vshll.u32 683565275, %v2777
      %v2781 = vshrl.u32 2475754826, %v2778
      %v2782 = vor.u32 %v2780, %v2781
      %v2783 = vshll.u32 2475754826, %v2777
      %v2784 = vshrl.u32 2131351028, %v2778
      %v2785 = vor.u32 %v2783, %v2784
      %v2786 = vshll.u32 2131351028, %v2777
      %v2787 = vshrl.u32 2102212464, %v2778
      %v2788 = vor.u32 %v2786, %v2787
      %v2789 = vshll.u32 2102212464, %v2777
      %v2790 = vshrl.u32 920167782, %v2778
      %v2791 = vor.u32 %v2789, %v2790
      %v2792 = vshll.u32 920167782, %v2777
      %v2793 = vshrl.u32 1326507024, %v2778
      %v2794 = vor.u32 %v2792, %v2793
      %vm2795 = vcmp.lt.s32.totalorder %v2776, 1
      %vm2796 = vcmp.lt.s32.totalorder %v2776, 2
      %vm2797 = vcmp.lt.s32.totalorder %v2776, 3
      %vm2798 = vcmp.lt.s32.totalorder %v2776, 4
      %v2799 = vsel %vm2795, %v2779, %v2782
      %v2800 = vsel %vm2798, %v2788, 2102212464
      %v2801 = vsel %vm2797, %v2785, %v2800
      %v2802 = vsel %vm2796, %v2799, %v2801
      %v2803 = vsel %vm2795, %v2782, %v2785
      %v2804 = vsel %vm2798, %v2791, 920167782
      %v2805 = vsel %vm2797, %v2788, %v2804
      %v2806 = vsel %vm2796, %v2803, %v2805
      %v2807 = vsel %vm2795, %v2785, %v2788
      %v2808 = vsel %vm2798, %v2794, 1326507024
      %v2809 = vsel %vm2797, %v2791, %v2808
      %v2810 = vsel %vm2796, %v2807, %v2809
      %v2811 = vshll.u32 %v2771, 8
      %v2812 = vand.u32 %v2811, 65535
      %v2813 = vshrl.u32 %v2811, 16
      %v2814 = vand.u32 %v2810, 65535
      %v2815 = vshrl.u32 %v2810, 16
      %v2816 = vmul.u32 %v2812, %v2814
      %v2817 = vmul.u32 %v2812, %v2815
      %v2818 = vmul.u32 %v2813, %v2814
      %v2819 = vmul.u32 %v2813, %v2815
      %v2820 = vshll.u32 %v2817, 16
      %v2821 = vshrl.u32 %v2817, 16
      %v2822 = vshll.u32 %v2818, 16
      %v2823 = vshrl.u32 %v2818, 16
      %vm2824 = vc.u32 %v2816, %v2820
      %v2825 = vsel %vm2824, 1, 0
      %v2826 = vadd.s32 %v2816, %v2820
      %v2827 = vadd.s32 %v2819, %v2825
      %vm2828 = vc.u32 %v2826, %v2822
      %v2829 = vsel %vm2828, 1, 0
      %v2830 = vadd.s32 %v2826, %v2822
      %v2831 = vadd.s32 %v2827, %v2829
      %v2832 = vadd.s32 %v2831, %v2821
      %v2833 = vadd.s32 %v2832, %v2823
      %v2834 = vand.u32 %v2811, 65535
      %v2835 = vshrl.u32 %v2811, 16
      %v2836 = vand.u32 %v2806, 65535
      %v2837 = vshrl.u32 %v2806, 16
      %v2838 = vmul.u32 %v2834, %v2836
      %v2839 = vmul.u32 %v2834, %v2837
      %v2840 = vmul.u32 %v2835, %v2836
      %v2841 = vmul.u32 %v2835, %v2837
      %v2842 = vshll.u32 %v2839, 16
      %v2843 = vshrl.u32 %v2839, 16
      %v2844 = vshll.u32 %v2840, 16
      %v2845 = vshrl.u32 %v2840, 16
      %vm2846 = vc.u32 %v2838, %v2842
      %v2847 = vsel %vm2846, 1, 0
      %v2848 = vadd.s32 %v2838, %v2842
      %v2849 = vadd.s32 %v2841, %v2847
      %vm2850 = vc.u32 %v2848, %v2844
      %v2851 = vsel %vm2850, 1, 0
      %v2852 = vadd.s32 %v2848, %v2844
      %v2853 = vadd.s32 %v2849, %v2851
      %v2854 = vadd.s32 %v2853, %v2843
      %v2855 = vadd.s32 %v2854, %v2845
      %v2856 = vmul.u32 %v2811, %v2802
      %v2857 = vadd.s32 %v2833, %v2852
      %vm2858 = vc.u32 %v2833, %v2852
      %v2859 = vadd.s32 %v2855, 1
      %v2860 = vsel %vm2858, %v2859, %v2855
      %v2861 = vadd.s32 %v2856, %v2860
      %v2862 = vadd.s32 %v2861, 536870912
      %v2863 = vshrl.u32 %v2862, 30
      %v2864 = vshll.u32 %v2863, 30
      %v2865 = vsub.s32 %v2861, %v2864
      %vm2866 = vcmp.lt.s32.totalorder %v2865, 0
      %v2867 = vsub.s32 0, %v2865
      %v2868 = vsel %vm2866, %v2867, %v2865
      %v2869 = vclz %v2868
      %v2870 = vsub.s32 %v2869, 2
      %vm2871 = vcmp.gt.s32.totalorder 0, %v2870
      %v2872 = vsel %vm2871, 0, %v2870
      %v2873 = vsub.s32 32, %v2872
      %v2874 = vshll.u32 %v2865, %v2872
      %v2875 = vshrl.u32 %v2857, %v2873
      %v2876 = vor.u32 %v2874, %v2875
      %v2877 = vsub.s32 4294967266, %v2872
      %v2878 = vadd.s32 %v2877, 127
      %v2879 = vshll.u32 %v2878, 23
      %v2880 = vor.u32 4788187, %v2879
      %v2881 = vand.u32 2147483647, %v2880
      %v2883 = vcvt.s32.f32 %v2876
      %v2884 = vmul.f32 %v2883, %v2881
      %v2885 = vxor.u32 %v2884, 2147483648
      %v2886 = vsel %vm2765, %v2885, %v2884
      %v2887 = vsub.s32 4, %v2863
      %v2888 = vsel %vm2765, %v2887, %v2863
      %v2889 = vsel %vm2764, %v1191, %v2886
      %v2890 = vsel %vm2764, 0, %v2888
      %v2891 = vmul.f32 %v2889, %v2889
      %v2892 = vmul.f32 %v2891, -0.001358992
      %v2893 = vadd.f32 %v2892, 0.041655596
      %v2894 = vmul.f32 %v2891, %v2893
      %v2895 = vadd.f32 %v2894, -0.4999988
      %v2896 = vmul.f32 %v2891, %v2895
      %v2897 = vadd.f32 1.0, %v2896
      %v2898 = vmul.f32 %v2889, %v2889
      %v2899 = vmul.f32 %v2898, -0.00019511016
      %v2900 = vadd.f32 %v2899, 0.008332121
      %v2901 = vmul.f32 %v2898, %v2900
      %v2902 = vadd.f32 %v2901, -0.16666654
      %v2903 = vmul.f32 %v2898, %v2902
      %v2904 = vadd.f32 %v2903, 1.0
      %v2905 = vmul.f32 %v2904, %v2889
      %vm2906 = vweird.f32 %v1191
      %v2907 = vadd.s32 %v2890, 3
      %v2908 = vand.u32 %v2907, 3
      %vm2909 = vcmp.lt.s32.totalorder %v2908, 2
      %vm2910 = vcmp.eq.s32.totalorder %v2908, 0
      %v2911 = vxor.u32 %v2905, 2147483648
      %v2912 = vsel %vm2910, %v2897, %v2911
      %vm2913 = vcmp.eq.s32.totalorder %v2908, 2
      %v2914 = vxor.u32 %v2897, 2147483648
      %v2915 = vsel %vm2913, %v2914, %v2905
      %v2916 = vsel %vm2909, %v2912, %v2915
      %v2917 = vsel %vm2906, nan, %v2916
      %v2918 = vand.u32 2147483647, %v1192
      %vm2919 = vcmp.le.f32.partialorder %v2918, 0.7853982
      %vm2920 = vcmp.lt.s32.totalorder %v1192, 0
      %v2921 = vand.u32 %v1192, 2139095040
      %v2922 = vshrl.u32 %v2921, 23
      %v2923 = vsub.s32 %v2922, 127
      %v2924 = vand.u32 2147483647, %v1192
      %v2925 = vand.u32 %v2924, 8388607
      %v2926 = vor.u32 %v2925, 8388608
      %v2927 = vsub.s32 0, %v2926
      %v2928 = vadd.s32 %v2923, 1
      %vm2929 = vcmp.gt.s32.totalorder %v2928, 0
      %v2930 = vsel %vm2929, %v2928, 0
      %v2931 = vshrl.u32 %v2930, 5
      %v2932 = vand.u32 %v2930, 31
      %v2933 = vsub.s32 32, %v2932
      %v2934 = vshrl.u32 683565275, %v2933
      %v2935 = vshll.u32 683565275, %v2932
      %v2936 = vshrl.u32 2475754826, %v2933
      %v2937 = vor.u32 %v2935, %v2936
      %v2938 = vshll.u32 2475754826, %v2932
      %v2939 = vshrl.u32 2131351028, %v2933
      %v2940 = vor.u32 %v2938, %v2939
      %v2941 = vshll.u32 2131351028, %v2932
      %v2942 = vshrl.u32 2102212464, %v2933
      %v2943 = vor.u32 %v2941, %v2942
      %v2944 = vshll.u32 2102212464, %v2932
      %v2945 = vshrl.u32 920167782, %v2933
      %v2946 = vor.u32 %v2944, %v2945
      %v2947 = vshll.u32 920167782, %v2932
      %v2948 = vshrl.u32 1326507024, %v2933
      %v2949 = vor.u32 %v2947, %v2948
      %vm2950 = vcmp.lt.s32.totalorder %v2931, 1
      %vm2951 = vcmp.lt.s32.totalorder %v2931, 2
      %vm2952 = vcmp.lt.s32.totalorder %v2931, 3
      %vm2953 = vcmp.lt.s32.totalorder %v2931, 4
      %v2954 = vsel %vm2950, %v2934, %v2937
      %v2955 = vsel %vm2953, %v2943, 2102212464
      %v2956 = vsel %vm2952, %v2940, %v2955
      %v2957 = vsel %vm2951, %v2954, %v2956
      %v2958 = vsel %vm2950, %v2937, %v2940
      %v2959 = vsel %vm2953, %v2946, 920167782
      %v2960 = vsel %vm2952, %v2943, %v2959
      %v2961 = vsel %vm2951, %v2958, %v2960
      %v2962 = vsel %vm2950, %v2940, %v2943
      %v2963 = vsel %vm2953, %v2949, 1326507024
      %v2964 = vsel %vm2952, %v2946, %v2963
      %v2965 = vsel %vm2951, %v2962, %v2964
      %v2966 = vshll.u32 %v2926, 8
      %v2967 = vand.u32 %v2966, 65535
      %v2968 = vshrl.u32 %v2966, 16
      %v2969 = vand.u32 %v2965, 65535
      %v2970 = vshrl.u32 %v2965, 16
      %v2971 = vmul.u32 %v2967, %v2969
      %v2972 = vmul.u32 %v2967, %v2970
      %v2973 = vmul.u32 %v2968, %v2969
      %v2974 = vmul.u32 %v2968, %v2970
      %v2975 = vshll.u32 %v2972, 16
      %v2976 = vshrl.u32 %v2972, 16
      %v2977 = vshll.u32 %v2973, 16
      %v2978 = vshrl.u32 %v2973, 16
      %vm2979 = vc.u32 %v2971, %v2975
      %v2980 = vsel %vm2979, 1, 0
      %v2981 = vadd.s32 %v2971, %v2975
      %v2982 = vadd.s32 %v2974, %v2980
      %vm2983 = vc.u32 %v2981, %v2977
      %v2984 = vsel %vm2983, 1, 0
      %v2985 = vadd.s32 %v2981, %v2977
      %v2986 = vadd.s32 %v2982, %v2984
      %v2987 = vadd.s32 %v2986, %v2976
      %v2988 = vadd.s32 %v2987, %v2978
      %v2989 = vand.u32 %v2966, 65535
      %v2990 = vshrl.u32 %v2966, 16
      %v2991 = vand.u32 %v2961, 65535
      %v2992 = vshrl.u32 %v2961, 16
      %v2993 = vmul.u32 %v2989, %v2991
      %v2994 = vmul.u32 %v2989, %v2992
      %v2995 = vmul.u32 %v2990, %v2991
      %v2996 = vmul.u32 %v2990, %v2992
      %v2997 = vshll.u32 %v2994, 16
      %v2998 = vshrl.u32 %v2994, 16
      %v2999 = vshll.u32 %v2995, 16
      %v3000 = vshrl.u32 %v2995, 16
      %vm3001 = vc.u32 %v2993, %v2997
      %v3002 = vsel %vm3001, 1, 0
      %v3003 = vadd.s32 %v2993, %v2997
      %v3004 = vadd.s32 %v2996, %v3002
      %vm3005 = vc.u32 %v3003, %v2999
      %v3006 = vsel %vm3005, 1, 0
      %v3007 = vadd.s32 %v3003, %v2999
      %v3008 = vadd.s32 %v3004, %v3006
      %v3009 = vadd.s32 %v3008, %v2998
      %v3010 = vadd.s32 %v3009, %v3000
      %v3011 = vmul.u32 %v2966, %v2957
      %v3012 = vadd.s32 %v2988, %v3007
      %vm3013 = vc.u32 %v2988, %v3007
      %v3014 = vadd.s32 %v3010, 1
      %v3015 = vsel %vm3013, %v3014, %v3010
      %v3016 = vadd.s32 %v3011, %v3015
      %v3017 = vadd.s32 %v3016, 536870912
      %v3018 = vshrl.u32 %v3017, 30
      %v3019 = vshll.u32 %v3018, 30
      %v3020 = vsub.s32 %v3016, %v3019
      %vm3021 = vcmp.lt.s32.totalorder %v3020, 0
      %v3022 = vsub.s32 0, %v3020
      %v3023 = vsel %vm3021, %v3022, %v3020
      %v3024 = vclz %v3023
      %v3025 = vsub.s32 %v3024, 2
      %vm3026 = vcmp.gt.s32.totalorder 0, %v3025
      %v3027 = vsel %vm3026, 0, %v3025
      %v3028 = vsub.s32 32, %v3027
      %v3029 = vshll.u32 %v3020, %v3027
      %v3030 = vshrl.u32 %v3012, %v3028
      %v3031 = vor.u32 %v3029, %v3030
      %v3032 = vsub.s32 4294967266, %v3027
      %v3033 = vadd.s32 %v3032, 127
      %v3034 = vshll.u32 %v3033, 23
      %v3035 = vor.u32 4788187, %v3034
      %v3036 = vand.u32 2147483647, %v3035
      %v3038 = vcvt.s32.f32 %v3031
      %v3039 = vmul.f32 %v3038, %v3036
      %v3040 = vxor.u32 %v3039, 2147483648
      %v3041 = vsel %vm2920, %v3040, %v3039
      %v3042 = vsub.s32 4, %v3018
      %v3043 = vsel %vm2920, %v3042, %v3018
      %v3044 = vsel %vm2919, %v1192, %v3041
      %v3045 = vsel %vm2919, 0, %v3043
      %v3046 = vmul.f32 %v3044, %v3044
      %v3047 = vmul.f32 %v3046, -0.001358992
      %v3048 = vadd.f32 %v3047, 0.041655596
      %v3049 = vmul.f32 %v3046, %v3048
      %v3050 = vadd.f32 %v3049, -0.4999988
      %v3051 = vmul.f32 %v3046, %v3050
      %v3052 = vadd.f32 1.0, %v3051
      %v3053 = vmul.f32 %v3044, %v3044
      %v3054 = vmul.f32 %v3053, -0.00019511016
      %v3055 = vadd.f32 %v3054, 0.008332121
      %v3056 = vmul.f32 %v3053, %v3055
      %v3057 = vadd.f32 %v3056, -0.16666654
      %v3058 = vmul.f32 %v3053, %v3057
      %v3059 = vadd.f32 %v3058, 1.0
      %v3060 = vmul.f32 %v3059, %v3044
      %vm3061 = vweird.f32 %v1192
      %v3062 = vadd.s32 %v3045, 3
      %v3063 = vand.u32 %v3062, 3
      %vm3064 = vcmp.lt.s32.totalorder %v3063, 2
      %vm3065 = vcmp.eq.s32.totalorder %v3063, 0
      %v3066 = vxor.u32 %v3060, 2147483648
      %v3067 = vsel %vm3065, %v3052, %v3066
      %vm3068 = vcmp.eq.s32.totalorder %v3063, 2
      %v3069 = vxor.u32 %v3052, 2147483648
      %v3070 = vsel %vm3068, %v3069, %v3060
      %v3071 = vsel %vm3064, %v3067, %v3070
      %v3072 = vsel %vm3061, nan, %v3071
      %v3073 = vand.u32 2147483647, %v1193
      %vm3074 = vcmp.le.f32.partialorder %v3073, 0.7853982
      %vm3075 = vcmp.lt.s32.totalorder %v1193, 0
      %v3076 = vand.u32 %v1193, 2139095040
      %v3077 = vshrl.u32 %v3076, 23
      %v3078 = vsub.s32 %v3077, 127
      %v3079 = vand.u32 2147483647, %v1193
      %v3080 = vand.u32 %v3079, 8388607
      %v3081 = vor.u32 %v3080, 8388608
      %v3082 = vsub.s32 0, %v3081
      %v3083 = vadd.s32 %v3078, 1
      %vm3084 = vcmp.gt.s32.totalorder %v3083, 0
      %v3085 = vsel %vm3084, %v3083, 0
      %v3086 = vshrl.u32 %v3085, 5
      %v3087 = vand.u32 %v3085, 31
      %v3088 = vsub.s32 32, %v3087
      %v3089 = vshrl.u32 683565275, %v3088
      %v3090 = vshll.u32 683565275, %v3087
      %v3091 = vshrl.u32 2475754826, %v3088
      %v3092 = vor.u32 %v3090, %v3091
      %v3093 = vshll.u32 2475754826, %v3087
      %v3094 = vshrl.u32 2131351028, %v3088
      %v3095 = vor.u32 %v3093, %v3094
      %v3096 = vshll.u32 2131351028, %v3087
      %v3097 = vshrl.u32 2102212464, %v3088
      %v3098 = vor.u32 %v3096, %v3097
      %v3099 = vshll.u32 2102212464, %v3087
      %v3100 = vshrl.u32 920167782, %v3088
      %v3101 = vor.u32 %v3099, %v3100
      %v3102 = vshll.u32 920167782, %v3087
      %v3103 = vshrl.u32 1326507024, %v3088
      %v3104 = vor.u32 %v3102, %v3103
      %vm3105 = vcmp.lt.s32.totalorder %v3086, 1
      %vm3106 = vcmp.lt.s32.totalorder %v3086, 2
      %vm3107 = vcmp.lt.s32.totalorder %v3086, 3
      %vm3108 = vcmp.lt.s32.totalorder %v3086, 4
      %v3109 = vsel %vm3105, %v3089, %v3092
      %v3110 = vsel %vm3108, %v3098, 2102212464
      %v3111 = vsel %vm3107, %v3095, %v3110
      %v3112 = vsel %vm3106, %v3109, %v3111
      %v3113 = vsel %vm3105, %v3092, %v3095
      %v3114 = vsel %vm3108, %v3101, 920167782
      %v3115 = vsel %vm3107, %v3098, %v3114
      %v3116 = vsel %vm3106, %v3113, %v3115
      %v3117 = vsel %vm3105, %v3095, %v3098
      %v3118 = vsel %vm3108, %v3104, 1326507024
      %v3119 = vsel %vm3107, %v3101, %v3118
      %v3120 = vsel %vm3106, %v3117, %v3119
      %v3121 = vshll.u32 %v3081, 8
      %v3122 = vand.u32 %v3121, 65535
      %v3123 = vshrl.u32 %v3121, 16
      %v3124 = vand.u32 %v3120, 65535
      %v3125 = vshrl.u32 %v3120, 16
      %v3126 = vmul.u32 %v3122, %v3124
      %v3127 = vmul.u32 %v3122, %v3125
      %v3128 = vmul.u32 %v3123, %v3124
      %v3129 = vmul.u32 %v3123, %v3125
      %v3130 = vshll.u32 %v3127, 16
      %v3131 = vshrl.u32 %v3127, 16
      %v3132 = vshll.u32 %v3128, 16
      %v3133 = vshrl.u32 %v3128, 16
      %vm3134 = vc.u32 %v3126, %v3130
      %v3135 = vsel %vm3134, 1, 0
      %v3136 = vadd.s32 %v3126, %v3130
      %v3137 = vadd.s32 %v3129, %v3135
      %vm3138 = vc.u32 %v3136, %v3132
      %v3139 = vsel %vm3138, 1, 0
      %v3140 = vadd.s32 %v3136, %v3132
      %v3141 = vadd.s32 %v3137, %v3139
      %v3142 = vadd.s32 %v3141, %v3131
      %v3143 = vadd.s32 %v3142, %v3133
      %v3144 = vand.u32 %v3121, 65535
      %v3145 = vshrl.u32 %v3121, 16
      %v3146 = vand.u32 %v3116, 65535
      %v3147 = vshrl.u32 %v3116, 16
      %v3148 = vmul.u32 %v3144, %v3146
      %v3149 = vmul.u32 %v3144, %v3147
      %v3150 = vmul.u32 %v3145, %v3146
      %v3151 = vmul.u32 %v3145, %v3147
      %v3152 = vshll.u32 %v3149, 16
      %v3153 = vshrl.u32 %v3149, 16
      %v3154 = vshll.u32 %v3150, 16
      %v3155 = vshrl.u32 %v3150, 16
      %vm3156 = vc.u32 %v3148, %v3152
      %v3157 = vsel %vm3156, 1, 0
      %v3158 = vadd.s32 %v3148, %v3152
      %v3159 = vadd.s32 %v3151, %v3157
      %vm3160 = vc.u32 %v3158, %v3154
      %v3161 = vsel %vm3160, 1, 0
      %v3162 = vadd.s32 %v3158, %v3154
      %v3163 = vadd.s32 %v3159, %v3161
      %v3164 = vadd.s32 %v3163, %v3153
      %v3165 = vadd.s32 %v3164, %v3155
      %v3166 = vmul.u32 %v3121, %v3112
      %v3167 = vadd.s32 %v3143, %v3162
      %vm3168 = vc.u32 %v3143, %v3162
      %v3169 = vadd.s32 %v3165, 1
      %v3170 = vsel %vm3168, %v3169, %v3165
      %v3171 = vadd.s32 %v3166, %v3170
      %v3172 = vadd.s32 %v3171, 536870912
      %v3173 = vshrl.u32 %v3172, 30
      %v3174 = vshll.u32 %v3173, 30
      %v3175 = vsub.s32 %v3171, %v3174
      %vm3176 = vcmp.lt.s32.totalorder %v3175, 0
      %v3177 = vsub.s32 0, %v3175
      %v3178 = vsel %vm3176, %v3177, %v3175
      %v3179 = vclz %v3178
      %v3180 = vsub.s32 %v3179, 2
      %vm3181 = vcmp.gt.s32.totalorder 0, %v3180
      %v3182 = vsel %vm3181, 0, %v3180
      %v3183 = vsub.s32 32, %v3182
      %v3184 = vshll.u32 %v3175, %v3182
      %v3185 = vshrl.u32 %v3167, %v3183
      %v3186 = vor.u32 %v3184, %v3185
      %v3187 = vsub.s32 4294967266, %v3182
      %v3188 = vadd.s32 %v3187, 127
      %v3189 = vshll.u32 %v3188, 23
      %v3190 = vor.u32 4788187, %v3189
      %v3191 = vand.u32 2147483647, %v3190
      %v3193 = vcvt.s32.f32 %v3186
      %v3194 = vmul.f32 %v3193, %v3191
      %v3195 = vxor.u32 %v3194, 2147483648
      %v3196 = vsel %vm3075, %v3195, %v3194
      %v3197 = vsub.s32 4, %v3173
      %v3198 = vsel %vm3075, %v3197, %v3173
      %v3199 = vsel %vm3074, %v1193, %v3196
      %v3200 = vsel %vm3074, 0, %v3198
      %v3201 = vmul.f32 %v3199, %v3199
      %v3202 = vmul.f32 %v3201, -0.001358992
      %v3203 = vadd.f32 %v3202, 0.041655596
      %v3204 = vmul.f32 %v3201, %v3203
      %v3205 = vadd.f32 %v3204, -0.4999988
      %v3206 = vmul.f32 %v3201, %v3205
      %v3207 = vadd.f32 1.0, %v3206
      %v3208 = vmul.f32 %v3199, %v3199
      %v3209 = vmul.f32 %v3208, -0.00019511016
      %v3210 = vadd.f32 %v3209, 0.008332121
      %v3211 = vmul.f32 %v3208, %v3210
      %v3212 = vadd.f32 %v3211, -0.16666654
      %v3213 = vmul.f32 %v3208, %v3212
      %v3214 = vadd.f32 %v3213, 1.0
      %v3215 = vmul.f32 %v3214, %v3199
      %vm3216 = vweird.f32 %v1193
      %v3217 = vadd.s32 %v3200, 3
      %v3218 = vand.u32 %v3217, 3
      %vm3219 = vcmp.lt.s32.totalorder %v3218, 2
      %vm3220 = vcmp.eq.s32.totalorder %v3218, 0
      %v3221 = vxor.u32 %v3215, 2147483648
      %v3222 = vsel %vm3220, %v3207, %v3221
      %vm3223 = vcmp.eq.s32.totalorder %v3218, 2
      %v3224 = vxor.u32 %v3207, 2147483648
      %v3225 = vsel %vm3223, %v3224, %v3215
      %v3226 = vsel %vm3219, %v3222, %v3225
      %v3227 = vsel %vm3216, nan, %v3226
      %v3228 = vand.u32 2147483647, %v1194
      %vm3229 = vcmp.le.f32.partialorder %v3228, 0.7853982
      %vm3230 = vcmp.lt.s32.totalorder %v1194, 0
      %v3231 = vand.u32 %v1194, 2139095040
      %v3232 = vshrl.u32 %v3231, 23
      %v3233 = vsub.s32 %v3232, 127
      %v3234 = vand.u32 2147483647, %v1194
      %v3235 = vand.u32 %v3234, 8388607
      %v3236 = vor.u32 %v3235, 8388608
      %v3237 = vsub.s32 0, %v3236
      %v3238 = vadd.s32 %v3233, 1
      %vm3239 = vcmp.gt.s32.totalorder %v3238, 0
      %v3240 = vsel %vm3239, %v3238, 0
      %v3241 = vshrl.u32 %v3240, 5
      %v3242 = vand.u32 %v3240, 31
      %v3243 = vsub.s32 32, %v3242
      %v3244 = vshrl.u32 683565275, %v3243
      %v3245 = vshll.u32 683565275, %v3242
      %v3246 = vshrl.u32 2475754826, %v3243
      %v3247 = vor.u32 %v3245, %v3246
      %v3248 = vshll.u32 2475754826, %v3242
      %v3249 = vshrl.u32 2131351028, %v3243
      %v3250 = vor.u32 %v3248, %v3249
      %v3251 = vshll.u32 2131351028, %v3242
      %v3252 = vshrl.u32 2102212464, %v3243
      %v3253 = vor.u32 %v3251, %v3252
      %v3254 = vshll.u32 2102212464, %v3242
      %v3255 = vshrl.u32 920167782, %v3243
      %v3256 = vor.u32 %v3254, %v3255
      %v3257 = vshll.u32 920167782, %v3242
      %v3258 = vshrl.u32 1326507024, %v3243
      %v3259 = vor.u32 %v3257, %v3258
      %vm3260 = vcmp.lt.s32.totalorder %v3241, 1
      %vm3261 = vcmp.lt.s32.totalorder %v3241, 2
      %vm3262 = vcmp.lt.s32.totalorder %v3241, 3
      %vm3263 = vcmp.lt.s32.totalorder %v3241, 4
      %v3264 = vsel %vm3260, %v3244, %v3247
      %v3265 = vsel %vm3263, %v3253, 2102212464
      %v3266 = vsel %vm3262, %v3250, %v3265
      %v3267 = vsel %vm3261, %v3264, %v3266
      %v3268 = vsel %vm3260, %v3247, %v3250
      %v3269 = vsel %vm3263, %v3256, 920167782
      %v3270 = vsel %vm3262, %v3253, %v3269
      %v3271 = vsel %vm3261, %v3268, %v3270
      %v3272 = vsel %vm3260, %v3250, %v3253
      %v3273 = vsel %vm3263, %v3259, 1326507024
      %v3274 = vsel %vm3262, %v3256, %v3273
      %v3275 = vsel %vm3261, %v3272, %v3274
      %v3276 = vshll.u32 %v3236, 8
      %v3277 = vand.u32 %v3276, 65535
      %v3278 = vshrl.u32 %v3276, 16
      %v3279 = vand.u32 %v3275, 65535
      %v3280 = vshrl.u32 %v3275, 16
      %v3281 = vmul.u32 %v3277, %v3279
      %v3282 = vmul.u32 %v3277, %v3280
      %v3283 = vmul.u32 %v3278, %v3279
      %v3284 = vmul.u32 %v3278, %v3280
      %v3285 = vshll.u32 %v3282, 16
      %v3286 = vshrl.u32 %v3282, 16
      %v3287 = vshll.u32 %v3283, 16
      %v3288 = vshrl.u32 %v3283, 16
      %vm3289 = vc.u32 %v3281, %v3285
      %v3290 = vsel %vm3289, 1, 0
      %v3291 = vadd.s32 %v3281, %v3285
      %v3292 = vadd.s32 %v3284, %v3290
      %vm3293 = vc.u32 %v3291, %v3287
      %v3294 = vsel %vm3293, 1, 0
      %v3295 = vadd.s32 %v3291, %v3287
      %v3296 = vadd.s32 %v3292, %v3294
      %v3297 = vadd.s32 %v3296, %v3286
      %v3298 = vadd.s32 %v3297, %v3288
      %v3299 = vand.u32 %v3276, 65535
      %v3300 = vshrl.u32 %v3276, 16
      %v3301 = vand.u32 %v3271, 65535
      %v3302 = vshrl.u32 %v3271, 16
      %v3303 = vmul.u32 %v3299, %v3301
      %v3304 = vmul.u32 %v3299, %v3302
      %v3305 = vmul.u32 %v3300, %v3301
      %v3306 = vmul.u32 %v3300, %v3302
      %v3307 = vshll.u32 %v3304, 16
      %v3308 = vshrl.u32 %v3304, 16
      %v3309 = vshll.u32 %v3305, 16
      %v3310 = vshrl.u32 %v3305, 16
      %vm3311 = vc.u32 %v3303, %v3307
      %v3312 = vsel %vm3311, 1, 0
      %v3313 = vadd.s32 %v3303, %v3307
      %v3314 = vadd.s32 %v3306, %v3312
      %vm3315 = vc.u32 %v3313, %v3309
      %v3316 = vsel %vm3315, 1, 0
      %v3317 = vadd.s32 %v3313, %v3309
      %v3318 = vadd.s32 %v3314, %v3316
      %v3319 = vadd.s32 %v3318, %v3308
      %v3320 = vadd.s32 %v3319, %v3310
      %v3321 = vmul.u32 %v3276, %v3267
      %v3322 = vadd.s32 %v3298, %v3317
      %vm3323 = vc.u32 %v3298, %v3317
      %v3324 = vadd.s32 %v3320, 1
      %v3325 = vsel %vm3323, %v3324, %v3320
      %v3326 = vadd.s32 %v3321, %v3325
      %v3327 = vadd.s32 %v3326, 536870912
      %v3328 = vshrl.u32 %v3327, 30
      %v3329 = vshll.u32 %v3328, 30
      %v3330 = vsub.s32 %v3326, %v3329
      %vm3331 = vcmp.lt.s32.totalorder %v3330, 0
      %v3332 = vsub.s32 0, %v3330
      %v3333 = vsel %vm3331, %v3332, %v3330
      %v3334 = vclz %v3333
      %v3335 = vsub.s32 %v3334, 2
      %vm3336 = vcmp.gt.s32.totalorder 0, %v3335
      %v3337 = vsel %vm3336, 0, %v3335
      %v3338 = vsub.s32 32, %v3337
      %v3339 = vshll.u32 %v3330, %v3337
      %v3340 = vshrl.u32 %v3322, %v3338
      %v3341 = vor.u32 %v3339, %v3340
      %v3342 = vsub.s32 4294967266, %v3337
      %v3343 = vadd.s32 %v3342, 127
      %v3344 = vshll.u32 %v3343, 23
      %v3345 = vor.u32 4788187, %v3344
      %v3346 = vand.u32 2147483647, %v3345
      %v3348 = vcvt.s32.f32 %v3341
      %v3349 = vmul.f32 %v3348, %v3346
      %v3350 = vxor.u32 %v3349, 2147483648
      %v3351 = vsel %vm3230, %v3350, %v3349
      %v3352 = vsub.s32 4, %v3328
      %v3353 = vsel %vm3230, %v3352, %v3328
      %v3354 = vsel %vm3229, %v1194, %v3351
      %v3355 = vsel %vm3229, 0, %v3353
      %v3356 = vmul.f32 %v3354, %v3354
      %v3357 = vmul.f32 %v3356, -0.001358992
      %v3358 = vadd.f32 %v3357, 0.041655596
      %v3359 = vmul.f32 %v3356, %v3358
      %v3360 = vadd.f32 %v3359, -0.4999988
      %v3361 = vmul.f32 %v3356, %v3360
      %v3362 = vadd.f32 1.0, %v3361
      %v3363 = vmul.f32 %v3354, %v3354
      %v3364 = vmul.f32 %v3363, -0.00019511016
      %v3365 = vadd.f32 %v3364, 0.008332121
      %v3366 = vmul.f32 %v3363, %v3365
      %v3367 = vadd.f32 %v3366, -0.16666654
      %v3368 = vmul.f32 %v3363, %v3367
      %v3369 = vadd.f32 %v3368, 1.0
      %v3370 = vmul.f32 %v3369, %v3354
      %vm3371 = vweird.f32 %v1194
      %v3372 = vadd.s32 %v3355, 3
      %v3373 = vand.u32 %v3372, 3
      %vm3374 = vcmp.lt.s32.totalorder %v3373, 2
      %vm3375 = vcmp.eq.s32.totalorder %v3373, 0
      %v3376 = vxor.u32 %v3370, 2147483648
      %v3377 = vsel %vm3375, %v3362, %v3376
      %vm3378 = vcmp.eq.s32.totalorder %v3373, 2
      %v3379 = vxor.u32 %v3362, 2147483648
      %v3380 = vsel %vm3378, %v3379, %v3370
      %v3381 = vsel %vm3374, %v3377, %v3380
      %v3382 = vsel %vm3371, nan, %v3381
      %v3383 = vand.u32 2147483647, %v1195
      %vm3384 = vcmp.le.f32.partialorder %v3383, 0.7853982
      %vm3385 = vcmp.lt.s32.totalorder %v1195, 0
      %v3386 = vand.u32 %v1195, 2139095040
      %v3387 = vshrl.u32 %v3386, 23
      %v3388 = vsub.s32 %v3387, 127
      %v3389 = vand.u32 2147483647, %v1195
      %v3390 = vand.u32 %v3389, 8388607
      %v3391 = vor.u32 %v3390, 8388608
      %v3392 = vsub.s32 0, %v3391
      %v3393 = vadd.s32 %v3388, 1
      %vm3394 = vcmp.gt.s32.totalorder %v3393, 0
      %v3395 = vsel %vm3394, %v3393, 0
      %v3396 = vshrl.u32 %v3395, 5
      %v3397 = vand.u32 %v3395, 31
      %v3398 = vsub.s32 32, %v3397
      %v3399 = vshrl.u32 683565275, %v3398
      %v3400 = vshll.u32 683565275, %v3397
      %v3401 = vshrl.u32 2475754826, %v3398
      %v3402 = vor.u32 %v3400, %v3401
      %v3403 = vshll.u32 2475754826, %v3397
      %v3404 = vshrl.u32 2131351028, %v3398
      %v3405 = vor.u32 %v3403, %v3404
      %v3406 = vshll.u32 2131351028, %v3397
      %v3407 = vshrl.u32 2102212464, %v3398
      %v3408 = vor.u32 %v3406, %v3407
      %v3409 = vshll.u32 2102212464, %v3397
      %v3410 = vshrl.u32 920167782, %v3398
      %v3411 = vor.u32 %v3409, %v3410
      %v3412 = vshll.u32 920167782, %v3397
      %v3413 = vshrl.u32 1326507024, %v3398
      %v3414 = vor.u32 %v3412, %v3413
      %vm3415 = vcmp.lt.s32.totalorder %v3396, 1
      %vm3416 = vcmp.lt.s32.totalorder %v3396, 2
      %vm3417 = vcmp.lt.s32.totalorder %v3396, 3
      %vm3418 = vcmp.lt.s32.totalorder %v3396, 4
      %v3419 = vsel %vm3415, %v3399, %v3402
      %v3420 = vsel %vm3418, %v3408, 2102212464
      %v3421 = vsel %vm3417, %v3405, %v3420
      %v3422 = vsel %vm3416, %v3419, %v3421
      %v3423 = vsel %vm3415, %v3402, %v3405
      %v3424 = vsel %vm3418, %v3411, 920167782
      %v3425 = vsel %vm3417, %v3408, %v3424
      %v3426 = vsel %vm3416, %v3423, %v3425
      %v3427 = vsel %vm3415, %v3405, %v3408
      %v3428 = vsel %vm3418, %v3414, 1326507024
      %v3429 = vsel %vm3417, %v3411, %v3428
      %v3430 = vsel %vm3416, %v3427, %v3429
      %v3431 = vshll.u32 %v3391, 8
      %v3432 = vand.u32 %v3431, 65535
      %v3433 = vshrl.u32 %v3431, 16
      %v3434 = vand.u32 %v3430, 65535
      %v3435 = vshrl.u32 %v3430, 16
      %v3436 = vmul.u32 %v3432, %v3434
      %v3437 = vmul.u32 %v3432, %v3435
      %v3438 = vmul.u32 %v3433, %v3434
      %v3439 = vmul.u32 %v3433, %v3435
      %v3440 = vshll.u32 %v3437, 16
      %v3441 = vshrl.u32 %v3437, 16
      %v3442 = vshll.u32 %v3438, 16
      %v3443 = vshrl.u32 %v3438, 16
      %vm3444 = vc.u32 %v3436, %v3440
      %v3445 = vsel %vm3444, 1, 0
      %v3446 = vadd.s32 %v3436, %v3440
      %v3447 = vadd.s32 %v3439, %v3445
      %vm3448 = vc.u32 %v3446, %v3442
      %v3449 = vsel %vm3448, 1, 0
      %v3450 = vadd.s32 %v3446, %v3442
      %v3451 = vadd.s32 %v3447, %v3449
      %v3452 = vadd.s32 %v3451, %v3441
      %v3453 = vadd.s32 %v3452, %v3443
      %v3454 = vand.u32 %v3431, 65535
      %v3455 = vshrl.u32 %v3431, 16
      %v3456 = vand.u32 %v3426, 65535
      %v3457 = vshrl.u32 %v3426, 16
      %v3458 = vmul.u32 %v3454, %v3456
      %v3459 = vmul.u32 %v3454, %v3457
      %v3460 = vmul.u32 %v3455, %v3456
      %v3461 = vmul.u32 %v3455, %v3457
      %v3462 = vshll.u32 %v3459, 16
      %v3463 = vshrl.u32 %v3459, 16
      %v3464 = vshll.u32 %v3460, 16
      %v3465 = vshrl.u32 %v3460, 16
      %vm3466 = vc.u32 %v3458, %v3462
      %v3467 = vsel %vm3466, 1, 0
      %v3468 = vadd.s32 %v3458, %v3462
      %v3469 = vadd.s32 %v3461, %v3467
      %vm3470 = vc.u32 %v3468, %v3464
      %v3471 = vsel %vm3470, 1, 0
      %v3472 = vadd.s32 %v3468, %v3464
      %v3473 = vadd.s32 %v3469, %v3471
      %v3474 = vadd.s32 %v3473, %v3463
      %v3475 = vadd.s32 %v3474, %v3465
      %v3476 = vmul.u32 %v3431, %v3422
      %v3477 = vadd.s32 %v3453, %v3472
      %vm3478 = vc.u32 %v3453, %v3472
      %v3479 = vadd.s32 %v3475, 1
      %v3480 = vsel %vm3478, %v3479, %v3475
      %v3481 = vadd.s32 %v3476, %v3480
      %v3482 = vadd.s32 %v3481, 536870912
      %v3483 = vshrl.u32 %v3482, 30
      %v3484 = vshll.u32 %v3483, 30
      %v3485 = vsub.s32 %v3481, %v3484
      %vm3486 = vcmp.lt.s32.totalorder %v3485, 0
      %v3487 = vsub.s32 0, %v3485
      %v3488 = vsel %vm3486, %v3487, %v3485
      %v3489 = vclz %v3488
      %v3490 = vsub.s32 %v3489, 2
      %vm3491 = vcmp.gt.s32.totalorder 0, %v3490
      %v3492 = vsel %vm3491, 0, %v3490
      %v3493 = vsub.s32 32, %v3492
      %v3494 = vshll.u32 %v3485, %v3492
      %v3495 = vshrl.u32 %v3477, %v3493
      %v3496 = vor.u32 %v3494, %v3495
      %v3497 = vsub.s32 4294967266, %v3492
      %v3498 = vadd.s32 %v3497, 127
      %v3499 = vshll.u32 %v3498, 23
      %v3500 = vor.u32 4788187, %v3499
      %v3501 = vand.u32 2147483647, %v3500
      %v3503 = vcvt.s32.f32 %v3496
      %v3504 = vmul.f32 %v3503, %v3501
      %v3505 = vxor.u32 %v3504, 2147483648
      %v3506 = vsel %vm3385, %v3505, %v3504
      %v3507 = vsub.s32 4, %v3483
      %v3508 = vsel %vm3385, %v3507, %v3483
      %v3509 = vsel %vm3384, %v1195, %v3506
      %v3510 = vsel %vm3384, 0, %v3508
      %v3511 = vmul.f32 %v3509, %v3509
      %v3512 = vmul.f32 %v3511, -0.001358992
      %v3513 = vadd.f32 %v3512, 0.041655596
      %v3514 = vmul.f32 %v3511, %v3513
      %v3515 = vadd.f32 %v3514, -0.4999988
      %v3516 = vmul.f32 %v3511, %v3515
      %v3517 = vadd.f32 1.0, %v3516
      %v3518 = vmul.f32 %v3509, %v3509
      %v3519 = vmul.f32 %v3518, -0.00019511016
      %v3520 = vadd.f32 %v3519, 0.008332121
      %v3521 = vmul.f32 %v3518, %v3520
      %v3522 = vadd.f32 %v3521, -0.16666654
      %v3523 = vmul.f32 %v3518, %v3522
      %v3524 = vadd.f32 %v3523, 1.0
      %v3525 = vmul.f32 %v3524, %v3509
      %vm3526 = vweird.f32 %v1195
      %v3527 = vadd.s32 %v3510, 3
      %v3528 = vand.u32 %v3527, 3
      %vm3529 = vcmp.lt.s32.totalorder %v3528, 2
      %vm3530 = vcmp.eq.s32.totalorder %v3528, 0
      %v3531 = vxor.u32 %v3525, 2147483648
      %v3532 = vsel %vm3530, %v3517, %v3531
      %vm3533 = vcmp.eq.s32.totalorder %v3528, 2
      %v3534 = vxor.u32 %v3517, 2147483648
      %v3535 = vsel %vm3533, %v3534, %v3525
      %v3536 = vsel %vm3529, %v3532, %v3535
      %v3537 = vsel %vm3526, nan, %v3536
      %v3538 = vand.u32 2147483647, %v1196
      %vm3539 = vcmp.le.f32.partialorder %v3538, 0.7853982
      %vm3540 = vcmp.lt.s32.totalorder %v1196, 0
      %v3541 = vand.u32 %v1196, 2139095040
      %v3542 = vshrl.u32 %v3541, 23
      %v3543 = vsub.s32 %v3542, 127
      %v3544 = vand.u32 2147483647, %v1196
      %v3545 = vand.u32 %v3544, 8388607
      %v3546 = vor.u32 %v3545, 8388608
      %v3547 = vsub.s32 0, %v3546
      %v3548 = vadd.s32 %v3543, 1
      %vm3549 = vcmp.gt.s32.totalorder %v3548, 0
      %v3550 = vsel %vm3549, %v3548, 0
      %v3551 = vshrl.u32 %v3550, 5
      %v3552 = vand.u32 %v3550, 31
      %v3553 = vsub.s32 32, %v3552
      %v3554 = vshrl.u32 683565275, %v3553
      %v3555 = vshll.u32 683565275, %v3552
      %v3556 = vshrl.u32 2475754826, %v3553
      %v3557 = vor.u32 %v3555, %v3556
      %v3558 = vshll.u32 2475754826, %v3552
      %v3559 = vshrl.u32 2131351028, %v3553
      %v3560 = vor.u32 %v3558, %v3559
      %v3561 = vshll.u32 2131351028, %v3552
      %v3562 = vshrl.u32 2102212464, %v3553
      %v3563 = vor.u32 %v3561, %v3562
      %v3564 = vshll.u32 2102212464, %v3552
      %v3565 = vshrl.u32 920167782, %v3553
      %v3566 = vor.u32 %v3564, %v3565
      %v3567 = vshll.u32 920167782, %v3552
      %v3568 = vshrl.u32 1326507024, %v3553
      %v3569 = vor.u32 %v3567, %v3568
      %vm3570 = vcmp.lt.s32.totalorder %v3551, 1
      %vm3571 = vcmp.lt.s32.totalorder %v3551, 2
      %vm3572 = vcmp.lt.s32.totalorder %v3551, 3
      %vm3573 = vcmp.lt.s32.totalorder %v3551, 4
      %v3574 = vsel %vm3570, %v3554, %v3557
      %v3575 = vsel %vm3573, %v3563, 2102212464
      %v3576 = vsel %vm3572, %v3560, %v3575
      %v3577 = vsel %vm3571, %v3574, %v3576
      %v3578 = vsel %vm3570, %v3557, %v3560
      %v3579 = vsel %vm3573, %v3566, 920167782
      %v3580 = vsel %vm3572, %v3563, %v3579
      %v3581 = vsel %vm3571, %v3578, %v3580
      %v3582 = vsel %vm3570, %v3560, %v3563
      %v3583 = vsel %vm3573, %v3569, 1326507024
      %v3584 = vsel %vm3572, %v3566, %v3583
      %v3585 = vsel %vm3571, %v3582, %v3584
      %v3586 = vshll.u32 %v3546, 8
      %v3587 = vand.u32 %v3586, 65535
      %v3588 = vshrl.u32 %v3586, 16
      %v3589 = vand.u32 %v3585, 65535
      %v3590 = vshrl.u32 %v3585, 16
      %v3591 = vmul.u32 %v3587, %v3589
      %v3592 = vmul.u32 %v3587, %v3590
      %v3593 = vmul.u32 %v3588, %v3589
      %v3594 = vmul.u32 %v3588, %v3590
      %v3595 = vshll.u32 %v3592, 16
      %v3596 = vshrl.u32 %v3592, 16
      %v3597 = vshll.u32 %v3593, 16
      %v3598 = vshrl.u32 %v3593, 16
      %vm3599 = vc.u32 %v3591, %v3595
      %v3600 = vsel %vm3599, 1, 0
      %v3601 = vadd.s32 %v3591, %v3595
      %v3602 = vadd.s32 %v3594, %v3600
      %vm3603 = vc.u32 %v3601, %v3597
      %v3604 = vsel %vm3603, 1, 0
      %v3605 = vadd.s32 %v3601, %v3597
      %v3606 = vadd.s32 %v3602, %v3604
      %v3607 = vadd.s32 %v3606, %v3596
      %v3608 = vadd.s32 %v3607, %v3598
      %v3609 = vand.u32 %v3586, 65535
      %v3610 = vshrl.u32 %v3586, 16
      %v3611 = vand.u32 %v3581, 65535
      %v3612 = vshrl.u32 %v3581, 16
      %v3613 = vmul.u32 %v3609, %v3611
      %v3614 = vmul.u32 %v3609, %v3612
      %v3615 = vmul.u32 %v3610, %v3611
      %v3616 = vmul.u32 %v3610, %v3612
      %v3617 = vshll.u32 %v3614, 16
      %v3618 = vshrl.u32 %v3614, 16
      %v3619 = vshll.u32 %v3615, 16
      %v3620 = vshrl.u32 %v3615, 16
      %vm3621 = vc.u32 %v3613, %v3617
      %v3622 = vsel %vm3621, 1, 0
      %v3623 = vadd.s32 %v3613, %v3617
      %v3624 = vadd.s32 %v3616, %v3622
      %vm3625 = vc.u32 %v3623, %v3619
      %v3626 = vsel %vm3625, 1, 0
      %v3627 = vadd.s32 %v3623, %v3619
      %v3628 = vadd.s32 %v3624, %v3626
      %v3629 = vadd.s32 %v3628, %v3618
      %v3630 = vadd.s32 %v3629, %v3620
      %v3631 = vmul.u32 %v3586, %v3577
      %v3632 = vadd.s32 %v3608, %v3627
      %vm3633 = vc.u32 %v3608, %v3627
      %v3634 = vadd.s32 %v3630, 1
      %v3635 = vsel %vm3633, %v3634, %v3630
      %v3636 = vadd.s32 %v3631, %v3635
      %v3637 = vadd.s32 %v3636, 536870912
      %v3638 = vshrl.u32 %v3637, 30
      %v3639 = vshll.u32 %v3638, 30
      %v3640 = vsub.s32 %v3636, %v3639
      %vm3641 = vcmp.lt.s32.totalorder %v3640, 0
      %v3642 = vsub.s32 0, %v3640
      %v3643 = vsel %vm3641, %v3642, %v3640
      %v3644 = vclz %v3643
      %v3645 = vsub.s32 %v3644, 2
      %vm3646 = vcmp.gt.s32.totalorder 0, %v3645
      %v3647 = vsel %vm3646, 0, %v3645
      %v3648 = vsub.s32 32, %v3647
      %v3649 = vshll.u32 %v3640, %v3647
      %v3650 = vshrl.u32 %v3632, %v3648
      %v3651 = vor.u32 %v3649, %v3650
      %v3652 = vsub.s32 4294967266, %v3647
      %v3653 = vadd.s32 %v3652, 127
      %v3654 = vshll.u32 %v3653, 23
      %v3655 = vor.u32 4788187, %v3654
      %v3656 = vand.u32 2147483647, %v3655
      %v3658 = vcvt.s32.f32 %v3651
      %v3659 = vmul.f32 %v3658, %v3656
      %v3660 = vxor.u32 %v3659, 2147483648
      %v3661 = vsel %vm3540, %v3660, %v3659
      %v3662 = vsub.s32 4, %v3638
      %v3663 = vsel %vm3540, %v3662, %v3638
      %v3664 = vsel %vm3539, %v1196, %v3661
      %v3665 = vsel %vm3539, 0, %v3663
      %v3666 = vmul.f32 %v3664, %v3664
      %v3667 = vmul.f32 %v3666, -0.001358992
      %v3668 = vadd.f32 %v3667, 0.041655596
      %v3669 = vmul.f32 %v3666, %v3668
      %v3670 = vadd.f32 %v3669, -0.4999988
      %v3671 = vmul.f32 %v3666, %v3670
      %v3672 = vadd.f32 1.0, %v3671
      %v3673 = vmul.f32 %v3664, %v3664
      %v3674 = vmul.f32 %v3673, -0.00019511016
      %v3675 = vadd.f32 %v3674, 0.008332121
      %v3676 = vmul.f32 %v3673, %v3675
      %v3677 = vadd.f32 %v3676, -0.16666654
      %v3678 = vmul.f32 %v3673, %v3677
      %v3679 = vadd.f32 %v3678, 1.0
      %v3680 = vmul.f32 %v3679, %v3664
      %vm3681 = vweird.f32 %v1196
      %v3682 = vadd.s32 %v3665, 3
      %v3683 = vand.u32 %v3682, 3
      %vm3684 = vcmp.lt.s32.totalorder %v3683, 2
      %vm3685 = vcmp.eq.s32.totalorder %v3683, 0
      %v3686 = vxor.u32 %v3680, 2147483648
      %v3687 = vsel %vm3685, %v3672, %v3686
      %vm3688 = vcmp.eq.s32.totalorder %v3683, 2
      %v3689 = vxor.u32 %v3672, 2147483648
      %v3690 = vsel %vm3688, %v3689, %v3680
      %v3691 = vsel %vm3684, %v3687, %v3690
      %v3692 = vsel %vm3681, nan, %v3691
      %v3693 = vand.u32 2147483647, %v1197
      %vm3694 = vcmp.le.f32.partialorder %v3693, 0.7853982
      %vm3695 = vcmp.lt.s32.totalorder %v1197, 0
      %v3696 = vand.u32 %v1197, 2139095040
      %v3697 = vshrl.u32 %v3696, 23
      %v3698 = vsub.s32 %v3697, 127
      %v3699 = vand.u32 2147483647, %v1197
      %v3700 = vand.u32 %v3699, 8388607
      %v3701 = vor.u32 %v3700, 8388608
      %v3702 = vsub.s32 0, %v3701
      %v3703 = vadd.s32 %v3698, 1
      %vm3704 = vcmp.gt.s32.totalorder %v3703, 0
      %v3705 = vsel %vm3704, %v3703, 0
      %v3706 = vshrl.u32 %v3705, 5
      %v3707 = vand.u32 %v3705, 31
      %v3708 = vsub.s32 32, %v3707
      %v3709 = vshrl.u32 683565275, %v3708
      %v3710 = vshll.u32 683565275, %v3707
      %v3711 = vshrl.u32 2475754826, %v3708
      %v3712 = vor.u32 %v3710, %v3711
      %v3713 = vshll.u32 2475754826, %v3707
      %v3714 = vshrl.u32 2131351028, %v3708
      %v3715 = vor.u32 %v3713, %v3714
      %v3716 = vshll.u32 2131351028, %v3707
      %v3717 = vshrl.u32 2102212464, %v3708
      %v3718 = vor.u32 %v3716, %v3717
      %v3719 = vshll.u32 2102212464, %v3707
      %v3720 = vshrl.u32 920167782, %v3708
      %v3721 = vor.u32 %v3719, %v3720
      %v3722 = vshll.u32 920167782, %v3707
      %v3723 = vshrl.u32 1326507024, %v3708
      %v3724 = vor.u32 %v3722, %v3723
      %vm3725 = vcmp.lt.s32.totalorder %v3706, 1
      %vm3726 = vcmp.lt.s32.totalorder %v3706, 2
      %vm3727 = vcmp.lt.s32.totalorder %v3706, 3
      %vm3728 = vcmp.lt.s32.totalorder %v3706, 4
      %v3729 = vsel %vm3725, %v3709, %v3712
      %v3730 = vsel %vm3728, %v3718, 2102212464
      %v3731 = vsel %vm3727, %v3715, %v3730
      %v3732 = vsel %vm3726, %v3729, %v3731
      %v3733 = vsel %vm3725, %v3712, %v3715
      %v3734 = vsel %vm3728, %v3721, 920167782
      %v3735 = vsel %vm3727, %v3718, %v3734
      %v3736 = vsel %vm3726, %v3733, %v3735
      %v3737 = vsel %vm3725, %v3715, %v3718
      %v3738 = vsel %vm3728, %v3724, 1326507024
      %v3739 = vsel %vm3727, %v3721, %v3738
      %v3740 = vsel %vm3726, %v3737, %v3739
      %v3741 = vshll.u32 %v3701, 8
      %v3742 = vand.u32 %v3741, 65535
      %v3743 = vshrl.u32 %v3741, 16
      %v3744 = vand.u32 %v3740, 65535
      %v3745 = vshrl.u32 %v3740, 16
      %v3746 = vmul.u32 %v3742, %v3744
      %v3747 = vmul.u32 %v3742, %v3745
      %v3748 = vmul.u32 %v3743, %v3744
      %v3749 = vmul.u32 %v3743, %v3745
      %v3750 = vshll.u32 %v3747, 16
      %v3751 = vshrl.u32 %v3747, 16
      %v3752 = vshll.u32 %v3748, 16
      %v3753 = vshrl.u32 %v3748, 16
      %vm3754 = vc.u32 %v3746, %v3750
      %v3755 = vsel %vm3754, 1, 0
      %v3756 = vadd.s32 %v3746, %v3750
      %v3757 = vadd.s32 %v3749, %v3755
      %vm3758 = vc.u32 %v3756, %v3752
      %v3759 = vsel %vm3758, 1, 0
      %v3760 = vadd.s32 %v3756, %v3752
      %v3761 = vadd.s32 %v3757, %v3759
      %v3762 = vadd.s32 %v3761, %v3751
      %v3763 = vadd.s32 %v3762, %v3753
      %v3764 = vand.u32 %v3741, 65535
      %v3765 = vshrl.u32 %v3741, 16
      %v3766 = vand.u32 %v3736, 65535
      %v3767 = vshrl.u32 %v3736, 16
      %v3768 = vmul.u32 %v3764, %v3766
      %v3769 = vmul.u32 %v3764, %v3767
      %v3770 = vmul.u32 %v3765, %v3766
      %v3771 = vmul.u32 %v3765, %v3767
      %v3772 = vshll.u32 %v3769, 16
      %v3773 = vshrl.u32 %v3769, 16
      %v3774 = vshll.u32 %v3770, 16
      %v3775 = vshrl.u32 %v3770, 16
      %vm3776 = vc.u32 %v3768, %v3772
      %v3777 = vsel %vm3776, 1, 0
      %v3778 = vadd.s32 %v3768, %v3772
      %v3779 = vadd.s32 %v3771, %v3777
      %vm3780 = vc.u32 %v3778, %v3774
      %v3781 = vsel %vm3780, 1, 0
      %v3782 = vadd.s32 %v3778, %v3774
      %v3783 = vadd.s32 %v3779, %v3781
      %v3784 = vadd.s32 %v3783, %v3773
      %v3785 = vadd.s32 %v3784, %v3775
      %v3786 = vmul.u32 %v3741, %v3732
      %v3787 = vadd.s32 %v3763, %v3782
      %vm3788 = vc.u32 %v3763, %v3782
      %v3789 = vadd.s32 %v3785, 1
      %v3790 = vsel %vm3788, %v3789, %v3785
      %v3791 = vadd.s32 %v3786, %v3790
      %v3792 = vadd.s32 %v3791, 536870912
      %v3793 = vshrl.u32 %v3792, 30
      %v3794 = vshll.u32 %v3793, 30
      %v3795 = vsub.s32 %v3791, %v3794
      %vm3796 = vcmp.lt.s32.totalorder %v3795, 0
      %v3797 = vsub.s32 0, %v3795
      %v3798 = vsel %vm3796, %v3797, %v3795
      %v3799 = vclz %v3798
      %v3800 = vsub.s32 %v3799, 2
      %vm3801 = vcmp.gt.s32.totalorder 0, %v3800
      %v3802 = vsel %vm3801, 0, %v3800
      %v3803 = vsub.s32 32, %v3802
      %v3804 = vshll.u32 %v3795, %v3802
      %v3805 = vshrl.u32 %v3787, %v3803
      %v3806 = vor.u32 %v3804, %v3805
      %v3807 = vsub.s32 4294967266, %v3802
      %v3808 = vadd.s32 %v3807, 127
      %v3809 = vshll.u32 %v3808, 23
      %v3810 = vor.u32 4788187, %v3809
      %v3811 = vand.u32 2147483647, %v3810
      %v3813 = vcvt.s32.f32 %v3806
      %v3814 = vmul.f32 %v3813, %v3811
      %v3815 = vxor.u32 %v3814, 2147483648
      %v3816 = vsel %vm3695, %v3815, %v3814
      %v3817 = vsub.s32 4, %v3793
      %v3818 = vsel %vm3695, %v3817, %v3793
      %v3819 = vsel %vm3694, %v1197, %v3816
      %v3820 = vsel %vm3694, 0, %v3818
      %v3821 = vmul.f32 %v3819, %v3819
      %v3822 = vmul.f32 %v3821, -0.001358992
      %v3823 = vadd.f32 %v3822, 0.041655596
      %v3824 = vmul.f32 %v3821, %v3823
      %v3825 = vadd.f32 %v3824, -0.4999988
      %v3826 = vmul.f32 %v3821, %v3825
      %v3827 = vadd.f32 1.0, %v3826
      %v3828 = vmul.f32 %v3819, %v3819
      %v3829 = vmul.f32 %v3828, -0.00019511016
      %v3830 = vadd.f32 %v3829, 0.008332121
      %v3831 = vmul.f32 %v3828, %v3830
      %v3832 = vadd.f32 %v3831, -0.16666654
      %v3833 = vmul.f32 %v3828, %v3832
      %v3834 = vadd.f32 %v3833, 1.0
      %v3835 = vmul.f32 %v3834, %v3819
      %vm3836 = vweird.f32 %v1197
      %v3837 = vadd.s32 %v3820, 3
      %v3838 = vand.u32 %v3837, 3
      %vm3839 = vcmp.lt.s32.totalorder %v3838, 2
      %vm3840 = vcmp.eq.s32.totalorder %v3838, 0
      %v3841 = vxor.u32 %v3835, 2147483648
      %v3842 = vsel %vm3840, %v3827, %v3841
      %vm3843 = vcmp.eq.s32.totalorder %v3838, 2
      %v3844 = vxor.u32 %v3827, 2147483648
      %v3845 = vsel %vm3843, %v3844, %v3835
      %v3846 = vsel %vm3839, %v3842, %v3845
      %v3847 = vsel %vm3836, nan, %v3846
      %v3848 = vand.u32 2147483647, %v1198
      %vm3849 = vcmp.le.f32.partialorder %v3848, 0.7853982
      %vm3850 = vcmp.lt.s32.totalorder %v1198, 0
      %v3851 = vand.u32 %v1198, 2139095040
      %v3852 = vshrl.u32 %v3851, 23
      %v3853 = vsub.s32 %v3852, 127
      %v3854 = vand.u32 2147483647, %v1198
      %v3855 = vand.u32 %v3854, 8388607
      %v3856 = vor.u32 %v3855, 8388608
      %v3857 = vsub.s32 0, %v3856
      %v3858 = vadd.s32 %v3853, 1
      %vm3859 = vcmp.gt.s32.totalorder %v3858, 0
      %v3860 = vsel %vm3859, %v3858, 0
      %v3861 = vshrl.u32 %v3860, 5
      %v3862 = vand.u32 %v3860, 31
      %v3863 = vsub.s32 32, %v3862
      %v3864 = vshrl.u32 683565275, %v3863
      %v3865 = vshll.u32 683565275, %v3862
      %v3866 = vshrl.u32 2475754826, %v3863
      %v3867 = vor.u32 %v3865, %v3866
      %v3868 = vshll.u32 2475754826, %v3862
      %v3869 = vshrl.u32 2131351028, %v3863
      %v3870 = vor.u32 %v3868, %v3869
      %v3871 = vshll.u32 2131351028, %v3862
      %v3872 = vshrl.u32 2102212464, %v3863
      %v3873 = vor.u32 %v3871, %v3872
      %v3874 = vshll.u32 2102212464, %v3862
      %v3875 = vshrl.u32 920167782, %v3863
      %v3876 = vor.u32 %v3874, %v3875
      %v3877 = vshll.u32 920167782, %v3862
      %v3878 = vshrl.u32 1326507024, %v3863
      %v3879 = vor.u32 %v3877, %v3878
      %vm3880 = vcmp.lt.s32.totalorder %v3861, 1
      %vm3881 = vcmp.lt.s32.totalorder %v3861, 2
      %vm3882 = vcmp.lt.s32.totalorder %v3861, 3
      %vm3883 = vcmp.lt.s32.totalorder %v3861, 4
      %v3884 = vsel %vm3880, %v3864, %v3867
      %v3885 = vsel %vm3883, %v3873, 2102212464
      %v3886 = vsel %vm3882, %v3870, %v3885
      %v3887 = vsel %vm3881, %v3884, %v3886
      %v3888 = vsel %vm3880, %v3867, %v3870
      %v3889 = vsel %vm3883, %v3876, 920167782
      %v3890 = vsel %vm3882, %v3873, %v3889
      %v3891 = vsel %vm3881, %v3888, %v3890
      %v3892 = vsel %vm3880, %v3870, %v3873
      %v3893 = vsel %vm3883, %v3879, 1326507024
      %v3894 = vsel %vm3882, %v3876, %v3893
      %v3895 = vsel %vm3881, %v3892, %v3894
      %v3896 = vshll.u32 %v3856, 8
      %v3897 = vand.u32 %v3896, 65535
      %v3898 = vshrl.u32 %v3896, 16
      %v3899 = vand.u32 %v3895, 65535
      %v3900 = vshrl.u32 %v3895, 16
      %v3901 = vmul.u32 %v3897, %v3899
      %v3902 = vmul.u32 %v3897, %v3900
      %v3903 = vmul.u32 %v3898, %v3899
      %v3904 = vmul.u32 %v3898, %v3900
      %v3905 = vshll.u32 %v3902, 16
      %v3906 = vshrl.u32 %v3902, 16
      %v3907 = vshll.u32 %v3903, 16
      %v3908 = vshrl.u32 %v3903, 16
      %vm3909 = vc.u32 %v3901, %v3905
      %v3910 = vsel %vm3909, 1, 0
      %v3911 = vadd.s32 %v3901, %v3905
      %v3912 = vadd.s32 %v3904, %v3910
      %vm3913 = vc.u32 %v3911, %v3907
      %v3914 = vsel %vm3913, 1, 0
      %v3915 = vadd.s32 %v3911, %v3907
      %v3916 = vadd.s32 %v3912, %v3914
      %v3917 = vadd.s32 %v3916, %v3906
      %v3918 = vadd.s32 %v3917, %v3908
      %v3919 = vand.u32 %v3896, 65535
      %v3920 = vshrl.u32 %v3896, 16
      %v3921 = vand.u32 %v3891, 65535
      %v3922 = vshrl.u32 %v3891, 16
      %v3923 = vmul.u32 %v3919, %v3921
      %v3924 = vmul.u32 %v3919, %v3922
      %v3925 = vmul.u32 %v3920, %v3921
      %v3926 = vmul.u32 %v3920, %v3922
      %v3927 = vshll.u32 %v3924, 16
      %v3928 = vshrl.u32 %v3924, 16
      %v3929 = vshll.u32 %v3925, 16
      %v3930 = vshrl.u32 %v3925, 16
      %vm3931 = vc.u32 %v3923, %v3927
      %v3932 = vsel %vm3931, 1, 0
      %v3933 = vadd.s32 %v3923, %v3927
      %v3934 = vadd.s32 %v3926, %v3932
      %vm3935 = vc.u32 %v3933, %v3929
      %v3936 = vsel %vm3935, 1, 0
      %v3937 = vadd.s32 %v3933, %v3929
      %v3938 = vadd.s32 %v3934, %v3936
      %v3939 = vadd.s32 %v3938, %v3928
      %v3940 = vadd.s32 %v3939, %v3930
      %v3941 = vmul.u32 %v3896, %v3887
      %v3942 = vadd.s32 %v3918, %v3937
      %vm3943 = vc.u32 %v3918, %v3937
      %v3944 = vadd.s32 %v3940, 1
      %v3945 = vsel %vm3943, %v3944, %v3940
      %v3946 = vadd.s32 %v3941, %v3945
      %v3947 = vadd.s32 %v3946, 536870912
      %v3948 = vshrl.u32 %v3947, 30
      %v3949 = vshll.u32 %v3948, 30
      %v3950 = vsub.s32 %v3946, %v3949
      %vm3951 = vcmp.lt.s32.totalorder %v3950, 0
      %v3952 = vsub.s32 0, %v3950
      %v3953 = vsel %vm3951, %v3952, %v3950
      %v3954 = vclz %v3953
      %v3955 = vsub.s32 %v3954, 2
      %vm3956 = vcmp.gt.s32.totalorder 0, %v3955
      %v3957 = vsel %vm3956, 0, %v3955
      %v3958 = vsub.s32 32, %v3957
      %v3959 = vshll.u32 %v3950, %v3957
      %v3960 = vshrl.u32 %v3942, %v3958
      %v3961 = vor.u32 %v3959, %v3960
      %v3962 = vsub.s32 4294967266, %v3957
      %v3963 = vadd.s32 %v3962, 127
      %v3964 = vshll.u32 %v3963, 23
      %v3965 = vor.u32 4788187, %v3964
      %v3966 = vand.u32 2147483647, %v3965
      %v3968 = vcvt.s32.f32 %v3961
      %v3969 = vmul.f32 %v3968, %v3966
      %v3970 = vxor.u32 %v3969, 2147483648
      %v3971 = vsel %vm3850, %v3970, %v3969
      %v3972 = vsub.s32 4, %v3948
      %v3973 = vsel %vm3850, %v3972, %v3948
      %v3974 = vsel %vm3849, %v1198, %v3971
      %v3975 = vsel %vm3849, 0, %v3973
      %v3976 = vmul.f32 %v3974, %v3974
      %v3977 = vmul.f32 %v3976, -0.001358992
      %v3978 = vadd.f32 %v3977, 0.041655596
      %v3979 = vmul.f32 %v3976, %v3978
      %v3980 = vadd.f32 %v3979, -0.4999988
      %v3981 = vmul.f32 %v3976, %v3980
      %v3982 = vadd.f32 1.0, %v3981
      %v3983 = vmul.f32 %v3974, %v3974
      %v3984 = vmul.f32 %v3983, -0.00019511016
      %v3985 = vadd.f32 %v3984, 0.008332121
      %v3986 = vmul.f32 %v3983, %v3985
      %v3987 = vadd.f32 %v3986, -0.16666654
      %v3988 = vmul.f32 %v3983, %v3987
      %v3989 = vadd.f32 %v3988, 1.0
      %v3990 = vmul.f32 %v3989, %v3974
      %vm3991 = vweird.f32 %v1198
      %v3992 = vadd.s32 %v3975, 3
      %v3993 = vand.u32 %v3992, 3
      %vm3994 = vcmp.lt.s32.totalorder %v3993, 2
      %vm3995 = vcmp.eq.s32.totalorder %v3993, 0
      %v3996 = vxor.u32 %v3990, 2147483648
      %v3997 = vsel %vm3995, %v3982, %v3996
      %vm3998 = vcmp.eq.s32.totalorder %v3993, 2
      %v3999 = vxor.u32 %v3982, 2147483648
      %v4000 = vsel %vm3998, %v3999, %v3990
      %v4001 = vsel %vm3994, %v3997, %v4000
      %v4002 = vsel %vm3991, nan, %v4001
      %v4003 = vand.u32 2147483647, %v1199
      %vm4004 = vcmp.le.f32.partialorder %v4003, 0.7853982
      %vm4005 = vcmp.lt.s32.totalorder %v1199, 0
      %v4006 = vand.u32 %v1199, 2139095040
      %v4007 = vshrl.u32 %v4006, 23
      %v4008 = vsub.s32 %v4007, 127
      %v4009 = vand.u32 2147483647, %v1199
      %v4010 = vand.u32 %v4009, 8388607
      %v4011 = vor.u32 %v4010, 8388608
      %v4012 = vsub.s32 0, %v4011
      %v4013 = vadd.s32 %v4008, 1
      %vm4014 = vcmp.gt.s32.totalorder %v4013, 0
      %v4015 = vsel %vm4014, %v4013, 0
      %v4016 = vshrl.u32 %v4015, 5
      %v4017 = vand.u32 %v4015, 31
      %v4018 = vsub.s32 32, %v4017
      %v4019 = vshrl.u32 683565275, %v4018
      %v4020 = vshll.u32 683565275, %v4017
      %v4021 = vshrl.u32 2475754826, %v4018
      %v4022 = vor.u32 %v4020, %v4021
      %v4023 = vshll.u32 2475754826, %v4017
      %v4024 = vshrl.u32 2131351028, %v4018
      %v4025 = vor.u32 %v4023, %v4024
      %v4026 = vshll.u32 2131351028, %v4017
      %v4027 = vshrl.u32 2102212464, %v4018
      %v4028 = vor.u32 %v4026, %v4027
      %v4029 = vshll.u32 2102212464, %v4017
      %v4030 = vshrl.u32 920167782, %v4018
      %v4031 = vor.u32 %v4029, %v4030
      %v4032 = vshll.u32 920167782, %v4017
      %v4033 = vshrl.u32 1326507024, %v4018
      %v4034 = vor.u32 %v4032, %v4033
      %vm4035 = vcmp.lt.s32.totalorder %v4016, 1
      %vm4036 = vcmp.lt.s32.totalorder %v4016, 2
      %vm4037 = vcmp.lt.s32.totalorder %v4016, 3
      %vm4038 = vcmp.lt.s32.totalorder %v4016, 4
      %v4039 = vsel %vm4035, %v4019, %v4022
      %v4040 = vsel %vm4038, %v4028, 2102212464
      %v4041 = vsel %vm4037, %v4025, %v4040
      %v4042 = vsel %vm4036, %v4039, %v4041
      %v4043 = vsel %vm4035, %v4022, %v4025
      %v4044 = vsel %vm4038, %v4031, 920167782
      %v4045 = vsel %vm4037, %v4028, %v4044
      %v4046 = vsel %vm4036, %v4043, %v4045
      %v4047 = vsel %vm4035, %v4025, %v4028
      %v4048 = vsel %vm4038, %v4034, 1326507024
      %v4049 = vsel %vm4037, %v4031, %v4048
      %v4050 = vsel %vm4036, %v4047, %v4049
      %v4051 = vshll.u32 %v4011, 8
      %v4052 = vand.u32 %v4051, 65535
      %v4053 = vshrl.u32 %v4051, 16
      %v4054 = vand.u32 %v4050, 65535
      %v4055 = vshrl.u32 %v4050, 16
      %v4056 = vmul.u32 %v4052, %v4054
      %v4057 = vmul.u32 %v4052, %v4055
      %v4058 = vmul.u32 %v4053, %v4054
      %v4059 = vmul.u32 %v4053, %v4055
      %v4060 = vshll.u32 %v4057, 16
      %v4061 = vshrl.u32 %v4057, 16
      %v4062 = vshll.u32 %v4058, 16
      %v4063 = vshrl.u32 %v4058, 16
      %vm4064 = vc.u32 %v4056, %v4060
      %v4065 = vsel %vm4064, 1, 0
      %v4066 = vadd.s32 %v4056, %v4060
      %v4067 = vadd.s32 %v4059, %v4065
      %vm4068 = vc.u32 %v4066, %v4062
      %v4069 = vsel %vm4068, 1, 0
      %v4070 = vadd.s32 %v4066, %v4062
      %v4071 = vadd.s32 %v4067, %v4069
      %v4072 = vadd.s32 %v4071, %v4061
      %v4073 = vadd.s32 %v4072, %v4063
      %v4074 = vand.u32 %v4051, 65535
      %v4075 = vshrl.u32 %v4051, 16
      %v4076 = vand.u32 %v4046, 65535
      %v4077 = vshrl.u32 %v4046, 16
      %v4078 = vmul.u32 %v4074, %v4076
      %v4079 = vmul.u32 %v4074, %v4077
      %v4080 = vmul.u32 %v4075, %v4076
      %v4081 = vmul.u32 %v4075, %v4077
      %v4082 = vshll.u32 %v4079, 16
      %v4083 = vshrl.u32 %v4079, 16
      %v4084 = vshll.u32 %v4080, 16
      %v4085 = vshrl.u32 %v4080, 16
      %vm4086 = vc.u32 %v4078, %v4082
      %v4087 = vsel %vm4086, 1, 0
      %v4088 = vadd.s32 %v4078, %v4082
      %v4089 = vadd.s32 %v4081, %v4087
      %vm4090 = vc.u32 %v4088, %v4084
      %v4091 = vsel %vm4090, 1, 0
      %v4092 = vadd.s32 %v4088, %v4084
      %v4093 = vadd.s32 %v4089, %v4091
      %v4094 = vadd.s32 %v4093, %v4083
      %v4095 = vadd.s32 %v4094, %v4085
      %v4096 = vmul.u32 %v4051, %v4042
      %v4097 = vadd.s32 %v4073, %v4092
      %vm4098 = vc.u32 %v4073, %v4092
      %v4099 = vadd.s32 %v4095, 1
      %v4100 = vsel %vm4098, %v4099, %v4095
      %v4101 = vadd.s32 %v4096, %v4100
      %v4102 = vadd.s32 %v4101, 536870912
      %v4103 = vshrl.u32 %v4102, 30
      %v4104 = vshll.u32 %v4103, 30
      %v4105 = vsub.s32 %v4101, %v4104
      %vm4106 = vcmp.lt.s32.totalorder %v4105, 0
      %v4107 = vsub.s32 0, %v4105
      %v4108 = vsel %vm4106, %v4107, %v4105
      %v4109 = vclz %v4108
      %v4110 = vsub.s32 %v4109, 2
      %vm4111 = vcmp.gt.s32.totalorder 0, %v4110
      %v4112 = vsel %vm4111, 0, %v4110
      %v4113 = vsub.s32 32, %v4112
      %v4114 = vshll.u32 %v4105, %v4112
      %v4115 = vshrl.u32 %v4097, %v4113
      %v4116 = vor.u32 %v4114, %v4115
      %v4117 = vsub.s32 4294967266, %v4112
      %v4118 = vadd.s32 %v4117, 127
      %v4119 = vshll.u32 %v4118, 23
      %v4120 = vor.u32 4788187, %v4119
      %v4121 = vand.u32 2147483647, %v4120
      %v4123 = vcvt.s32.f32 %v4116
      %v4124 = vmul.f32 %v4123, %v4121
      %v4125 = vxor.u32 %v4124, 2147483648
      %v4126 = vsel %vm4005, %v4125, %v4124
      %v4127 = vsub.s32 4, %v4103
      %v4128 = vsel %vm4005, %v4127, %v4103
      %v4129 = vsel %vm4004, %v1199, %v4126
      %v4130 = vsel %vm4004, 0, %v4128
      %v4131 = vmul.f32 %v4129, %v4129
      %v4132 = vmul.f32 %v4131, -0.001358992
      %v4133 = vadd.f32 %v4132, 0.041655596
      %v4134 = vmul.f32 %v4131, %v4133
      %v4135 = vadd.f32 %v4134, -0.4999988
      %v4136 = vmul.f32 %v4131, %v4135
      %v4137 = vadd.f32 1.0, %v4136
      %v4138 = vmul.f32 %v4129, %v4129
      %v4139 = vmul.f32 %v4138, -0.00019511016
      %v4140 = vadd.f32 %v4139, 0.008332121
      %v4141 = vmul.f32 %v4138, %v4140
      %v4142 = vadd.f32 %v4141, -0.16666654
      %v4143 = vmul.f32 %v4138, %v4142
      %v4144 = vadd.f32 %v4143, 1.0
      %v4145 = vmul.f32 %v4144, %v4129
      %vm4146 = vweird.f32 %v1199
      %v4147 = vadd.s32 %v4130, 3
      %v4148 = vand.u32 %v4147, 3
      %vm4149 = vcmp.lt.s32.totalorder %v4148, 2
      %vm4150 = vcmp.eq.s32.totalorder %v4148, 0
      %v4151 = vxor.u32 %v4145, 2147483648
      %v4152 = vsel %vm4150, %v4137, %v4151
      %vm4153 = vcmp.eq.s32.totalorder %v4148, 2
      %v4154 = vxor.u32 %v4137, 2147483648
      %v4155 = vsel %vm4153, %v4154, %v4145
      %v4156 = vsel %vm4149, %v4152, %v4155
      %v4157 = vsel %vm4146, nan, %v4156
      %v4158 = vand.u32 2147483647, %v1200
      %vm4159 = vcmp.le.f32.partialorder %v4158, 0.7853982
      %vm4160 = vcmp.lt.s32.totalorder %v1200, 0
      %v4161 = vand.u32 %v1200, 2139095040
      %v4162 = vshrl.u32 %v4161, 23
      %v4163 = vsub.s32 %v4162, 127
      %v4164 = vand.u32 2147483647, %v1200
      %v4165 = vand.u32 %v4164, 8388607
      %v4166 = vor.u32 %v4165, 8388608
      %v4167 = vsub.s32 0, %v4166
      %v4168 = vadd.s32 %v4163, 1
      %vm4169 = vcmp.gt.s32.totalorder %v4168, 0
      %v4170 = vsel %vm4169, %v4168, 0
      %v4171 = vshrl.u32 %v4170, 5
      %v4172 = vand.u32 %v4170, 31
      %v4173 = vsub.s32 32, %v4172
      %v4174 = vshrl.u32 683565275, %v4173
      %v4175 = vshll.u32 683565275, %v4172
      %v4176 = vshrl.u32 2475754826, %v4173
      %v4177 = vor.u32 %v4175, %v4176
      %v4178 = vshll.u32 2475754826, %v4172
      %v4179 = vshrl.u32 2131351028, %v4173
      %v4180 = vor.u32 %v4178, %v4179
      %v4181 = vshll.u32 2131351028, %v4172
      %v4182 = vshrl.u32 2102212464, %v4173
      %v4183 = vor.u32 %v4181, %v4182
      %v4184 = vshll.u32 2102212464, %v4172
      %v4185 = vshrl.u32 920167782, %v4173
      %v4186 = vor.u32 %v4184, %v4185
      %v4187 = vshll.u32 920167782, %v4172
      %v4188 = vshrl.u32 1326507024, %v4173
      %v4189 = vor.u32 %v4187, %v4188
      %vm4190 = vcmp.lt.s32.totalorder %v4171, 1
      %vm4191 = vcmp.lt.s32.totalorder %v4171, 2
      %vm4192 = vcmp.lt.s32.totalorder %v4171, 3
      %vm4193 = vcmp.lt.s32.totalorder %v4171, 4
      %v4194 = vsel %vm4190, %v4174, %v4177
      %v4195 = vsel %vm4193, %v4183, 2102212464
      %v4196 = vsel %vm4192, %v4180, %v4195
      %v4197 = vsel %vm4191, %v4194, %v4196
      %v4198 = vsel %vm4190, %v4177, %v4180
      %v4199 = vsel %vm4193, %v4186, 920167782
      %v4200 = vsel %vm4192, %v4183, %v4199
      %v4201 = vsel %vm4191, %v4198, %v4200
      %v4202 = vsel %vm4190, %v4180, %v4183
      %v4203 = vsel %vm4193, %v4189, 1326507024
      %v4204 = vsel %vm4192, %v4186, %v4203
      %v4205 = vsel %vm4191, %v4202, %v4204
      %v4206 = vshll.u32 %v4166, 8
      %v4207 = vand.u32 %v4206, 65535
      %v4208 = vshrl.u32 %v4206, 16
      %v4209 = vand.u32 %v4205, 65535
      %v4210 = vshrl.u32 %v4205, 16
      %v4211 = vmul.u32 %v4207, %v4209
      %v4212 = vmul.u32 %v4207, %v4210
      %v4213 = vmul.u32 %v4208, %v4209
      %v4214 = vmul.u32 %v4208, %v4210
      %v4215 = vshll.u32 %v4212, 16
      %v4216 = vshrl.u32 %v4212, 16
      %v4217 = vshll.u32 %v4213, 16
      %v4218 = vshrl.u32 %v4213, 16
      %vm4219 = vc.u32 %v4211, %v4215
      %v4220 = vsel %vm4219, 1, 0
      %v4221 = vadd.s32 %v4211, %v4215
      %v4222 = vadd.s32 %v4214, %v4220
      %vm4223 = vc.u32 %v4221, %v4217
      %v4224 = vsel %vm4223, 1, 0
      %v4225 = vadd.s32 %v4221, %v4217
      %v4226 = vadd.s32 %v4222, %v4224
      %v4227 = vadd.s32 %v4226, %v4216
      %v4228 = vadd.s32 %v4227, %v4218
      %v4229 = vand.u32 %v4206, 65535
      %v4230 = vshrl.u32 %v4206, 16
      %v4231 = vand.u32 %v4201, 65535
      %v4232 = vshrl.u32 %v4201, 16
      %v4233 = vmul.u32 %v4229, %v4231
      %v4234 = vmul.u32 %v4229, %v4232
      %v4235 = vmul.u32 %v4230, %v4231
      %v4236 = vmul.u32 %v4230, %v4232
      %v4237 = vshll.u32 %v4234, 16
      %v4238 = vshrl.u32 %v4234, 16
      %v4239 = vshll.u32 %v4235, 16
      %v4240 = vshrl.u32 %v4235, 16
      %vm4241 = vc.u32 %v4233, %v4237
      %v4242 = vsel %vm4241, 1, 0
      %v4243 = vadd.s32 %v4233, %v4237
      %v4244 = vadd.s32 %v4236, %v4242
      %vm4245 = vc.u32 %v4243, %v4239
      %v4246 = vsel %vm4245, 1, 0
      %v4247 = vadd.s32 %v4243, %v4239
      %v4248 = vadd.s32 %v4244, %v4246
      %v4249 = vadd.s32 %v4248, %v4238
      %v4250 = vadd.s32 %v4249, %v4240
      %v4251 = vmul.u32 %v4206, %v4197
      %v4252 = vadd.s32 %v4228, %v4247
      %vm4253 = vc.u32 %v4228, %v4247
      %v4254 = vadd.s32 %v4250, 1
      %v4255 = vsel %vm4253, %v4254, %v4250
      %v4256 = vadd.s32 %v4251, %v4255
      %v4257 = vadd.s32 %v4256, 536870912
      %v4258 = vshrl.u32 %v4257, 30
      %v4259 = vshll.u32 %v4258, 30
      %v4260 = vsub.s32 %v4256, %v4259
      %vm4261 = vcmp.lt.s32.totalorder %v4260, 0
      %v4262 = vsub.s32 0, %v4260
      %v4263 = vsel %vm4261, %v4262, %v4260
      %v4264 = vclz %v4263
      %v4265 = vsub.s32 %v4264, 2
      %vm4266 = vcmp.gt.s32.totalorder 0, %v4265
      %v4267 = vsel %vm4266, 0, %v4265
      %v4268 = vsub.s32 32, %v4267
      %v4269 = vshll.u32 %v4260, %v4267
      %v4270 = vshrl.u32 %v4252, %v4268
      %v4271 = vor.u32 %v4269, %v4270
      %v4272 = vsub.s32 4294967266, %v4267
      %v4273 = vadd.s32 %v4272, 127
      %v4274 = vshll.u32 %v4273, 23
      %v4275 = vor.u32 4788187, %v4274
      %v4276 = vand.u32 2147483647, %v4275
      %v4278 = vcvt.s32.f32 %v4271
      %v4279 = vmul.f32 %v4278, %v4276
      %v4280 = vxor.u32 %v4279, 2147483648
      %v4281 = vsel %vm4160, %v4280, %v4279
      %v4282 = vsub.s32 4, %v4258
      %v4283 = vsel %vm4160, %v4282, %v4258
      %v4284 = vsel %vm4159, %v1200, %v4281
      %v4285 = vsel %vm4159, 0, %v4283
      %v4286 = vmul.f32 %v4284, %v4284
      %v4287 = vmul.f32 %v4286, -0.001358992
      %v4288 = vadd.f32 %v4287, 0.041655596
      %v4289 = vmul.f32 %v4286, %v4288
      %v4290 = vadd.f32 %v4289, -0.4999988
      %v4291 = vmul.f32 %v4286, %v4290
      %v4292 = vadd.f32 1.0, %v4291
      %v4293 = vmul.f32 %v4284, %v4284
      %v4294 = vmul.f32 %v4293, -0.00019511016
      %v4295 = vadd.f32 %v4294, 0.008332121
      %v4296 = vmul.f32 %v4293, %v4295
      %v4297 = vadd.f32 %v4296, -0.16666654
      %v4298 = vmul.f32 %v4293, %v4297
      %v4299 = vadd.f32 %v4298, 1.0
      %v4300 = vmul.f32 %v4299, %v4284
      %vm4301 = vweird.f32 %v1200
      %v4302 = vadd.s32 %v4285, 3
      %v4303 = vand.u32 %v4302, 3
      %vm4304 = vcmp.lt.s32.totalorder %v4303, 2
      %vm4305 = vcmp.eq.s32.totalorder %v4303, 0
      %v4306 = vxor.u32 %v4300, 2147483648
      %v4307 = vsel %vm4305, %v4292, %v4306
      %vm4308 = vcmp.eq.s32.totalorder %v4303, 2
      %v4309 = vxor.u32 %v4292, 2147483648
      %v4310 = vsel %vm4308, %v4309, %v4300
      %v4311 = vsel %vm4304, %v4307, %v4310
      %v4312 = vsel %vm4301, nan, %v4311
      %v4313 = vand.u32 2147483647, %v1201
      %vm4314 = vcmp.le.f32.partialorder %v4313, 0.7853982
      %vm4315 = vcmp.lt.s32.totalorder %v1201, 0
      %v4316 = vand.u32 %v1201, 2139095040
      %v4317 = vshrl.u32 %v4316, 23
      %v4318 = vsub.s32 %v4317, 127
      %v4319 = vand.u32 2147483647, %v1201
      %v4320 = vand.u32 %v4319, 8388607
      %v4321 = vor.u32 %v4320, 8388608
      %v4322 = vsub.s32 0, %v4321
      %v4323 = vadd.s32 %v4318, 1
      %vm4324 = vcmp.gt.s32.totalorder %v4323, 0
      %v4325 = vsel %vm4324, %v4323, 0
      %v4326 = vshrl.u32 %v4325, 5
      %v4327 = vand.u32 %v4325, 31
      %v4328 = vsub.s32 32, %v4327
      %v4329 = vshrl.u32 683565275, %v4328
      %v4330 = vshll.u32 683565275, %v4327
      %v4331 = vshrl.u32 2475754826, %v4328
      %v4332 = vor.u32 %v4330, %v4331
      %v4333 = vshll.u32 2475754826, %v4327
      %v4334 = vshrl.u32 2131351028, %v4328
      %v4335 = vor.u32 %v4333, %v4334
      %v4336 = vshll.u32 2131351028, %v4327
      %v4337 = vshrl.u32 2102212464, %v4328
      %v4338 = vor.u32 %v4336, %v4337
      %v4339 = vshll.u32 2102212464, %v4327
      %v4340 = vshrl.u32 920167782, %v4328
      %v4341 = vor.u32 %v4339, %v4340
      %v4342 = vshll.u32 920167782, %v4327
      %v4343 = vshrl.u32 1326507024, %v4328
      %v4344 = vor.u32 %v4342, %v4343
      %vm4345 = vcmp.lt.s32.totalorder %v4326, 1
      %vm4346 = vcmp.lt.s32.totalorder %v4326, 2
      %vm4347 = vcmp.lt.s32.totalorder %v4326, 3
      %vm4348 = vcmp.lt.s32.totalorder %v4326, 4
      %v4349 = vsel %vm4345, %v4329, %v4332
      %v4350 = vsel %vm4348, %v4338, 2102212464
      %v4351 = vsel %vm4347, %v4335, %v4350
      %v4352 = vsel %vm4346, %v4349, %v4351
      %v4353 = vsel %vm4345, %v4332, %v4335
      %v4354 = vsel %vm4348, %v4341, 920167782
      %v4355 = vsel %vm4347, %v4338, %v4354
      %v4356 = vsel %vm4346, %v4353, %v4355
      %v4357 = vsel %vm4345, %v4335, %v4338
      %v4358 = vsel %vm4348, %v4344, 1326507024
      %v4359 = vsel %vm4347, %v4341, %v4358
      %v4360 = vsel %vm4346, %v4357, %v4359
      %v4361 = vshll.u32 %v4321, 8
      %v4362 = vand.u32 %v4361, 65535
      %v4363 = vshrl.u32 %v4361, 16
      %v4364 = vand.u32 %v4360, 65535
      %v4365 = vshrl.u32 %v4360, 16
      %v4366 = vmul.u32 %v4362, %v4364
      %v4367 = vmul.u32 %v4362, %v4365
      %v4368 = vmul.u32 %v4363, %v4364
      %v4369 = vmul.u32 %v4363, %v4365
      %v4370 = vshll.u32 %v4367, 16
      %v4371 = vshrl.u32 %v4367, 16
      %v4372 = vshll.u32 %v4368, 16
      %v4373 = vshrl.u32 %v4368, 16
      %vm4374 = vc.u32 %v4366, %v4370
      %v4375 = vsel %vm4374, 1, 0
      %v4376 = vadd.s32 %v4366, %v4370
      %v4377 = vadd.s32 %v4369, %v4375
      %vm4378 = vc.u32 %v4376, %v4372
      %v4379 = vsel %vm4378, 1, 0
      %v4380 = vadd.s32 %v4376, %v4372
      %v4381 = vadd.s32 %v4377, %v4379
      %v4382 = vadd.s32 %v4381, %v4371
      %v4383 = vadd.s32 %v4382, %v4373
      %v4384 = vand.u32 %v4361, 65535
      %v4385 = vshrl.u32 %v4361, 16
      %v4386 = vand.u32 %v4356, 65535
      %v4387 = vshrl.u32 %v4356, 16
      %v4388 = vmul.u32 %v4384, %v4386
      %v4389 = vmul.u32 %v4384, %v4387
      %v4390 = vmul.u32 %v4385, %v4386
      %v4391 = vmul.u32 %v4385, %v4387
      %v4392 = vshll.u32 %v4389, 16
      %v4393 = vshrl.u32 %v4389, 16
      %v4394 = vshll.u32 %v4390, 16
      %v4395 = vshrl.u32 %v4390, 16
      %vm4396 = vc.u32 %v4388, %v4392
      %v4397 = vsel %vm4396, 1, 0
      %v4398 = vadd.s32 %v4388, %v4392
      %v4399 = vadd.s32 %v4391, %v4397
      %vm4400 = vc.u32 %v4398, %v4394
      %v4401 = vsel %vm4400, 1, 0
      %v4402 = vadd.s32 %v4398, %v4394
      %v4403 = vadd.s32 %v4399, %v4401
      %v4404 = vadd.s32 %v4403, %v4393
      %v4405 = vadd.s32 %v4404, %v4395
      %v4406 = vmul.u32 %v4361, %v4352
      %v4407 = vadd.s32 %v4383, %v4402
      %vm4408 = vc.u32 %v4383, %v4402
      %v4409 = vadd.s32 %v4405, 1
      %v4410 = vsel %vm4408, %v4409, %v4405
      %v4411 = vadd.s32 %v4406, %v4410
      %v4412 = vadd.s32 %v4411, 536870912
      %v4413 = vshrl.u32 %v4412, 30
      %v4414 = vshll.u32 %v4413, 30
      %v4415 = vsub.s32 %v4411, %v4414
      %vm4416 = vcmp.lt.s32.totalorder %v4415, 0
      %v4417 = vsub.s32 0, %v4415
      %v4418 = vsel %vm4416, %v4417, %v4415
      %v4419 = vclz %v4418
      %v4420 = vsub.s32 %v4419, 2
      %vm4421 = vcmp.gt.s32.totalorder 0, %v4420
      %v4422 = vsel %vm4421, 0, %v4420
      %v4423 = vsub.s32 32, %v4422
      %v4424 = vshll.u32 %v4415, %v4422
      %v4425 = vshrl.u32 %v4407, %v4423
      %v4426 = vor.u32 %v4424, %v4425
      %v4427 = vsub.s32 4294967266, %v4422
      %v4428 = vadd.s32 %v4427, 127
      %v4429 = vshll.u32 %v4428, 23
      %v4430 = vor.u32 4788187, %v4429
      %v4431 = vand.u32 2147483647, %v4430
      %v4433 = vcvt.s32.f32 %v4426
      %v4434 = vmul.f32 %v4433, %v4431
      %v4435 = vxor.u32 %v4434, 2147483648
      %v4436 = vsel %vm4315, %v4435, %v4434
      %v4437 = vsub.s32 4, %v4413
      %v4438 = vsel %vm4315, %v4437, %v4413
      %v4439 = vsel %vm4314, %v1201, %v4436
      %v4440 = vsel %vm4314, 0, %v4438
      %v4441 = vmul.f32 %v4439, %v4439
      %v4442 = vmul.f32 %v4441, -0.001358992
      %v4443 = vadd.f32 %v4442, 0.041655596
      %v4444 = vmul.f32 %v4441, %v4443
      %v4445 = vadd.f32 %v4444, -0.4999988
      %v4446 = vmul.f32 %v4441, %v4445
      %v4447 = vadd.f32 1.0, %v4446
      %v4448 = vmul.f32 %v4439, %v4439
      %v4449 = vmul.f32 %v4448, -0.00019511016
      %v4450 = vadd.f32 %v4449, 0.008332121
      %v4451 = vmul.f32 %v4448, %v4450
      %v4452 = vadd.f32 %v4451, -0.16666654
      %v4453 = vmul.f32 %v4448, %v4452
      %v4454 = vadd.f32 %v4453, 1.0
      %v4455 = vmul.f32 %v4454, %v4439
      %vm4456 = vweird.f32 %v1201
      %v4457 = vadd.s32 %v4440, 3
      %v4458 = vand.u32 %v4457, 3
      %vm4459 = vcmp.lt.s32.totalorder %v4458, 2
      %vm4460 = vcmp.eq.s32.totalorder %v4458, 0
      %v4461 = vxor.u32 %v4455, 2147483648
      %v4462 = vsel %vm4460, %v4447, %v4461
      %vm4463 = vcmp.eq.s32.totalorder %v4458, 2
      %v4464 = vxor.u32 %v4447, 2147483648
      %v4465 = vsel %vm4463, %v4464, %v4455
      %v4466 = vsel %vm4459, %v4462, %v4465
      %v4467 = vsel %vm4456, nan, %v4466
      %v4468 = vand.u32 2147483647, %v1202
      %vm4469 = vcmp.le.f32.partialorder %v4468, 0.7853982
      %vm4470 = vcmp.lt.s32.totalorder %v1202, 0
      %v4471 = vand.u32 %v1202, 2139095040
      %v4472 = vshrl.u32 %v4471, 23
      %v4473 = vsub.s32 %v4472, 127
      %v4474 = vand.u32 2147483647, %v1202
      %v4475 = vand.u32 %v4474, 8388607
      %v4476 = vor.u32 %v4475, 8388608
      %v4477 = vsub.s32 0, %v4476
      %v4478 = vadd.s32 %v4473, 1
      %vm4479 = vcmp.gt.s32.totalorder %v4478, 0
      %v4480 = vsel %vm4479, %v4478, 0
      %v4481 = vshrl.u32 %v4480, 5
      %v4482 = vand.u32 %v4480, 31
      %v4483 = vsub.s32 32, %v4482
      %v4484 = vshrl.u32 683565275, %v4483
      %v4485 = vshll.u32 683565275, %v4482
      %v4486 = vshrl.u32 2475754826, %v4483
      %v4487 = vor.u32 %v4485, %v4486
      %v4488 = vshll.u32 2475754826, %v4482
      %v4489 = vshrl.u32 2131351028, %v4483
      %v4490 = vor.u32 %v4488, %v4489
      %v4491 = vshll.u32 2131351028, %v4482
      %v4492 = vshrl.u32 2102212464, %v4483
      %v4493 = vor.u32 %v4491, %v4492
      %v4494 = vshll.u32 2102212464, %v4482
      %v4495 = vshrl.u32 920167782, %v4483
      %v4496 = vor.u32 %v4494, %v4495
      %v4497 = vshll.u32 920167782, %v4482
      %v4498 = vshrl.u32 1326507024, %v4483
      %v4499 = vor.u32 %v4497, %v4498
      %vm4500 = vcmp.lt.s32.totalorder %v4481, 1
      %vm4501 = vcmp.lt.s32.totalorder %v4481, 2
      %vm4502 = vcmp.lt.s32.totalorder %v4481, 3
      %vm4503 = vcmp.lt.s32.totalorder %v4481, 4
      %v4504 = vsel %vm4500, %v4484, %v4487
      %v4505 = vsel %vm4503, %v4493, 2102212464
      %v4506 = vsel %vm4502, %v4490, %v4505
      %v4507 = vsel %vm4501, %v4504, %v4506
      %v4508 = vsel %vm4500, %v4487, %v4490
      %v4509 = vsel %vm4503, %v4496, 920167782
      %v4510 = vsel %vm4502, %v4493, %v4509
      %v4511 = vsel %vm4501, %v4508, %v4510
      %v4512 = vsel %vm4500, %v4490, %v4493
      %v4513 = vsel %vm4503, %v4499, 1326507024
      %v4514 = vsel %vm4502, %v4496, %v4513
      %v4515 = vsel %vm4501, %v4512, %v4514
      %v4516 = vshll.u32 %v4476, 8
      %v4517 = vand.u32 %v4516, 65535
      %v4518 = vshrl.u32 %v4516, 16
      %v4519 = vand.u32 %v4515, 65535
      %v4520 = vshrl.u32 %v4515, 16
      %v4521 = vmul.u32 %v4517, %v4519
      %v4522 = vmul.u32 %v4517, %v4520
      %v4523 = vmul.u32 %v4518, %v4519
      %v4524 = vmul.u32 %v4518, %v4520
      %v4525 = vshll.u32 %v4522, 16
      %v4526 = vshrl.u32 %v4522, 16
      %v4527 = vshll.u32 %v4523, 16
      %v4528 = vshrl.u32 %v4523, 16
      %vm4529 = vc.u32 %v4521, %v4525
      %v4530 = vsel %vm4529, 1, 0
      %v4531 = vadd.s32 %v4521, %v4525
      %v4532 = vadd.s32 %v4524, %v4530
      %vm4533 = vc.u32 %v4531, %v4527
      %v4534 = vsel %vm4533, 1, 0
      %v4535 = vadd.s32 %v4531, %v4527
      %v4536 = vadd.s32 %v4532, %v4534
      %v4537 = vadd.s32 %v4536, %v4526
      %v4538 = vadd.s32 %v4537, %v4528
      %v4539 = vand.u32 %v4516, 65535
      %v4540 = vshrl.u32 %v4516, 16
      %v4541 = vand.u32 %v4511, 65535
      %v4542 = vshrl.u32 %v4511, 16
      %v4543 = vmul.u32 %v4539, %v4541
      %v4544 = vmul.u32 %v4539, %v4542
      %v4545 = vmul.u32 %v4540, %v4541
      %v4546 = vmul.u32 %v4540, %v4542
      %v4547 = vshll.u32 %v4544, 16
      %v4548 = vshrl.u32 %v4544, 16
      %v4549 = vshll.u32 %v4545, 16
      %v4550 = vshrl.u32 %v4545, 16
      %vm4551 = vc.u32 %v4543, %v4547
      %v4552 = vsel %vm4551, 1, 0
      %v4553 = vadd.s32 %v4543, %v4547
      %v4554 = vadd.s32 %v4546, %v4552
      %vm4555 = vc.u32 %v4553, %v4549
      %v4556 = vsel %vm4555, 1, 0
      %v4557 = vadd.s32 %v4553, %v4549
      %v4558 = vadd.s32 %v4554, %v4556
      %v4559 = vadd.s32 %v4558, %v4548
      %v4560 = vadd.s32 %v4559, %v4550
      %v4561 = vmul.u32 %v4516, %v4507
      %v4562 = vadd.s32 %v4538, %v4557
      %vm4563 = vc.u32 %v4538, %v4557
      %v4564 = vadd.s32 %v4560, 1
      %v4565 = vsel %vm4563, %v4564, %v4560
      %v4566 = vadd.s32 %v4561, %v4565
      %v4567 = vadd.s32 %v4566, 536870912
      %v4568 = vshrl.u32 %v4567, 30
      %v4569 = vshll.u32 %v4568, 30
      %v4570 = vsub.s32 %v4566, %v4569
      %vm4571 = vcmp.lt.s32.totalorder %v4570, 0
      %v4572 = vsub.s32 0, %v4570
      %v4573 = vsel %vm4571, %v4572, %v4570
      %v4574 = vclz %v4573
      %v4575 = vsub.s32 %v4574, 2
      %vm4576 = vcmp.gt.s32.totalorder 0, %v4575
      %v4577 = vsel %vm4576, 0, %v4575
      %v4578 = vsub.s32 32, %v4577
      %v4579 = vshll.u32 %v4570, %v4577
      %v4580 = vshrl.u32 %v4562, %v4578
      %v4581 = vor.u32 %v4579, %v4580
      %v4582 = vsub.s32 4294967266, %v4577
      %v4583 = vadd.s32 %v4582, 127
      %v4584 = vshll.u32 %v4583, 23
      %v4585 = vor.u32 4788187, %v4584
      %v4586 = vand.u32 2147483647, %v4585
      %v4588 = vcvt.s32.f32 %v4581
      %v4589 = vmul.f32 %v4588, %v4586
      %v4590 = vxor.u32 %v4589, 2147483648
      %v4591 = vsel %vm4470, %v4590, %v4589
      %v4592 = vsub.s32 4, %v4568
      %v4593 = vsel %vm4470, %v4592, %v4568
      %v4594 = vsel %vm4469, %v1202, %v4591
      %v4595 = vsel %vm4469, 0, %v4593
      %v4596 = vmul.f32 %v4594, %v4594
      %v4597 = vmul.f32 %v4596, -0.001358992
      %v4598 = vadd.f32 %v4597, 0.041655596
      %v4599 = vmul.f32 %v4596, %v4598
      %v4600 = vadd.f32 %v4599, -0.4999988
      %v4601 = vmul.f32 %v4596, %v4600
      %v4602 = vadd.f32 1.0, %v4601
      %v4603 = vmul.f32 %v4594, %v4594
      %v4604 = vmul.f32 %v4603, -0.00019511016
      %v4605 = vadd.f32 %v4604, 0.008332121
      %v4606 = vmul.f32 %v4603, %v4605
      %v4607 = vadd.f32 %v4606, -0.16666654
      %v4608 = vmul.f32 %v4603, %v4607
      %v4609 = vadd.f32 %v4608, 1.0
      %v4610 = vmul.f32 %v4609, %v4594
      %vm4611 = vweird.f32 %v1202
      %v4612 = vadd.s32 %v4595, 3
      %v4613 = vand.u32 %v4612, 3
      %vm4614 = vcmp.lt.s32.totalorder %v4613, 2
      %vm4615 = vcmp.eq.s32.totalorder %v4613, 0
      %v4616 = vxor.u32 %v4610, 2147483648
      %v4617 = vsel %vm4615, %v4602, %v4616
      %vm4618 = vcmp.eq.s32.totalorder %v4613, 2
      %v4619 = vxor.u32 %v4602, 2147483648
      %v4620 = vsel %vm4618, %v4619, %v4610
      %v4621 = vsel %vm4614, %v4617, %v4620
      %v4622 = vsel %vm4611, nan, %v4621
      %v4623 = vand.u32 2147483647, %v1203
      %vm4624 = vcmp.le.f32.partialorder %v4623, 0.7853982
      %vm4625 = vcmp.lt.s32.totalorder %v1203, 0
      %v4626 = vand.u32 %v1203, 2139095040
      %v4627 = vshrl.u32 %v4626, 23
      %v4628 = vsub.s32 %v4627, 127
      %v4629 = vand.u32 2147483647, %v1203
      %v4630 = vand.u32 %v4629, 8388607
      %v4631 = vor.u32 %v4630, 8388608
      %v4632 = vsub.s32 0, %v4631
      %v4633 = vadd.s32 %v4628, 1
      %vm4634 = vcmp.gt.s32.totalorder %v4633, 0
      %v4635 = vsel %vm4634, %v4633, 0
      %v4636 = vshrl.u32 %v4635, 5
      %v4637 = vand.u32 %v4635, 31
      %v4638 = vsub.s32 32, %v4637
      %v4639 = vshrl.u32 683565275, %v4638
      %v4640 = vshll.u32 683565275, %v4637
      %v4641 = vshrl.u32 2475754826, %v4638
      %v4642 = vor.u32 %v4640, %v4641
      %v4643 = vshll.u32 2475754826, %v4637
      %v4644 = vshrl.u32 2131351028, %v4638
      %v4645 = vor.u32 %v4643, %v4644
      %v4646 = vshll.u32 2131351028, %v4637
      %v4647 = vshrl.u32 2102212464, %v4638
      %v4648 = vor.u32 %v4646, %v4647
      %v4649 = vshll.u32 2102212464, %v4637
      %v4650 = vshrl.u32 920167782, %v4638
      %v4651 = vor.u32 %v4649, %v4650
      %v4652 = vshll.u32 920167782, %v4637
      %v4653 = vshrl.u32 1326507024, %v4638
      %v4654 = vor.u32 %v4652, %v4653
      %vm4655 = vcmp.lt.s32.totalorder %v4636, 1
      %vm4656 = vcmp.lt.s32.totalorder %v4636, 2
      %vm4657 = vcmp.lt.s32.totalorder %v4636, 3
      %vm4658 = vcmp.lt.s32.totalorder %v4636, 4
      %v4659 = vsel %vm4655, %v4639, %v4642
      %v4660 = vsel %vm4658, %v4648, 2102212464
      %v4661 = vsel %vm4657, %v4645, %v4660
      %v4662 = vsel %vm4656, %v4659, %v4661
      %v4663 = vsel %vm4655, %v4642, %v4645
      %v4664 = vsel %vm4658, %v4651, 920167782
      %v4665 = vsel %vm4657, %v4648, %v4664
      %v4666 = vsel %vm4656, %v4663, %v4665
      %v4667 = vsel %vm4655, %v4645, %v4648
      %v4668 = vsel %vm4658, %v4654, 1326507024
      %v4669 = vsel %vm4657, %v4651, %v4668
      %v4670 = vsel %vm4656, %v4667, %v4669
      %v4671 = vshll.u32 %v4631, 8
      %v4672 = vand.u32 %v4671, 65535
      %v4673 = vshrl.u32 %v4671, 16
      %v4674 = vand.u32 %v4670, 65535
      %v4675 = vshrl.u32 %v4670, 16
      %v4676 = vmul.u32 %v4672, %v4674
      %v4677 = vmul.u32 %v4672, %v4675
      %v4678 = vmul.u32 %v4673, %v4674
      %v4679 = vmul.u32 %v4673, %v4675
      %v4680 = vshll.u32 %v4677, 16
      %v4681 = vshrl.u32 %v4677, 16
      %v4682 = vshll.u32 %v4678, 16
      %v4683 = vshrl.u32 %v4678, 16
      %vm4684 = vc.u32 %v4676, %v4680
      %v4685 = vsel %vm4684, 1, 0
      %v4686 = vadd.s32 %v4676, %v4680
      %v4687 = vadd.s32 %v4679, %v4685
      %vm4688 = vc.u32 %v4686, %v4682
      %v4689 = vsel %vm4688, 1, 0
      %v4690 = vadd.s32 %v4686, %v4682
      %v4691 = vadd.s32 %v4687, %v4689
      %v4692 = vadd.s32 %v4691, %v4681
      %v4693 = vadd.s32 %v4692, %v4683
      %v4694 = vand.u32 %v4671, 65535
      %v4695 = vshrl.u32 %v4671, 16
      %v4696 = vand.u32 %v4666, 65535
      %v4697 = vshrl.u32 %v4666, 16
      %v4698 = vmul.u32 %v4694, %v4696
      %v4699 = vmul.u32 %v4694, %v4697
      %v4700 = vmul.u32 %v4695, %v4696
      %v4701 = vmul.u32 %v4695, %v4697
      %v4702 = vshll.u32 %v4699, 16
      %v4703 = vshrl.u32 %v4699, 16
      %v4704 = vshll.u32 %v4700, 16
      %v4705 = vshrl.u32 %v4700, 16
      %vm4706 = vc.u32 %v4698, %v4702
      %v4707 = vsel %vm4706, 1, 0
      %v4708 = vadd.s32 %v4698, %v4702
      %v4709 = vadd.s32 %v4701, %v4707
      %vm4710 = vc.u32 %v4708, %v4704
      %v4711 = vsel %vm4710, 1, 0
      %v4712 = vadd.s32 %v4708, %v4704
      %v4713 = vadd.s32 %v4709, %v4711
      %v4714 = vadd.s32 %v4713, %v4703
      %v4715 = vadd.s32 %v4714, %v4705
      %v4716 = vmul.u32 %v4671, %v4662
      %v4717 = vadd.s32 %v4693, %v4712
      %vm4718 = vc.u32 %v4693, %v4712
      %v4719 = vadd.s32 %v4715, 1
      %v4720 = vsel %vm4718, %v4719, %v4715
      %v4721 = vadd.s32 %v4716, %v4720
      %v4722 = vadd.s32 %v4721, 536870912
      %v4723 = vshrl.u32 %v4722, 30
      %v4724 = vshll.u32 %v4723, 30
      %v4725 = vsub.s32 %v4721, %v4724
      %vm4726 = vcmp.lt.s32.totalorder %v4725, 0
      %v4727 = vsub.s32 0, %v4725
      %v4728 = vsel %vm4726, %v4727, %v4725
      %v4729 = vclz %v4728
      %v4730 = vsub.s32 %v4729, 2
      %vm4731 = vcmp.gt.s32.totalorder 0, %v4730
      %v4732 = vsel %vm4731, 0, %v4730
      %v4733 = vsub.s32 32, %v4732
      %v4734 = vshll.u32 %v4725, %v4732
      %v4735 = vshrl.u32 %v4717, %v4733
      %v4736 = vor.u32 %v4734, %v4735
      %v4737 = vsub.s32 4294967266, %v4732
      %v4738 = vadd.s32 %v4737, 127
      %v4739 = vshll.u32 %v4738, 23
      %v4740 = vor.u32 4788187, %v4739
      %v4741 = vand.u32 2147483647, %v4740
      %v4743 = vcvt.s32.f32 %v4736
      %v4744 = vmul.f32 %v4743, %v4741
      %v4745 = vxor.u32 %v4744, 2147483648
      %v4746 = vsel %vm4625, %v4745, %v4744
      %v4747 = vsub.s32 4, %v4723
      %v4748 = vsel %vm4625, %v4747, %v4723
      %v4749 = vsel %vm4624, %v1203, %v4746
      %v4750 = vsel %vm4624, 0, %v4748
      %v4751 = vmul.f32 %v4749, %v4749
      %v4752 = vmul.f32 %v4751, -0.001358992
      %v4753 = vadd.f32 %v4752, 0.041655596
      %v4754 = vmul.f32 %v4751, %v4753
      %v4755 = vadd.f32 %v4754, -0.4999988
      %v4756 = vmul.f32 %v4751, %v4755
      %v4757 = vadd.f32 1.0, %v4756
      %v4758 = vmul.f32 %v4749, %v4749
      %v4759 = vmul.f32 %v4758, -0.00019511016
      %v4760 = vadd.f32 %v4759, 0.008332121
      %v4761 = vmul.f32 %v4758, %v4760
      %v4762 = vadd.f32 %v4761, -0.16666654
      %v4763 = vmul.f32 %v4758, %v4762
      %v4764 = vadd.f32 %v4763, 1.0
      %v4765 = vmul.f32 %v4764, %v4749
      %vm4766 = vweird.f32 %v1203
      %v4767 = vadd.s32 %v4750, 3
      %v4768 = vand.u32 %v4767, 3
      %vm4769 = vcmp.lt.s32.totalorder %v4768, 2
      %vm4770 = vcmp.eq.s32.totalorder %v4768, 0
      %v4771 = vxor.u32 %v4765, 2147483648
      %v4772 = vsel %vm4770, %v4757, %v4771
      %vm4773 = vcmp.eq.s32.totalorder %v4768, 2
      %v4774 = vxor.u32 %v4757, 2147483648
      %v4775 = vsel %vm4773, %v4774, %v4765
      %v4776 = vsel %vm4769, %v4772, %v4775
      %v4777 = vsel %vm4766, nan, %v4776
      %v4778 = vand.u32 2147483647, %v1204
      %vm4779 = vcmp.le.f32.partialorder %v4778, 0.7853982
      %vm4780 = vcmp.lt.s32.totalorder %v1204, 0
      %v4781 = vand.u32 %v1204, 2139095040
      %v4782 = vshrl.u32 %v4781, 23
      %v4783 = vsub.s32 %v4782, 127
      %v4784 = vand.u32 2147483647, %v1204
      %v4785 = vand.u32 %v4784, 8388607
      %v4786 = vor.u32 %v4785, 8388608
      %v4787 = vsub.s32 0, %v4786
      %v4788 = vadd.s32 %v4783, 1
      %vm4789 = vcmp.gt.s32.totalorder %v4788, 0
      %v4790 = vsel %vm4789, %v4788, 0
      %v4791 = vshrl.u32 %v4790, 5
      %v4792 = vand.u32 %v4790, 31
      %v4793 = vsub.s32 32, %v4792
      %v4794 = vshrl.u32 683565275, %v4793
      %v4795 = vshll.u32 683565275, %v4792
      %v4796 = vshrl.u32 2475754826, %v4793
      %v4797 = vor.u32 %v4795, %v4796
      %v4798 = vshll.u32 2475754826, %v4792
      %v4799 = vshrl.u32 2131351028, %v4793
      %v4800 = vor.u32 %v4798, %v4799
      %v4801 = vshll.u32 2131351028, %v4792
      %v4802 = vshrl.u32 2102212464, %v4793
      %v4803 = vor.u32 %v4801, %v4802
      %v4804 = vshll.u32 2102212464, %v4792
      %v4805 = vshrl.u32 920167782, %v4793
      %v4806 = vor.u32 %v4804, %v4805
      %v4807 = vshll.u32 920167782, %v4792
      %v4808 = vshrl.u32 1326507024, %v4793
      %v4809 = vor.u32 %v4807, %v4808
      %vm4810 = vcmp.lt.s32.totalorder %v4791, 1
      %vm4811 = vcmp.lt.s32.totalorder %v4791, 2
      %vm4812 = vcmp.lt.s32.totalorder %v4791, 3
      %vm4813 = vcmp.lt.s32.totalorder %v4791, 4
      %v4814 = vsel %vm4810, %v4794, %v4797
      %v4815 = vsel %vm4813, %v4803, 2102212464
      %v4816 = vsel %vm4812, %v4800, %v4815
      %v4817 = vsel %vm4811, %v4814, %v4816
      %v4818 = vsel %vm4810, %v4797, %v4800
      %v4819 = vsel %vm4813, %v4806, 920167782
      %v4820 = vsel %vm4812, %v4803, %v4819
      %v4821 = vsel %vm4811, %v4818, %v4820
      %v4822 = vsel %vm4810, %v4800, %v4803
      %v4823 = vsel %vm4813, %v4809, 1326507024
      %v4824 = vsel %vm4812, %v4806, %v4823
      %v4825 = vsel %vm4811, %v4822, %v4824
      %v4826 = vshll.u32 %v4786, 8
      %v4827 = vand.u32 %v4826, 65535
      %v4828 = vshrl.u32 %v4826, 16
      %v4829 = vand.u32 %v4825, 65535
      %v4830 = vshrl.u32 %v4825, 16
      %v4831 = vmul.u32 %v4827, %v4829
      %v4832 = vmul.u32 %v4827, %v4830
      %v4833 = vmul.u32 %v4828, %v4829
      %v4834 = vmul.u32 %v4828, %v4830
      %v4835 = vshll.u32 %v4832, 16
      %v4836 = vshrl.u32 %v4832, 16
      %v4837 = vshll.u32 %v4833, 16
      %v4838 = vshrl.u32 %v4833, 16
      %vm4839 = vc.u32 %v4831, %v4835
      %v4840 = vsel %vm4839, 1, 0
      %v4841 = vadd.s32 %v4831, %v4835
      %v4842 = vadd.s32 %v4834, %v4840
      %vm4843 = vc.u32 %v4841, %v4837
      %v4844 = vsel %vm4843, 1, 0
      %v4845 = vadd.s32 %v4841, %v4837
      %v4846 = vadd.s32 %v4842, %v4844
      %v4847 = vadd.s32 %v4846, %v4836
      %v4848 = vadd.s32 %v4847, %v4838
      %v4849 = vand.u32 %v4826, 65535
      %v4850 = vshrl.u32 %v4826, 16
      %v4851 = vand.u32 %v4821, 65535
      %v4852 = vshrl.u32 %v4821, 16
      %v4853 = vmul.u32 %v4849, %v4851
      %v4854 = vmul.u32 %v4849, %v4852
      %v4855 = vmul.u32 %v4850, %v4851
      %v4856 = vmul.u32 %v4850, %v4852
      %v4857 = vshll.u32 %v4854, 16
      %v4858 = vshrl.u32 %v4854, 16
      %v4859 = vshll.u32 %v4855, 16
      %v4860 = vshrl.u32 %v4855, 16
      %vm4861 = vc.u32 %v4853, %v4857
      %v4862 = vsel %vm4861, 1, 0
      %v4863 = vadd.s32 %v4853, %v4857
      %v4864 = vadd.s32 %v4856, %v4862
      %vm4865 = vc.u32 %v4863, %v4859
      %v4866 = vsel %vm4865, 1, 0
      %v4867 = vadd.s32 %v4863, %v4859
      %v4868 = vadd.s32 %v4864, %v4866
      %v4869 = vadd.s32 %v4868, %v4858
      %v4870 = vadd.s32 %v4869, %v4860
      %v4871 = vmul.u32 %v4826, %v4817
      %v4872 = vadd.s32 %v4848, %v4867
      %vm4873 = vc.u32 %v4848, %v4867
      %v4874 = vadd.s32 %v4870, 1
      %v4875 = vsel %vm4873, %v4874, %v4870
      %v4876 = vadd.s32 %v4871, %v4875
      %v4877 = vadd.s32 %v4876, 536870912
      %v4878 = vshrl.u32 %v4877, 30
      %v4879 = vshll.u32 %v4878, 30
      %v4880 = vsub.s32 %v4876, %v4879
      %vm4881 = vcmp.lt.s32.totalorder %v4880, 0
      %v4882 = vsub.s32 0, %v4880
      %v4883 = vsel %vm4881, %v4882, %v4880
      %v4884 = vclz %v4883
      %v4885 = vsub.s32 %v4884, 2
      %vm4886 = vcmp.gt.s32.totalorder 0, %v4885
      %v4887 = vsel %vm4886, 0, %v4885
      %v4888 = vsub.s32 32, %v4887
      %v4889 = vshll.u32 %v4880, %v4887
      %v4890 = vshrl.u32 %v4872, %v4888
      %v4891 = vor.u32 %v4889, %v4890
      %v4892 = vsub.s32 4294967266, %v4887
      %v4893 = vadd.s32 %v4892, 127
      %v4894 = vshll.u32 %v4893, 23
      %v4895 = vor.u32 4788187, %v4894
      %v4896 = vand.u32 2147483647, %v4895
      %v4898 = vcvt.s32.f32 %v4891
      %v4899 = vmul.f32 %v4898, %v4896
      %v4900 = vxor.u32 %v4899, 2147483648
      %v4901 = vsel %vm4780, %v4900, %v4899
      %v4902 = vsub.s32 4, %v4878
      %v4903 = vsel %vm4780, %v4902, %v4878
      %v4904 = vsel %vm4779, %v1204, %v4901
      %v4905 = vsel %vm4779, 0, %v4903
      %v4906 = vmul.f32 %v4904, %v4904
      %v4907 = vmul.f32 %v4906, -0.001358992
      %v4908 = vadd.f32 %v4907, 0.041655596
      %v4909 = vmul.f32 %v4906, %v4908
      %v4910 = vadd.f32 %v4909, -0.4999988
      %v4911 = vmul.f32 %v4906, %v4910
      %v4912 = vadd.f32 1.0, %v4911
      %v4913 = vmul.f32 %v4904, %v4904
      %v4914 = vmul.f32 %v4913, -0.00019511016
      %v4915 = vadd.f32 %v4914, 0.008332121
      %v4916 = vmul.f32 %v4913, %v4915
      %v4917 = vadd.f32 %v4916, -0.16666654
      %v4918 = vmul.f32 %v4913, %v4917
      %v4919 = vadd.f32 %v4918, 1.0
      %v4920 = vmul.f32 %v4919, %v4904
      %vm4921 = vweird.f32 %v1204
      %v4922 = vadd.s32 %v4905, 3
      %v4923 = vand.u32 %v4922, 3
      %vm4924 = vcmp.lt.s32.totalorder %v4923, 2
      %vm4925 = vcmp.eq.s32.totalorder %v4923, 0
      %v4926 = vxor.u32 %v4920, 2147483648
      %v4927 = vsel %vm4925, %v4912, %v4926
      %vm4928 = vcmp.eq.s32.totalorder %v4923, 2
      %v4929 = vxor.u32 %v4912, 2147483648
      %v4930 = vsel %vm4928, %v4929, %v4920
      %v4931 = vsel %vm4924, %v4927, %v4930
      %v4932 = vsel %vm4921, nan, %v4931
      %v4933 = vand.u32 2147483647, %v1205
      %vm4934 = vcmp.le.f32.partialorder %v4933, 0.7853982
      %vm4935 = vcmp.lt.s32.totalorder %v1205, 0
      %v4936 = vand.u32 %v1205, 2139095040
      %v4937 = vshrl.u32 %v4936, 23
      %v4938 = vsub.s32 %v4937, 127
      %v4939 = vand.u32 2147483647, %v1205
      %v4940 = vand.u32 %v4939, 8388607
      %v4941 = vor.u32 %v4940, 8388608
      %v4942 = vsub.s32 0, %v4941
      %v4943 = vadd.s32 %v4938, 1
      %vm4944 = vcmp.gt.s32.totalorder %v4943, 0
      %v4945 = vsel %vm4944, %v4943, 0
      %v4946 = vshrl.u32 %v4945, 5
      %v4947 = vand.u32 %v4945, 31
      %v4948 = vsub.s32 32, %v4947
      %v4949 = vshrl.u32 683565275, %v4948
      %v4950 = vshll.u32 683565275, %v4947
      %v4951 = vshrl.u32 2475754826, %v4948
      %v4952 = vor.u32 %v4950, %v4951
      %v4953 = vshll.u32 2475754826, %v4947
      %v4954 = vshrl.u32 2131351028, %v4948
      %v4955 = vor.u32 %v4953, %v4954
      %v4956 = vshll.u32 2131351028, %v4947
      %v4957 = vshrl.u32 2102212464, %v4948
      %v4958 = vor.u32 %v4956, %v4957
      %v4959 = vshll.u32 2102212464, %v4947
      %v4960 = vshrl.u32 920167782, %v4948
      %v4961 = vor.u32 %v4959, %v4960
      %v4962 = vshll.u32 920167782, %v4947
      %v4963 = vshrl.u32 1326507024, %v4948
      %v4964 = vor.u32 %v4962, %v4963
      %vm4965 = vcmp.lt.s32.totalorder %v4946, 1
      %vm4966 = vcmp.lt.s32.totalorder %v4946, 2
      %vm4967 = vcmp.lt.s32.totalorder %v4946, 3
      %vm4968 = vcmp.lt.s32.totalorder %v4946, 4
      %v4969 = vsel %vm4965, %v4949, %v4952
      %v4970 = vsel %vm4968, %v4958, 2102212464
      %v4971 = vsel %vm4967, %v4955, %v4970
      %v4972 = vsel %vm4966, %v4969, %v4971
      %v4973 = vsel %vm4965, %v4952, %v4955
      %v4974 = vsel %vm4968, %v4961, 920167782
      %v4975 = vsel %vm4967, %v4958, %v4974
      %v4976 = vsel %vm4966, %v4973, %v4975
      %v4977 = vsel %vm4965, %v4955, %v4958
      %v4978 = vsel %vm4968, %v4964, 1326507024
      %v4979 = vsel %vm4967, %v4961, %v4978
      %v4980 = vsel %vm4966, %v4977, %v4979
      %v4981 = vshll.u32 %v4941, 8
      %v4982 = vand.u32 %v4981, 65535
      %v4983 = vshrl.u32 %v4981, 16
      %v4984 = vand.u32 %v4980, 65535
      %v4985 = vshrl.u32 %v4980, 16
      %v4986 = vmul.u32 %v4982, %v4984
      %v4987 = vmul.u32 %v4982, %v4985
      %v4988 = vmul.u32 %v4983, %v4984
      %v4989 = vmul.u32 %v4983, %v4985
      %v4990 = vshll.u32 %v4987, 16
      %v4991 = vshrl.u32 %v4987, 16
      %v4992 = vshll.u32 %v4988, 16
      %v4993 = vshrl.u32 %v4988, 16
      %vm4994 = vc.u32 %v4986, %v4990
      %v4995 = vsel %vm4994, 1, 0
      %v4996 = vadd.s32 %v4986, %v4990
      %v4997 = vadd.s32 %v4989, %v4995
      %vm4998 = vc.u32 %v4996, %v4992
      %v4999 = vsel %vm4998, 1, 0
      %v5000 = vadd.s32 %v4996, %v4992
      %v5001 = vadd.s32 %v4997, %v4999
      %v5002 = vadd.s32 %v5001, %v4991
      %v5003 = vadd.s32 %v5002, %v4993
      %v5004 = vand.u32 %v4981, 65535
      %v5005 = vshrl.u32 %v4981, 16
      %v5006 = vand.u32 %v4976, 65535
      %v5007 = vshrl.u32 %v4976, 16
      %v5008 = vmul.u32 %v5004, %v5006
      %v5009 = vmul.u32 %v5004, %v5007
      %v5010 = vmul.u32 %v5005, %v5006
      %v5011 = vmul.u32 %v5005, %v5007
      %v5012 = vshll.u32 %v5009, 16
      %v5013 = vshrl.u32 %v5009, 16
      %v5014 = vshll.u32 %v5010, 16
      %v5015 = vshrl.u32 %v5010, 16
      %vm5016 = vc.u32 %v5008, %v5012
      %v5017 = vsel %vm5016, 1, 0
      %v5018 = vadd.s32 %v5008, %v5012
      %v5019 = vadd.s32 %v5011, %v5017
      %vm5020 = vc.u32 %v5018, %v5014
      %v5021 = vsel %vm5020, 1, 0
      %v5022 = vadd.s32 %v5018, %v5014
      %v5023 = vadd.s32 %v5019, %v5021
      %v5024 = vadd.s32 %v5023, %v5013
      %v5025 = vadd.s32 %v5024, %v5015
      %v5026 = vmul.u32 %v4981, %v4972
      %v5027 = vadd.s32 %v5003, %v5022
      %vm5028 = vc.u32 %v5003, %v5022
      %v5029 = vadd.s32 %v5025, 1
      %v5030 = vsel %vm5028, %v5029, %v5025
      %v5031 = vadd.s32 %v5026, %v5030
      %v5032 = vadd.s32 %v5031, 536870912
      %v5033 = vshrl.u32 %v5032, 30
      %v5034 = vshll.u32 %v5033, 30
      %v5035 = vsub.s32 %v5031, %v5034
      %vm5036 = vcmp.lt.s32.totalorder %v5035, 0
      %v5037 = vsub.s32 0, %v5035
      %v5038 = vsel %vm5036, %v5037, %v5035
      %v5039 = vclz %v5038
      %v5040 = vsub.s32 %v5039, 2
      %vm5041 = vcmp.gt.s32.totalorder 0, %v5040
      %v5042 = vsel %vm5041, 0, %v5040
      %v5043 = vsub.s32 32, %v5042
      %v5044 = vshll.u32 %v5035, %v5042
      %v5045 = vshrl.u32 %v5027, %v5043
      %v5046 = vor.u32 %v5044, %v5045
      %v5047 = vsub.s32 4294967266, %v5042
      %v5048 = vadd.s32 %v5047, 127
      %v5049 = vshll.u32 %v5048, 23
      %v5050 = vor.u32 4788187, %v5049
      %v5051 = vand.u32 2147483647, %v5050
      %v5053 = vcvt.s32.f32 %v5046
      %v5054 = vmul.f32 %v5053, %v5051
      %v5055 = vxor.u32 %v5054, 2147483648
      %v5056 = vsel %vm4935, %v5055, %v5054
      %v5057 = vsub.s32 4, %v5033
      %v5058 = vsel %vm4935, %v5057, %v5033
      %v5059 = vsel %vm4934, %v1205, %v5056
      %v5060 = vsel %vm4934, 0, %v5058
      %v5061 = vmul.f32 %v5059, %v5059
      %v5062 = vmul.f32 %v5061, -0.001358992
      %v5063 = vadd.f32 %v5062, 0.041655596
      %v5064 = vmul.f32 %v5061, %v5063
      %v5065 = vadd.f32 %v5064, -0.4999988
      %v5066 = vmul.f32 %v5061, %v5065
      %v5067 = vadd.f32 1.0, %v5066
      %v5068 = vmul.f32 %v5059, %v5059
      %v5069 = vmul.f32 %v5068, -0.00019511016
      %v5070 = vadd.f32 %v5069, 0.008332121
      %v5071 = vmul.f32 %v5068, %v5070
      %v5072 = vadd.f32 %v5071, -0.16666654
      %v5073 = vmul.f32 %v5068, %v5072
      %v5074 = vadd.f32 %v5073, 1.0
      %v5075 = vmul.f32 %v5074, %v5059
      %vm5076 = vweird.f32 %v1205
      %v5077 = vadd.s32 %v5060, 3
      %v5078 = vand.u32 %v5077, 3
      %vm5079 = vcmp.lt.s32.totalorder %v5078, 2
      %vm5080 = vcmp.eq.s32.totalorder %v5078, 0
      %v5081 = vxor.u32 %v5075, 2147483648
      %v5082 = vsel %vm5080, %v5067, %v5081
      %vm5083 = vcmp.eq.s32.totalorder %v5078, 2
      %v5084 = vxor.u32 %v5067, 2147483648
      %v5085 = vsel %vm5083, %v5084, %v5075
      %v5086 = vsel %vm5079, %v5082, %v5085
      %v5087 = vsel %vm5076, nan, %v5086
      %v5088 = vand.u32 2147483647, %v1206
      %vm5089 = vcmp.le.f32.partialorder %v5088, 0.7853982
      %vm5090 = vcmp.lt.s32.totalorder %v1206, 0
      %v5091 = vand.u32 %v1206, 2139095040
      %v5092 = vshrl.u32 %v5091, 23
      %v5093 = vsub.s32 %v5092, 127
      %v5094 = vand.u32 2147483647, %v1206
      %v5095 = vand.u32 %v5094, 8388607
      %v5096 = vor.u32 %v5095, 8388608
      %v5097 = vsub.s32 0, %v5096
      %v5098 = vadd.s32 %v5093, 1
      %vm5099 = vcmp.gt.s32.totalorder %v5098, 0
      %v5100 = vsel %vm5099, %v5098, 0
      %v5101 = vshrl.u32 %v5100, 5
      %v5102 = vand.u32 %v5100, 31
      %v5103 = vsub.s32 32, %v5102
      %v5104 = vshrl.u32 683565275, %v5103
      %v5105 = vshll.u32 683565275, %v5102
      %v5106 = vshrl.u32 2475754826, %v5103
      %v5107 = vor.u32 %v5105, %v5106
      %v5108 = vshll.u32 2475754826, %v5102
      %v5109 = vshrl.u32 2131351028, %v5103
      %v5110 = vor.u32 %v5108, %v5109
      %v5111 = vshll.u32 2131351028, %v5102
      %v5112 = vshrl.u32 2102212464, %v5103
      %v5113 = vor.u32 %v5111, %v5112
      %v5114 = vshll.u32 2102212464, %v5102
      %v5115 = vshrl.u32 920167782, %v5103
      %v5116 = vor.u32 %v5114, %v5115
      %v5117 = vshll.u32 920167782, %v5102
      %v5118 = vshrl.u32 1326507024, %v5103
      %v5119 = vor.u32 %v5117, %v5118
      %vm5120 = vcmp.lt.s32.totalorder %v5101, 1
      %vm5121 = vcmp.lt.s32.totalorder %v5101, 2
      %vm5122 = vcmp.lt.s32.totalorder %v5101, 3
      %vm5123 = vcmp.lt.s32.totalorder %v5101, 4
      %v5124 = vsel %vm5120, %v5104, %v5107
      %v5125 = vsel %vm5123, %v5113, 2102212464
      %v5126 = vsel %vm5122, %v5110, %v5125
      %v5127 = vsel %vm5121, %v5124, %v5126
      %v5128 = vsel %vm5120, %v5107, %v5110
      %v5129 = vsel %vm5123, %v5116, 920167782
      %v5130 = vsel %vm5122, %v5113, %v5129
      %v5131 = vsel %vm5121, %v5128, %v5130
      %v5132 = vsel %vm5120, %v5110, %v5113
      %v5133 = vsel %vm5123, %v5119, 1326507024
      %v5134 = vsel %vm5122, %v5116, %v5133
      %v5135 = vsel %vm5121, %v5132, %v5134
      %v5136 = vshll.u32 %v5096, 8
      %v5137 = vand.u32 %v5136, 65535
      %v5138 = vshrl.u32 %v5136, 16
      %v5139 = vand.u32 %v5135, 65535
      %v5140 = vshrl.u32 %v5135, 16
      %v5141 = vmul.u32 %v5137, %v5139
      %v5142 = vmul.u32 %v5137, %v5140
      %v5143 = vmul.u32 %v5138, %v5139
      %v5144 = vmul.u32 %v5138, %v5140
      %v5145 = vshll.u32 %v5142, 16
      %v5146 = vshrl.u32 %v5142, 16
      %v5147 = vshll.u32 %v5143, 16
      %v5148 = vshrl.u32 %v5143, 16
      %vm5149 = vc.u32 %v5141, %v5145
      %v5150 = vsel %vm5149, 1, 0
      %v5151 = vadd.s32 %v5141, %v5145
      %v5152 = vadd.s32 %v5144, %v5150
      %vm5153 = vc.u32 %v5151, %v5147
      %v5154 = vsel %vm5153, 1, 0
      %v5155 = vadd.s32 %v5151, %v5147
      %v5156 = vadd.s32 %v5152, %v5154
      %v5157 = vadd.s32 %v5156, %v5146
      %v5158 = vadd.s32 %v5157, %v5148
      %v5159 = vand.u32 %v5136, 65535
      %v5160 = vshrl.u32 %v5136, 16
      %v5161 = vand.u32 %v5131, 65535
      %v5162 = vshrl.u32 %v5131, 16
      %v5163 = vmul.u32 %v5159, %v5161
      %v5164 = vmul.u32 %v5159, %v5162
      %v5165 = vmul.u32 %v5160, %v5161
      %v5166 = vmul.u32 %v5160, %v5162
      %v5167 = vshll.u32 %v5164, 16
      %v5168 = vshrl.u32 %v5164, 16
      %v5169 = vshll.u32 %v5165, 16
      %v5170 = vshrl.u32 %v5165, 16
      %vm5171 = vc.u32 %v5163, %v5167
      %v5172 = vsel %vm5171, 1, 0
      %v5173 = vadd.s32 %v5163, %v5167
      %v5174 = vadd.s32 %v5166, %v5172
      %vm5175 = vc.u32 %v5173, %v5169
      %v5176 = vsel %vm5175, 1, 0
      %v5177 = vadd.s32 %v5173, %v5169
      %v5178 = vadd.s32 %v5174, %v5176
      %v5179 = vadd.s32 %v5178, %v5168
      %v5180 = vadd.s32 %v5179, %v5170
      %v5181 = vmul.u32 %v5136, %v5127
      %v5182 = vadd.s32 %v5158, %v5177
      %vm5183 = vc.u32 %v5158, %v5177
      %v5184 = vadd.s32 %v5180, 1
      %v5185 = vsel %vm5183, %v5184, %v5180
      %v5186 = vadd.s32 %v5181, %v5185
      %v5187 = vadd.s32 %v5186, 536870912
      %v5188 = vshrl.u32 %v5187, 30
      %v5189 = vshll.u32 %v5188, 30
      %v5190 = vsub.s32 %v5186, %v5189
      %vm5191 = vcmp.lt.s32.totalorder %v5190, 0
      %v5192 = vsub.s32 0, %v5190
      %v5193 = vsel %vm5191, %v5192, %v5190
      %v5194 = vclz %v5193
      %v5195 = vsub.s32 %v5194, 2
      %vm5196 = vcmp.gt.s32.totalorder 0, %v5195
      %v5197 = vsel %vm5196, 0, %v5195
      %v5198 = vsub.s32 32, %v5197
      %v5199 = vshll.u32 %v5190, %v5197
      %v5200 = vshrl.u32 %v5182, %v5198
      %v5201 = vor.u32 %v5199, %v5200
      %v5202 = vsub.s32 4294967266, %v5197
      %v5203 = vadd.s32 %v5202, 127
      %v5204 = vshll.u32 %v5203, 23
      %v5205 = vor.u32 4788187, %v5204
      %v5206 = vand.u32 2147483647, %v5205
      %v5208 = vcvt.s32.f32 %v5201
      %v5209 = vmul.f32 %v5208, %v5206
      %v5210 = vxor.u32 %v5209, 2147483648
      %v5211 = vsel %vm5090, %v5210, %v5209
      %v5212 = vsub.s32 4, %v5188
      %v5213 = vsel %vm5090, %v5212, %v5188
      %v5214 = vsel %vm5089, %v1206, %v5211
      %v5215 = vsel %vm5089, 0, %v5213
      %v5216 = vmul.f32 %v5214, %v5214
      %v5217 = vmul.f32 %v5216, -0.001358992
      %v5218 = vadd.f32 %v5217, 0.041655596
      %v5219 = vmul.f32 %v5216, %v5218
      %v5220 = vadd.f32 %v5219, -0.4999988
      %v5221 = vmul.f32 %v5216, %v5220
      %v5222 = vadd.f32 1.0, %v5221
      %v5223 = vmul.f32 %v5214, %v5214
      %v5224 = vmul.f32 %v5223, -0.00019511016
      %v5225 = vadd.f32 %v5224, 0.008332121
      %v5226 = vmul.f32 %v5223, %v5225
      %v5227 = vadd.f32 %v5226, -0.16666654
      %v5228 = vmul.f32 %v5223, %v5227
      %v5229 = vadd.f32 %v5228, 1.0
      %v5230 = vmul.f32 %v5229, %v5214
      %vm5231 = vweird.f32 %v1206
      %v5232 = vadd.s32 %v5215, 3
      %v5233 = vand.u32 %v5232, 3
      %vm5234 = vcmp.lt.s32.totalorder %v5233, 2
      %vm5235 = vcmp.eq.s32.totalorder %v5233, 0
      %v5236 = vxor.u32 %v5230, 2147483648
      %v5237 = vsel %vm5235, %v5222, %v5236
      %vm5238 = vcmp.eq.s32.totalorder %v5233, 2
      %v5239 = vxor.u32 %v5222, 2147483648
      %v5240 = vsel %vm5238, %v5239, %v5230
      %v5241 = vsel %vm5234, %v5237, %v5240
      %v5242 = vsel %vm5231, nan, %v5241
      %v5243 = vand.u32 2147483647, %v1207
      %vm5244 = vcmp.le.f32.partialorder %v5243, 0.7853982
      %vm5245 = vcmp.lt.s32.totalorder %v1207, 0
      %v5246 = vand.u32 %v1207, 2139095040
      %v5247 = vshrl.u32 %v5246, 23
      %v5248 = vsub.s32 %v5247, 127
      %v5249 = vand.u32 2147483647, %v1207
      %v5250 = vand.u32 %v5249, 8388607
      %v5251 = vor.u32 %v5250, 8388608
      %v5252 = vsub.s32 0, %v5251
      %v5253 = vadd.s32 %v5248, 1
      %vm5254 = vcmp.gt.s32.totalorder %v5253, 0
      %v5255 = vsel %vm5254, %v5253, 0
      %v5256 = vshrl.u32 %v5255, 5
      %v5257 = vand.u32 %v5255, 31
      %v5258 = vsub.s32 32, %v5257
      %v5259 = vshrl.u32 683565275, %v5258
      %v5260 = vshll.u32 683565275, %v5257
      %v5261 = vshrl.u32 2475754826, %v5258
      %v5262 = vor.u32 %v5260, %v5261
      %v5263 = vshll.u32 2475754826, %v5257
      %v5264 = vshrl.u32 2131351028, %v5258
      %v5265 = vor.u32 %v5263, %v5264
      %v5266 = vshll.u32 2131351028, %v5257
      %v5267 = vshrl.u32 2102212464, %v5258
      %v5268 = vor.u32 %v5266, %v5267
      %v5269 = vshll.u32 2102212464, %v5257
      %v5270 = vshrl.u32 920167782, %v5258
      %v5271 = vor.u32 %v5269, %v5270
      %v5272 = vshll.u32 920167782, %v5257
      %v5273 = vshrl.u32 1326507024, %v5258
      %v5274 = vor.u32 %v5272, %v5273
      %vm5275 = vcmp.lt.s32.totalorder %v5256, 1
      %vm5276 = vcmp.lt.s32.totalorder %v5256, 2
      %vm5277 = vcmp.lt.s32.totalorder %v5256, 3
      %vm5278 = vcmp.lt.s32.totalorder %v5256, 4
      %v5279 = vsel %vm5275, %v5259, %v5262
      %v5280 = vsel %vm5278, %v5268, 2102212464
      %v5281 = vsel %vm5277, %v5265, %v5280
      %v5282 = vsel %vm5276, %v5279, %v5281
      %v5283 = vsel %vm5275, %v5262, %v5265
      %v5284 = vsel %vm5278, %v5271, 920167782
      %v5285 = vsel %vm5277, %v5268, %v5284
      %v5286 = vsel %vm5276, %v5283, %v5285
      %v5287 = vsel %vm5275, %v5265, %v5268
      %v5288 = vsel %vm5278, %v5274, 1326507024
      %v5289 = vsel %vm5277, %v5271, %v5288
      %v5290 = vsel %vm5276, %v5287, %v5289
      %v5291 = vshll.u32 %v5251, 8
      %v5292 = vand.u32 %v5291, 65535
      %v5293 = vshrl.u32 %v5291, 16
      %v5294 = vand.u32 %v5290, 65535
      %v5295 = vshrl.u32 %v5290, 16
      %v5296 = vmul.u32 %v5292, %v5294
      %v5297 = vmul.u32 %v5292, %v5295
      %v5298 = vmul.u32 %v5293, %v5294
      %v5299 = vmul.u32 %v5293, %v5295
      %v5300 = vshll.u32 %v5297, 16
      %v5301 = vshrl.u32 %v5297, 16
      %v5302 = vshll.u32 %v5298, 16
      %v5303 = vshrl.u32 %v5298, 16
      %vm5304 = vc.u32 %v5296, %v5300
      %v5305 = vsel %vm5304, 1, 0
      %v5306 = vadd.s32 %v5296, %v5300
      %v5307 = vadd.s32 %v5299, %v5305
      %vm5308 = vc.u32 %v5306, %v5302
      %v5309 = vsel %vm5308, 1, 0
      %v5310 = vadd.s32 %v5306, %v5302
      %v5311 = vadd.s32 %v5307, %v5309
      %v5312 = vadd.s32 %v5311, %v5301
      %v5313 = vadd.s32 %v5312, %v5303
      %v5314 = vand.u32 %v5291, 65535
      %v5315 = vshrl.u32 %v5291, 16
      %v5316 = vand.u32 %v5286, 65535
      %v5317 = vshrl.u32 %v5286, 16
      %v5318 = vmul.u32 %v5314, %v5316
      %v5319 = vmul.u32 %v5314, %v5317
      %v5320 = vmul.u32 %v5315, %v5316
      %v5321 = vmul.u32 %v5315, %v5317
      %v5322 = vshll.u32 %v5319, 16
      %v5323 = vshrl.u32 %v5319, 16
      %v5324 = vshll.u32 %v5320, 16
      %v5325 = vshrl.u32 %v5320, 16
      %vm5326 = vc.u32 %v5318, %v5322
      %v5327 = vsel %vm5326, 1, 0
      %v5328 = vadd.s32 %v5318, %v5322
      %v5329 = vadd.s32 %v5321, %v5327
      %vm5330 = vc.u32 %v5328, %v5324
      %v5331 = vsel %vm5330, 1, 0
      %v5332 = vadd.s32 %v5328, %v5324
      %v5333 = vadd.s32 %v5329, %v5331
      %v5334 = vadd.s32 %v5333, %v5323
      %v5335 = vadd.s32 %v5334, %v5325
      %v5336 = vmul.u32 %v5291, %v5282
      %v5337 = vadd.s32 %v5313, %v5332
      %vm5338 = vc.u32 %v5313, %v5332
      %v5339 = vadd.s32 %v5335, 1
      %v5340 = vsel %vm5338, %v5339, %v5335
      %v5341 = vadd.s32 %v5336, %v5340
      %v5342 = vadd.s32 %v5341, 536870912
      %v5343 = vshrl.u32 %v5342, 30
      %v5344 = vshll.u32 %v5343, 30
      %v5345 = vsub.s32 %v5341, %v5344
      %vm5346 = vcmp.lt.s32.totalorder %v5345, 0
      %v5347 = vsub.s32 0, %v5345
      %v5348 = vsel %vm5346, %v5347, %v5345
      %v5349 = vclz %v5348
      %v5350 = vsub.s32 %v5349, 2
      %vm5351 = vcmp.gt.s32.totalorder 0, %v5350
      %v5352 = vsel %vm5351, 0, %v5350
      %v5353 = vsub.s32 32, %v5352
      %v5354 = vshll.u32 %v5345, %v5352
      %v5355 = vshrl.u32 %v5337, %v5353
      %v5356 = vor.u32 %v5354, %v5355
      %v5357 = vsub.s32 4294967266, %v5352
      %v5358 = vadd.s32 %v5357, 127
      %v5359 = vshll.u32 %v5358, 23
      %v5360 = vor.u32 4788187, %v5359
      %v5361 = vand.u32 2147483647, %v5360
      %v5363 = vcvt.s32.f32 %v5356
      %v5364 = vmul.f32 %v5363, %v5361
      %v5365 = vxor.u32 %v5364, 2147483648
      %v5366 = vsel %vm5245, %v5365, %v5364
      %v5367 = vsub.s32 4, %v5343
      %v5368 = vsel %vm5245, %v5367, %v5343
      %v5369 = vsel %vm5244, %v1207, %v5366
      %v5370 = vsel %vm5244, 0, %v5368
      %v5371 = vmul.f32 %v5369, %v5369
      %v5372 = vmul.f32 %v5371, -0.001358992
      %v5373 = vadd.f32 %v5372, 0.041655596
      %v5374 = vmul.f32 %v5371, %v5373
      %v5375 = vadd.f32 %v5374, -0.4999988
      %v5376 = vmul.f32 %v5371, %v5375
      %v5377 = vadd.f32 1.0, %v5376
      %v5378 = vmul.f32 %v5369, %v5369
      %v5379 = vmul.f32 %v5378, -0.00019511016
      %v5380 = vadd.f32 %v5379, 0.008332121
      %v5381 = vmul.f32 %v5378, %v5380
      %v5382 = vadd.f32 %v5381, -0.16666654
      %v5383 = vmul.f32 %v5378, %v5382
      %v5384 = vadd.f32 %v5383, 1.0
      %v5385 = vmul.f32 %v5384, %v5369
      %vm5386 = vweird.f32 %v1207
      %v5387 = vadd.s32 %v5370, 3
      %v5388 = vand.u32 %v5387, 3
      %vm5389 = vcmp.lt.s32.totalorder %v5388, 2
      %vm5390 = vcmp.eq.s32.totalorder %v5388, 0
      %v5391 = vxor.u32 %v5385, 2147483648
      %v5392 = vsel %vm5390, %v5377, %v5391
      %vm5393 = vcmp.eq.s32.totalorder %v5388, 2
      %v5394 = vxor.u32 %v5377, 2147483648
      %v5395 = vsel %vm5393, %v5394, %v5385
      %v5396 = vsel %vm5389, %v5392, %v5395
      %v5397 = vsel %vm5386, nan, %v5396
      %v5398 = vand.u32 2147483647, %v1208
      %vm5399 = vcmp.le.f32.partialorder %v5398, 0.7853982
      %vm5400 = vcmp.lt.s32.totalorder %v1208, 0
      %v5401 = vand.u32 %v1208, 2139095040
      %v5402 = vshrl.u32 %v5401, 23
      %v5403 = vsub.s32 %v5402, 127
      %v5404 = vand.u32 2147483647, %v1208
      %v5405 = vand.u32 %v5404, 8388607
      %v5406 = vor.u32 %v5405, 8388608
      %v5407 = vsub.s32 0, %v5406
      %v5408 = vadd.s32 %v5403, 1
      %vm5409 = vcmp.gt.s32.totalorder %v5408, 0
      %v5410 = vsel %vm5409, %v5408, 0
      %v5411 = vshrl.u32 %v5410, 5
      %v5412 = vand.u32 %v5410, 31
      %v5413 = vsub.s32 32, %v5412
      %v5414 = vshrl.u32 683565275, %v5413
      %v5415 = vshll.u32 683565275, %v5412
      %v5416 = vshrl.u32 2475754826, %v5413
      %v5417 = vor.u32 %v5415, %v5416
      %v5418 = vshll.u32 2475754826, %v5412
      %v5419 = vshrl.u32 2131351028, %v5413
      %v5420 = vor.u32 %v5418, %v5419
      %v5421 = vshll.u32 2131351028, %v5412
      %v5422 = vshrl.u32 2102212464, %v5413
      %v5423 = vor.u32 %v5421, %v5422
      %v5424 = vshll.u32 2102212464, %v5412
      %v5425 = vshrl.u32 920167782, %v5413
      %v5426 = vor.u32 %v5424, %v5425
      %v5427 = vshll.u32 920167782, %v5412
      %v5428 = vshrl.u32 1326507024, %v5413
      %v5429 = vor.u32 %v5427, %v5428
      %vm5430 = vcmp.lt.s32.totalorder %v5411, 1
      %vm5431 = vcmp.lt.s32.totalorder %v5411, 2
      %vm5432 = vcmp.lt.s32.totalorder %v5411, 3
      %vm5433 = vcmp.lt.s32.totalorder %v5411, 4
      %v5434 = vsel %vm5430, %v5414, %v5417
      %v5435 = vsel %vm5433, %v5423, 2102212464
      %v5436 = vsel %vm5432, %v5420, %v5435
      %v5437 = vsel %vm5431, %v5434, %v5436
      %v5438 = vsel %vm5430, %v5417, %v5420
      %v5439 = vsel %vm5433, %v5426, 920167782
      %v5440 = vsel %vm5432, %v5423, %v5439
      %v5441 = vsel %vm5431, %v5438, %v5440
      %v5442 = vsel %vm5430, %v5420, %v5423
      %v5443 = vsel %vm5433, %v5429, 1326507024
      %v5444 = vsel %vm5432, %v5426, %v5443
      %v5445 = vsel %vm5431, %v5442, %v5444
      %v5446 = vshll.u32 %v5406, 8
      %v5447 = vand.u32 %v5446, 65535
      %v5448 = vshrl.u32 %v5446, 16
      %v5449 = vand.u32 %v5445, 65535
      %v5450 = vshrl.u32 %v5445, 16
      %v5451 = vmul.u32 %v5447, %v5449
      %v5452 = vmul.u32 %v5447, %v5450
      %v5453 = vmul.u32 %v5448, %v5449
      %v5454 = vmul.u32 %v5448, %v5450
      %v5455 = vshll.u32 %v5452, 16
      %v5456 = vshrl.u32 %v5452, 16
      %v5457 = vshll.u32 %v5453, 16
      %v5458 = vshrl.u32 %v5453, 16
      %vm5459 = vc.u32 %v5451, %v5455
      %v5460 = vsel %vm5459, 1, 0
      %v5461 = vadd.s32 %v5451, %v5455
      %v5462 = vadd.s32 %v5454, %v5460
      %vm5463 = vc.u32 %v5461, %v5457
      %v5464 = vsel %vm5463, 1, 0
      %v5465 = vadd.s32 %v5461, %v5457
      %v5466 = vadd.s32 %v5462, %v5464
      %v5467 = vadd.s32 %v5466, %v5456
      %v5468 = vadd.s32 %v5467, %v5458
      %v5469 = vand.u32 %v5446, 65535
      %v5470 = vshrl.u32 %v5446, 16
      %v5471 = vand.u32 %v5441, 65535
      %v5472 = vshrl.u32 %v5441, 16
      %v5473 = vmul.u32 %v5469, %v5471
      %v5474 = vmul.u32 %v5469, %v5472
      %v5475 = vmul.u32 %v5470, %v5471
      %v5476 = vmul.u32 %v5470, %v5472
      %v5477 = vshll.u32 %v5474, 16
      %v5478 = vshrl.u32 %v5474, 16
      %v5479 = vshll.u32 %v5475, 16
      %v5480 = vshrl.u32 %v5475, 16
      %vm5481 = vc.u32 %v5473, %v5477
      %v5482 = vsel %vm5481, 1, 0
      %v5483 = vadd.s32 %v5473, %v5477
      %v5484 = vadd.s32 %v5476, %v5482
      %vm5485 = vc.u32 %v5483, %v5479
      %v5486 = vsel %vm5485, 1, 0
      %v5487 = vadd.s32 %v5483, %v5479
      %v5488 = vadd.s32 %v5484, %v5486
      %v5489 = vadd.s32 %v5488, %v5478
      %v5490 = vadd.s32 %v5489, %v5480
      %v5491 = vmul.u32 %v5446, %v5437
      %v5492 = vadd.s32 %v5468, %v5487
      %vm5493 = vc.u32 %v5468, %v5487
      %v5494 = vadd.s32 %v5490, 1
      %v5495 = vsel %vm5493, %v5494, %v5490
      %v5496 = vadd.s32 %v5491, %v5495
      %v5497 = vadd.s32 %v5496, 536870912
      %v5498 = vshrl.u32 %v5497, 30
      %v5499 = vshll.u32 %v5498, 30
      %v5500 = vsub.s32 %v5496, %v5499
      %vm5501 = vcmp.lt.s32.totalorder %v5500, 0
      %v5502 = vsub.s32 0, %v5500
      %v5503 = vsel %vm5501, %v5502, %v5500
      %v5504 = vclz %v5503
      %v5505 = vsub.s32 %v5504, 2
      %vm5506 = vcmp.gt.s32.totalorder 0, %v5505
      %v5507 = vsel %vm5506, 0, %v5505
      %v5508 = vsub.s32 32, %v5507
      %v5509 = vshll.u32 %v5500, %v5507
      %v5510 = vshrl.u32 %v5492, %v5508
      %v5511 = vor.u32 %v5509, %v5510
      %v5512 = vsub.s32 4294967266, %v5507
      %v5513 = vadd.s32 %v5512, 127
      %v5514 = vshll.u32 %v5513, 23
      %v5515 = vor.u32 4788187, %v5514
      %v5516 = vand.u32 2147483647, %v5515
      %v5518 = vcvt.s32.f32 %v5511
      %v5519 = vmul.f32 %v5518, %v5516
      %v5520 = vxor.u32 %v5519, 2147483648
      %v5521 = vsel %vm5400, %v5520, %v5519
      %v5522 = vsub.s32 4, %v5498
      %v5523 = vsel %vm5400, %v5522, %v5498
      %v5524 = vsel %vm5399, %v1208, %v5521
      %v5525 = vsel %vm5399, 0, %v5523
      %v5526 = vmul.f32 %v5524, %v5524
      %v5527 = vmul.f32 %v5526, -0.001358992
      %v5528 = vadd.f32 %v5527, 0.041655596
      %v5529 = vmul.f32 %v5526, %v5528
      %v5530 = vadd.f32 %v5529, -0.4999988
      %v5531 = vmul.f32 %v5526, %v5530
      %v5532 = vadd.f32 1.0, %v5531
      %v5533 = vmul.f32 %v5524, %v5524
      %v5534 = vmul.f32 %v5533, -0.00019511016
      %v5535 = vadd.f32 %v5534, 0.008332121
      %v5536 = vmul.f32 %v5533, %v5535
      %v5537 = vadd.f32 %v5536, -0.16666654
      %v5538 = vmul.f32 %v5533, %v5537
      %v5539 = vadd.f32 %v5538, 1.0
      %v5540 = vmul.f32 %v5539, %v5524
      %vm5541 = vweird.f32 %v1208
      %v5542 = vadd.s32 %v5525, 3
      %v5543 = vand.u32 %v5542, 3
      %vm5544 = vcmp.lt.s32.totalorder %v5543, 2
      %vm5545 = vcmp.eq.s32.totalorder %v5543, 0
      %v5546 = vxor.u32 %v5540, 2147483648
      %v5547 = vsel %vm5545, %v5532, %v5546
      %vm5548 = vcmp.eq.s32.totalorder %v5543, 2
      %v5549 = vxor.u32 %v5532, 2147483648
      %v5550 = vsel %vm5548, %v5549, %v5540
      %v5551 = vsel %vm5544, %v5547, %v5550
      %v5552 = vsel %vm5541, nan, %v5551
      %v5553 = vand.u32 2147483647, %v1209
      %vm5554 = vcmp.le.f32.partialorder %v5553, 0.7853982
      %vm5555 = vcmp.lt.s32.totalorder %v1209, 0
      %v5556 = vand.u32 %v1209, 2139095040
      %v5557 = vshrl.u32 %v5556, 23
      %v5558 = vsub.s32 %v5557, 127
      %v5559 = vand.u32 2147483647, %v1209
      %v5560 = vand.u32 %v5559, 8388607
      %v5561 = vor.u32 %v5560, 8388608
      %v5562 = vsub.s32 0, %v5561
      %v5563 = vadd.s32 %v5558, 1
      %vm5564 = vcmp.gt.s32.totalorder %v5563, 0
      %v5565 = vsel %vm5564, %v5563, 0
      %v5566 = vshrl.u32 %v5565, 5
      %v5567 = vand.u32 %v5565, 31
      %v5568 = vsub.s32 32, %v5567
      %v5569 = vshrl.u32 683565275, %v5568
      %v5570 = vshll.u32 683565275, %v5567
      %v5571 = vshrl.u32 2475754826, %v5568
      %v5572 = vor.u32 %v5570, %v5571
      %v5573 = vshll.u32 2475754826, %v5567
      %v5574 = vshrl.u32 2131351028, %v5568
      %v5575 = vor.u32 %v5573, %v5574
      %v5576 = vshll.u32 2131351028, %v5567
      %v5577 = vshrl.u32 2102212464, %v5568
      %v5578 = vor.u32 %v5576, %v5577
      %v5579 = vshll.u32 2102212464, %v5567
      %v5580 = vshrl.u32 920167782, %v5568
      %v5581 = vor.u32 %v5579, %v5580
      %v5582 = vshll.u32 920167782, %v5567
      %v5583 = vshrl.u32 1326507024, %v5568
      %v5584 = vor.u32 %v5582, %v5583
      %vm5585 = vcmp.lt.s32.totalorder %v5566, 1
      %vm5586 = vcmp.lt.s32.totalorder %v5566, 2
      %vm5587 = vcmp.lt.s32.totalorder %v5566, 3
      %vm5588 = vcmp.lt.s32.totalorder %v5566, 4
      %v5589 = vsel %vm5585, %v5569, %v5572
      %v5590 = vsel %vm5588, %v5578, 2102212464
      %v5591 = vsel %vm5587, %v5575, %v5590
      %v5592 = vsel %vm5586, %v5589, %v5591
      %v5593 = vsel %vm5585, %v5572, %v5575
      %v5594 = vsel %vm5588, %v5581, 920167782
      %v5595 = vsel %vm5587, %v5578, %v5594
      %v5596 = vsel %vm5586, %v5593, %v5595
      %v5597 = vsel %vm5585, %v5575, %v5578
      %v5598 = vsel %vm5588, %v5584, 1326507024
      %v5599 = vsel %vm5587, %v5581, %v5598
      %v5600 = vsel %vm5586, %v5597, %v5599
      %v5601 = vshll.u32 %v5561, 8
      %v5602 = vand.u32 %v5601, 65535
      %v5603 = vshrl.u32 %v5601, 16
      %v5604 = vand.u32 %v5600, 65535
      %v5605 = vshrl.u32 %v5600, 16
      %v5606 = vmul.u32 %v5602, %v5604
      %v5607 = vmul.u32 %v5602, %v5605
      %v5608 = vmul.u32 %v5603, %v5604
      %v5609 = vmul.u32 %v5603, %v5605
      %v5610 = vshll.u32 %v5607, 16
      %v5611 = vshrl.u32 %v5607, 16
      %v5612 = vshll.u32 %v5608, 16
      %v5613 = vshrl.u32 %v5608, 16
      %vm5614 = vc.u32 %v5606, %v5610
      %v5615 = vsel %vm5614, 1, 0
      %v5616 = vadd.s32 %v5606, %v5610
      %v5617 = vadd.s32 %v5609, %v5615
      %vm5618 = vc.u32 %v5616, %v5612
      %v5619 = vsel %vm5618, 1, 0
      %v5620 = vadd.s32 %v5616, %v5612
      %v5621 = vadd.s32 %v5617, %v5619
      %v5622 = vadd.s32 %v5621, %v5611
      %v5623 = vadd.s32 %v5622, %v5613
      %v5624 = vand.u32 %v5601, 65535
      %v5625 = vshrl.u32 %v5601, 16
      %v5626 = vand.u32 %v5596, 65535
      %v5627 = vshrl.u32 %v5596, 16
      %v5628 = vmul.u32 %v5624, %v5626
      %v5629 = vmul.u32 %v5624, %v5627
      %v5630 = vmul.u32 %v5625, %v5626
      %v5631 = vmul.u32 %v5625, %v5627
      %v5632 = vshll.u32 %v5629, 16
      %v5633 = vshrl.u32 %v5629, 16
      %v5634 = vshll.u32 %v5630, 16
      %v5635 = vshrl.u32 %v5630, 16
      %vm5636 = vc.u32 %v5628, %v5632
      %v5637 = vsel %vm5636, 1, 0
      %v5638 = vadd.s32 %v5628, %v5632
      %v5639 = vadd.s32 %v5631, %v5637
      %vm5640 = vc.u32 %v5638, %v5634
      %v5641 = vsel %vm5640, 1, 0
      %v5642 = vadd.s32 %v5638, %v5634
      %v5643 = vadd.s32 %v5639, %v5641
      %v5644 = vadd.s32 %v5643, %v5633
      %v5645 = vadd.s32 %v5644, %v5635
      %v5646 = vmul.u32 %v5601, %v5592
      %v5647 = vadd.s32 %v5623, %v5642
      %vm5648 = vc.u32 %v5623, %v5642
      %v5649 = vadd.s32 %v5645, 1
      %v5650 = vsel %vm5648, %v5649, %v5645
      %v5651 = vadd.s32 %v5646, %v5650
      %v5652 = vadd.s32 %v5651, 536870912
      %v5653 = vshrl.u32 %v5652, 30
      %v5654 = vshll.u32 %v5653, 30
      %v5655 = vsub.s32 %v5651, %v5654
      %vm5656 = vcmp.lt.s32.totalorder %v5655, 0
      %v5657 = vsub.s32 0, %v5655
      %v5658 = vsel %vm5656, %v5657, %v5655
      %v5659 = vclz %v5658
      %v5660 = vsub.s32 %v5659, 2
      %vm5661 = vcmp.gt.s32.totalorder 0, %v5660
      %v5662 = vsel %vm5661, 0, %v5660
      %v5663 = vsub.s32 32, %v5662
      %v5664 = vshll.u32 %v5655, %v5662
      %v5665 = vshrl.u32 %v5647, %v5663
      %v5666 = vor.u32 %v5664, %v5665
      %v5667 = vsub.s32 4294967266, %v5662
      %v5668 = vadd.s32 %v5667, 127
      %v5669 = vshll.u32 %v5668, 23
      %v5670 = vor.u32 4788187, %v5669
      %v5671 = vand.u32 2147483647, %v5670
      %v5673 = vcvt.s32.f32 %v5666
      %v5674 = vmul.f32 %v5673, %v5671
      %v5675 = vxor.u32 %v5674, 2147483648
      %v5676 = vsel %vm5555, %v5675, %v5674
      %v5677 = vsub.s32 4, %v5653
      %v5678 = vsel %vm5555, %v5677, %v5653
      %v5679 = vsel %vm5554, %v1209, %v5676
      %v5680 = vsel %vm5554, 0, %v5678
      %v5681 = vmul.f32 %v5679, %v5679
      %v5682 = vmul.f32 %v5681, -0.001358992
      %v5683 = vadd.f32 %v5682, 0.041655596
      %v5684 = vmul.f32 %v5681, %v5683
      %v5685 = vadd.f32 %v5684, -0.4999988
      %v5686 = vmul.f32 %v5681, %v5685
      %v5687 = vadd.f32 1.0, %v5686
      %v5688 = vmul.f32 %v5679, %v5679
      %v5689 = vmul.f32 %v5688, -0.00019511016
      %v5690 = vadd.f32 %v5689, 0.008332121
      %v5691 = vmul.f32 %v5688, %v5690
      %v5692 = vadd.f32 %v5691, -0.16666654
      %v5693 = vmul.f32 %v5688, %v5692
      %v5694 = vadd.f32 %v5693, 1.0
      %v5695 = vmul.f32 %v5694, %v5679
      %vm5696 = vweird.f32 %v1209
      %v5697 = vadd.s32 %v5680, 3
      %v5698 = vand.u32 %v5697, 3
      %vm5699 = vcmp.lt.s32.totalorder %v5698, 2
      %vm5700 = vcmp.eq.s32.totalorder %v5698, 0
      %v5701 = vxor.u32 %v5695, 2147483648
      %v5702 = vsel %vm5700, %v5687, %v5701
      %vm5703 = vcmp.eq.s32.totalorder %v5698, 2
      %v5704 = vxor.u32 %v5687, 2147483648
      %v5705 = vsel %vm5703, %v5704, %v5695
      %v5706 = vsel %vm5699, %v5702, %v5705
      %v5707 = vsel %vm5696, nan, %v5706
      %v5708 = vand.u32 2147483647, %v1210
      %vm5709 = vcmp.le.f32.partialorder %v5708, 0.7853982
      %vm5710 = vcmp.lt.s32.totalorder %v1210, 0
      %v5711 = vand.u32 %v1210, 2139095040
      %v5712 = vshrl.u32 %v5711, 23
      %v5713 = vsub.s32 %v5712, 127
      %v5714 = vand.u32 2147483647, %v1210
      %v5715 = vand.u32 %v5714, 8388607
      %v5716 = vor.u32 %v5715, 8388608
      %v5717 = vsub.s32 0, %v5716
      %v5718 = vadd.s32 %v5713, 1
      %vm5719 = vcmp.gt.s32.totalorder %v5718, 0
      %v5720 = vsel %vm5719, %v5718, 0
      %v5721 = vshrl.u32 %v5720, 5
      %v5722 = vand.u32 %v5720, 31
      %v5723 = vsub.s32 32, %v5722
      %v5724 = vshrl.u32 683565275, %v5723
      %v5725 = vshll.u32 683565275, %v5722
      %v5726 = vshrl.u32 2475754826, %v5723
      %v5727 = vor.u32 %v5725, %v5726
      %v5728 = vshll.u32 2475754826, %v5722
      %v5729 = vshrl.u32 2131351028, %v5723
      %v5730 = vor.u32 %v5728, %v5729
      %v5731 = vshll.u32 2131351028, %v5722
      %v5732 = vshrl.u32 2102212464, %v5723
      %v5733 = vor.u32 %v5731, %v5732
      %v5734 = vshll.u32 2102212464, %v5722
      %v5735 = vshrl.u32 920167782, %v5723
      %v5736 = vor.u32 %v5734, %v5735
      %v5737 = vshll.u32 920167782, %v5722
      %v5738 = vshrl.u32 1326507024, %v5723
      %v5739 = vor.u32 %v5737, %v5738
      %vm5740 = vcmp.lt.s32.totalorder %v5721, 1
      %vm5741 = vcmp.lt.s32.totalorder %v5721, 2
      %vm5742 = vcmp.lt.s32.totalorder %v5721, 3
      %vm5743 = vcmp.lt.s32.totalorder %v5721, 4
      %v5744 = vsel %vm5740, %v5724, %v5727
      %v5745 = vsel %vm5743, %v5733, 2102212464
      %v5746 = vsel %vm5742, %v5730, %v5745
      %v5747 = vsel %vm5741, %v5744, %v5746
      %v5748 = vsel %vm5740, %v5727, %v5730
      %v5749 = vsel %vm5743, %v5736, 920167782
      %v5750 = vsel %vm5742, %v5733, %v5749
      %v5751 = vsel %vm5741, %v5748, %v5750
      %v5752 = vsel %vm5740, %v5730, %v5733
      %v5753 = vsel %vm5743, %v5739, 1326507024
      %v5754 = vsel %vm5742, %v5736, %v5753
      %v5755 = vsel %vm5741, %v5752, %v5754
      %v5756 = vshll.u32 %v5716, 8
      %v5757 = vand.u32 %v5756, 65535
      %v5758 = vshrl.u32 %v5756, 16
      %v5759 = vand.u32 %v5755, 65535
      %v5760 = vshrl.u32 %v5755, 16
      %v5761 = vmul.u32 %v5757, %v5759
      %v5762 = vmul.u32 %v5757, %v5760
      %v5763 = vmul.u32 %v5758, %v5759
      %v5764 = vmul.u32 %v5758, %v5760
      %v5765 = vshll.u32 %v5762, 16
      %v5766 = vshrl.u32 %v5762, 16
      %v5767 = vshll.u32 %v5763, 16
      %v5768 = vshrl.u32 %v5763, 16
      %vm5769 = vc.u32 %v5761, %v5765
      %v5770 = vsel %vm5769, 1, 0
      %v5771 = vadd.s32 %v5761, %v5765
      %v5772 = vadd.s32 %v5764, %v5770
      %vm5773 = vc.u32 %v5771, %v5767
      %v5774 = vsel %vm5773, 1, 0
      %v5775 = vadd.s32 %v5771, %v5767
      %v5776 = vadd.s32 %v5772, %v5774
      %v5777 = vadd.s32 %v5776, %v5766
      %v5778 = vadd.s32 %v5777, %v5768
      %v5779 = vand.u32 %v5756, 65535
      %v5780 = vshrl.u32 %v5756, 16
      %v5781 = vand.u32 %v5751, 65535
      %v5782 = vshrl.u32 %v5751, 16
      %v5783 = vmul.u32 %v5779, %v5781
      %v5784 = vmul.u32 %v5779, %v5782
      %v5785 = vmul.u32 %v5780, %v5781
      %v5786 = vmul.u32 %v5780, %v5782
      %v5787 = vshll.u32 %v5784, 16
      %v5788 = vshrl.u32 %v5784, 16
      %v5789 = vshll.u32 %v5785, 16
      %v5790 = vshrl.u32 %v5785, 16
      %vm5791 = vc.u32 %v5783, %v5787
      %v5792 = vsel %vm5791, 1, 0
      %v5793 = vadd.s32 %v5783, %v5787
      %v5794 = vadd.s32 %v5786, %v5792
      %vm5795 = vc.u32 %v5793, %v5789
      %v5796 = vsel %vm5795, 1, 0
      %v5797 = vadd.s32 %v5793, %v5789
      %v5798 = vadd.s32 %v5794, %v5796
      %v5799 = vadd.s32 %v5798, %v5788
      %v5800 = vadd.s32 %v5799, %v5790
      %v5801 = vmul.u32 %v5756, %v5747
      %v5802 = vadd.s32 %v5778, %v5797
      %vm5803 = vc.u32 %v5778, %v5797
      %v5804 = vadd.s32 %v5800, 1
      %v5805 = vsel %vm5803, %v5804, %v5800
      %v5806 = vadd.s32 %v5801, %v5805
      %v5807 = vadd.s32 %v5806, 536870912
      %v5808 = vshrl.u32 %v5807, 30
      %v5809 = vshll.u32 %v5808, 30
      %v5810 = vsub.s32 %v5806, %v5809
      %vm5811 = vcmp.lt.s32.totalorder %v5810, 0
      %v5812 = vsub.s32 0, %v5810
      %v5813 = vsel %vm5811, %v5812, %v5810
      %v5814 = vclz %v5813
      %v5815 = vsub.s32 %v5814, 2
      %vm5816 = vcmp.gt.s32.totalorder 0, %v5815
      %v5817 = vsel %vm5816, 0, %v5815
      %v5818 = vsub.s32 32, %v5817
      %v5819 = vshll.u32 %v5810, %v5817
      %v5820 = vshrl.u32 %v5802, %v5818
      %v5821 = vor.u32 %v5819, %v5820
      %v5822 = vsub.s32 4294967266, %v5817
      %v5823 = vadd.s32 %v5822, 127
      %v5824 = vshll.u32 %v5823, 23
      %v5825 = vor.u32 4788187, %v5824
      %v5826 = vand.u32 2147483647, %v5825
      %v5828 = vcvt.s32.f32 %v5821
      %v5829 = vmul.f32 %v5828, %v5826
      %v5830 = vxor.u32 %v5829, 2147483648
      %v5831 = vsel %vm5710, %v5830, %v5829
      %v5832 = vsub.s32 4, %v5808
      %v5833 = vsel %vm5710, %v5832, %v5808
      %v5834 = vsel %vm5709, %v1210, %v5831
      %v5835 = vsel %vm5709, 0, %v5833
      %v5836 = vmul.f32 %v5834, %v5834
      %v5837 = vmul.f32 %v5836, -0.001358992
      %v5838 = vadd.f32 %v5837, 0.041655596
      %v5839 = vmul.f32 %v5836, %v5838
      %v5840 = vadd.f32 %v5839, -0.4999988
      %v5841 = vmul.f32 %v5836, %v5840
      %v5842 = vadd.f32 1.0, %v5841
      %v5843 = vmul.f32 %v5834, %v5834
      %v5844 = vmul.f32 %v5843, -0.00019511016
      %v5845 = vadd.f32 %v5844, 0.008332121
      %v5846 = vmul.f32 %v5843, %v5845
      %v5847 = vadd.f32 %v5846, -0.16666654
      %v5848 = vmul.f32 %v5843, %v5847
      %v5849 = vadd.f32 %v5848, 1.0
      %v5850 = vmul.f32 %v5849, %v5834
      %vm5851 = vweird.f32 %v1210
      %v5852 = vadd.s32 %v5835, 3
      %v5853 = vand.u32 %v5852, 3
      %vm5854 = vcmp.lt.s32.totalorder %v5853, 2
      %vm5855 = vcmp.eq.s32.totalorder %v5853, 0
      %v5856 = vxor.u32 %v5850, 2147483648
      %v5857 = vsel %vm5855, %v5842, %v5856
      %vm5858 = vcmp.eq.s32.totalorder %v5853, 2
      %v5859 = vxor.u32 %v5842, 2147483648
      %v5860 = vsel %vm5858, %v5859, %v5850
      %v5861 = vsel %vm5854, %v5857, %v5860
      %v5862 = vsel %vm5851, nan, %v5861
      %v5863 = vand.u32 2147483647, %v1211
      %vm5864 = vcmp.le.f32.partialorder %v5863, 0.7853982
      %vm5865 = vcmp.lt.s32.totalorder %v1211, 0
      %v5866 = vand.u32 %v1211, 2139095040
      %v5867 = vshrl.u32 %v5866, 23
      %v5868 = vsub.s32 %v5867, 127
      %v5869 = vand.u32 2147483647, %v1211
      %v5870 = vand.u32 %v5869, 8388607
      %v5871 = vor.u32 %v5870, 8388608
      %v5872 = vsub.s32 0, %v5871
      %v5873 = vadd.s32 %v5868, 1
      %vm5874 = vcmp.gt.s32.totalorder %v5873, 0
      %v5875 = vsel %vm5874, %v5873, 0
      %v5876 = vshrl.u32 %v5875, 5
      %v5877 = vand.u32 %v5875, 31
      %v5878 = vsub.s32 32, %v5877
      %v5879 = vshrl.u32 683565275, %v5878
      %v5880 = vshll.u32 683565275, %v5877
      %v5881 = vshrl.u32 2475754826, %v5878
      %v5882 = vor.u32 %v5880, %v5881
      %v5883 = vshll.u32 2475754826, %v5877
      %v5884 = vshrl.u32 2131351028, %v5878
      %v5885 = vor.u32 %v5883, %v5884
      %v5886 = vshll.u32 2131351028, %v5877
      %v5887 = vshrl.u32 2102212464, %v5878
      %v5888 = vor.u32 %v5886, %v5887
      %v5889 = vshll.u32 2102212464, %v5877
      %v5890 = vshrl.u32 920167782, %v5878
      %v5891 = vor.u32 %v5889, %v5890
      %v5892 = vshll.u32 920167782, %v5877
      %v5893 = vshrl.u32 1326507024, %v5878
      %v5894 = vor.u32 %v5892, %v5893
      %vm5895 = vcmp.lt.s32.totalorder %v5876, 1
      %vm5896 = vcmp.lt.s32.totalorder %v5876, 2
      %vm5897 = vcmp.lt.s32.totalorder %v5876, 3
      %vm5898 = vcmp.lt.s32.totalorder %v5876, 4
      %v5899 = vsel %vm5895, %v5879, %v5882
      %v5900 = vsel %vm5898, %v5888, 2102212464
      %v5901 = vsel %vm5897, %v5885, %v5900
      %v5902 = vsel %vm5896, %v5899, %v5901
      %v5903 = vsel %vm5895, %v5882, %v5885
      %v5904 = vsel %vm5898, %v5891, 920167782
      %v5905 = vsel %vm5897, %v5888, %v5904
      %v5906 = vsel %vm5896, %v5903, %v5905
      %v5907 = vsel %vm5895, %v5885, %v5888
      %v5908 = vsel %vm5898, %v5894, 1326507024
      %v5909 = vsel %vm5897, %v5891, %v5908
      %v5910 = vsel %vm5896, %v5907, %v5909
      %v5911 = vshll.u32 %v5871, 8
      %v5912 = vand.u32 %v5911, 65535
      %v5913 = vshrl.u32 %v5911, 16
      %v5914 = vand.u32 %v5910, 65535
      %v5915 = vshrl.u32 %v5910, 16
      %v5916 = vmul.u32 %v5912, %v5914
      %v5917 = vmul.u32 %v5912, %v5915
      %v5918 = vmul.u32 %v5913, %v5914
      %v5919 = vmul.u32 %v5913, %v5915
      %v5920 = vshll.u32 %v5917, 16
      %v5921 = vshrl.u32 %v5917, 16
      %v5922 = vshll.u32 %v5918, 16
      %v5923 = vshrl.u32 %v5918, 16
      %vm5924 = vc.u32 %v5916, %v5920
      %v5925 = vsel %vm5924, 1, 0
      %v5926 = vadd.s32 %v5916, %v5920
      %v5927 = vadd.s32 %v5919, %v5925
      %vm5928 = vc.u32 %v5926, %v5922
      %v5929 = vsel %vm5928, 1, 0
      %v5930 = vadd.s32 %v5926, %v5922
      %v5931 = vadd.s32 %v5927, %v5929
      %v5932 = vadd.s32 %v5931, %v5921
      %v5933 = vadd.s32 %v5932, %v5923
      %v5934 = vand.u32 %v5911, 65535
      %v5935 = vshrl.u32 %v5911, 16
      %v5936 = vand.u32 %v5906, 65535
      %v5937 = vshrl.u32 %v5906, 16
      %v5938 = vmul.u32 %v5934, %v5936
      %v5939 = vmul.u32 %v5934, %v5937
      %v5940 = vmul.u32 %v5935, %v5936
      %v5941 = vmul.u32 %v5935, %v5937
      %v5942 = vshll.u32 %v5939, 16
      %v5943 = vshrl.u32 %v5939, 16
      %v5944 = vshll.u32 %v5940, 16
      %v5945 = vshrl.u32 %v5940, 16
      %vm5946 = vc.u32 %v5938, %v5942
      %v5947 = vsel %vm5946, 1, 0
      %v5948 = vadd.s32 %v5938, %v5942
      %v5949 = vadd.s32 %v5941, %v5947
      %vm5950 = vc.u32 %v5948, %v5944
      %v5951 = vsel %vm5950, 1, 0
      %v5952 = vadd.s32 %v5948, %v5944
      %v5953 = vadd.s32 %v5949, %v5951
      %v5954 = vadd.s32 %v5953, %v5943
      %v5955 = vadd.s32 %v5954, %v5945
      %v5956 = vmul.u32 %v5911, %v5902
      %v5957 = vadd.s32 %v5933, %v5952
      %vm5958 = vc.u32 %v5933, %v5952
      %v5959 = vadd.s32 %v5955, 1
      %v5960 = vsel %vm5958, %v5959, %v5955
      %v5961 = vadd.s32 %v5956, %v5960
      %v5962 = vadd.s32 %v5961, 536870912
      %v5963 = vshrl.u32 %v5962, 30
      %v5964 = vshll.u32 %v5963, 30
      %v5965 = vsub.s32 %v5961, %v5964
      %vm5966 = vcmp.lt.s32.totalorder %v5965, 0
      %v5967 = vsub.s32 0, %v5965
      %v5968 = vsel %vm5966, %v5967, %v5965
      %v5969 = vclz %v5968
      %v5970 = vsub.s32 %v5969, 2
      %vm5971 = vcmp.gt.s32.totalorder 0, %v5970
      %v5972 = vsel %vm5971, 0, %v5970
      %v5973 = vsub.s32 32, %v5972
      %v5974 = vshll.u32 %v5965, %v5972
      %v5975 = vshrl.u32 %v5957, %v5973
      %v5976 = vor.u32 %v5974, %v5975
      %v5977 = vsub.s32 4294967266, %v5972
      %v5978 = vadd.s32 %v5977, 127
      %v5979 = vshll.u32 %v5978, 23
      %v5980 = vor.u32 4788187, %v5979
      %v5981 = vand.u32 2147483647, %v5980
      %v5983 = vcvt.s32.f32 %v5976
      %v5984 = vmul.f32 %v5983, %v5981
      %v5985 = vxor.u32 %v5984, 2147483648
      %v5986 = vsel %vm5865, %v5985, %v5984
      %v5987 = vsub.s32 4, %v5963
      %v5988 = vsel %vm5865, %v5987, %v5963
      %v5989 = vsel %vm5864, %v1211, %v5986
      %v5990 = vsel %vm5864, 0, %v5988
      %v5991 = vmul.f32 %v5989, %v5989
      %v5992 = vmul.f32 %v5991, -0.001358992
      %v5993 = vadd.f32 %v5992, 0.041655596
      %v5994 = vmul.f32 %v5991, %v5993
      %v5995 = vadd.f32 %v5994, -0.4999988
      %v5996 = vmul.f32 %v5991, %v5995
      %v5997 = vadd.f32 1.0, %v5996
      %v5998 = vmul.f32 %v5989, %v5989
      %v5999 = vmul.f32 %v5998, -0.00019511016
      %v6000 = vadd.f32 %v5999, 0.008332121
      %v6001 = vmul.f32 %v5998, %v6000
      %v6002 = vadd.f32 %v6001, -0.16666654
      %v6003 = vmul.f32 %v5998, %v6002
      %v6004 = vadd.f32 %v6003, 1.0
      %v6005 = vmul.f32 %v6004, %v5989
      %vm6006 = vweird.f32 %v1211
      %v6007 = vadd.s32 %v5990, 3
      %v6008 = vand.u32 %v6007, 3
      %vm6009 = vcmp.lt.s32.totalorder %v6008, 2
      %vm6010 = vcmp.eq.s32.totalorder %v6008, 0
      %v6011 = vxor.u32 %v6005, 2147483648
      %v6012 = vsel %vm6010, %v5997, %v6011
      %vm6013 = vcmp.eq.s32.totalorder %v6008, 2
      %v6014 = vxor.u32 %v5997, 2147483648
      %v6015 = vsel %vm6013, %v6014, %v6005
      %v6016 = vsel %vm6009, %v6012, %v6015
      %v6017 = vsel %vm6006, nan, %v6016
      %v6018 = vand.u32 2147483647, %v1212
      %vm6019 = vcmp.le.f32.partialorder %v6018, 0.7853982
      %vm6020 = vcmp.lt.s32.totalorder %v1212, 0
      %v6021 = vand.u32 %v1212, 2139095040
      %v6022 = vshrl.u32 %v6021, 23
      %v6023 = vsub.s32 %v6022, 127
      %v6024 = vand.u32 2147483647, %v1212
      %v6025 = vand.u32 %v6024, 8388607
      %v6026 = vor.u32 %v6025, 8388608
      %v6027 = vsub.s32 0, %v6026
      %v6028 = vadd.s32 %v6023, 1
      %vm6029 = vcmp.gt.s32.totalorder %v6028, 0
      %v6030 = vsel %vm6029, %v6028, 0
      %v6031 = vshrl.u32 %v6030, 5
      %v6032 = vand.u32 %v6030, 31
      %v6033 = vsub.s32 32, %v6032
      %v6034 = vshrl.u32 683565275, %v6033
      %v6035 = vshll.u32 683565275, %v6032
      %v6036 = vshrl.u32 2475754826, %v6033
      %v6037 = vor.u32 %v6035, %v6036
      %v6038 = vshll.u32 2475754826, %v6032
      %v6039 = vshrl.u32 2131351028, %v6033
      %v6040 = vor.u32 %v6038, %v6039
      %v6041 = vshll.u32 2131351028, %v6032
      %v6042 = vshrl.u32 2102212464, %v6033
      %v6043 = vor.u32 %v6041, %v6042
      %v6044 = vshll.u32 2102212464, %v6032
      %v6045 = vshrl.u32 920167782, %v6033
      %v6046 = vor.u32 %v6044, %v6045
      %v6047 = vshll.u32 920167782, %v6032
      %v6048 = vshrl.u32 1326507024, %v6033
      %v6049 = vor.u32 %v6047, %v6048
      %vm6050 = vcmp.lt.s32.totalorder %v6031, 1
      %vm6051 = vcmp.lt.s32.totalorder %v6031, 2
      %vm6052 = vcmp.lt.s32.totalorder %v6031, 3
      %vm6053 = vcmp.lt.s32.totalorder %v6031, 4
      %v6054 = vsel %vm6050, %v6034, %v6037
      %v6055 = vsel %vm6053, %v6043, 2102212464
      %v6056 = vsel %vm6052, %v6040, %v6055
      %v6057 = vsel %vm6051, %v6054, %v6056
      %v6058 = vsel %vm6050, %v6037, %v6040
      %v6059 = vsel %vm6053, %v6046, 920167782
      %v6060 = vsel %vm6052, %v6043, %v6059
      %v6061 = vsel %vm6051, %v6058, %v6060
      %v6062 = vsel %vm6050, %v6040, %v6043
      %v6063 = vsel %vm6053, %v6049, 1326507024
      %v6064 = vsel %vm6052, %v6046, %v6063
      %v6065 = vsel %vm6051, %v6062, %v6064
      %v6066 = vshll.u32 %v6026, 8
      %v6067 = vand.u32 %v6066, 65535
      %v6068 = vshrl.u32 %v6066, 16
      %v6069 = vand.u32 %v6065, 65535
      %v6070 = vshrl.u32 %v6065, 16
      %v6071 = vmul.u32 %v6067, %v6069
      %v6072 = vmul.u32 %v6067, %v6070
      %v6073 = vmul.u32 %v6068, %v6069
      %v6074 = vmul.u32 %v6068, %v6070
      %v6075 = vshll.u32 %v6072, 16
      %v6076 = vshrl.u32 %v6072, 16
      %v6077 = vshll.u32 %v6073, 16
      %v6078 = vshrl.u32 %v6073, 16
      %vm6079 = vc.u32 %v6071, %v6075
      %v6080 = vsel %vm6079, 1, 0
      %v6081 = vadd.s32 %v6071, %v6075
      %v6082 = vadd.s32 %v6074, %v6080
      %vm6083 = vc.u32 %v6081, %v6077
      %v6084 = vsel %vm6083, 1, 0
      %v6085 = vadd.s32 %v6081, %v6077
      %v6086 = vadd.s32 %v6082, %v6084
      %v6087 = vadd.s32 %v6086, %v6076
      %v6088 = vadd.s32 %v6087, %v6078
      %v6089 = vand.u32 %v6066, 65535
      %v6090 = vshrl.u32 %v6066, 16
      %v6091 = vand.u32 %v6061, 65535
      %v6092 = vshrl.u32 %v6061, 16
      %v6093 = vmul.u32 %v6089, %v6091
      %v6094 = vmul.u32 %v6089, %v6092
      %v6095 = vmul.u32 %v6090, %v6091
      %v6096 = vmul.u32 %v6090, %v6092
      %v6097 = vshll.u32 %v6094, 16
      %v6098 = vshrl.u32 %v6094, 16
      %v6099 = vshll.u32 %v6095, 16
      %v6100 = vshrl.u32 %v6095, 16
      %vm6101 = vc.u32 %v6093, %v6097
      %v6102 = vsel %vm6101, 1, 0
      %v6103 = vadd.s32 %v6093, %v6097
      %v6104 = vadd.s32 %v6096, %v6102
      %vm6105 = vc.u32 %v6103, %v6099
      %v6106 = vsel %vm6105, 1, 0
      %v6107 = vadd.s32 %v6103, %v6099
      %v6108 = vadd.s32 %v6104, %v6106
      %v6109 = vadd.s32 %v6108, %v6098
      %v6110 = vadd.s32 %v6109, %v6100
      %v6111 = vmul.u32 %v6066, %v6057
      %v6112 = vadd.s32 %v6088, %v6107
      %vm6113 = vc.u32 %v6088, %v6107
      %v6114 = vadd.s32 %v6110, 1
      %v6115 = vsel %vm6113, %v6114, %v6110
      %v6116 = vadd.s32 %v6111, %v6115
      %v6117 = vadd.s32 %v6116, 536870912
      %v6118 = vshrl.u32 %v6117, 30
      %v6119 = vshll.u32 %v6118, 30
      %v6120 = vsub.s32 %v6116, %v6119
      %vm6121 = vcmp.lt.s32.totalorder %v6120, 0
      %v6122 = vsub.s32 0, %v6120
      %v6123 = vsel %vm6121, %v6122, %v6120
      %v6124 = vclz %v6123
      %v6125 = vsub.s32 %v6124, 2
      %vm6126 = vcmp.gt.s32.totalorder 0, %v6125
      %v6127 = vsel %vm6126, 0, %v6125
      %v6128 = vsub.s32 32, %v6127
      %v6129 = vshll.u32 %v6120, %v6127
      %v6130 = vshrl.u32 %v6112, %v6128
      %v6131 = vor.u32 %v6129, %v6130
      %v6132 = vsub.s32 4294967266, %v6127
      %v6133 = vadd.s32 %v6132, 127
      %v6134 = vshll.u32 %v6133, 23
      %v6135 = vor.u32 4788187, %v6134
      %v6136 = vand.u32 2147483647, %v6135
      %v6138 = vcvt.s32.f32 %v6131
      %v6139 = vmul.f32 %v6138, %v6136
      %v6140 = vxor.u32 %v6139, 2147483648
      %v6141 = vsel %vm6020, %v6140, %v6139
      %v6142 = vsub.s32 4, %v6118
      %v6143 = vsel %vm6020, %v6142, %v6118
      %v6144 = vsel %vm6019, %v1212, %v6141
      %v6145 = vsel %vm6019, 0, %v6143
      %v6146 = vmul.f32 %v6144, %v6144
      %v6147 = vmul.f32 %v6146, -0.001358992
      %v6148 = vadd.f32 %v6147, 0.041655596
      %v6149 = vmul.f32 %v6146, %v6148
      %v6150 = vadd.f32 %v6149, -0.4999988
      %v6151 = vmul.f32 %v6146, %v6150
      %v6152 = vadd.f32 1.0, %v6151
      %v6153 = vmul.f32 %v6144, %v6144
      %v6154 = vmul.f32 %v6153, -0.00019511016
      %v6155 = vadd.f32 %v6154, 0.008332121
      %v6156 = vmul.f32 %v6153, %v6155
      %v6157 = vadd.f32 %v6156, -0.16666654
      %v6158 = vmul.f32 %v6153, %v6157
      %v6159 = vadd.f32 %v6158, 1.0
      %v6160 = vmul.f32 %v6159, %v6144
      %vm6161 = vweird.f32 %v1212
      %v6162 = vadd.s32 %v6145, 3
      %v6163 = vand.u32 %v6162, 3
      %vm6164 = vcmp.lt.s32.totalorder %v6163, 2
      %vm6165 = vcmp.eq.s32.totalorder %v6163, 0
      %v6166 = vxor.u32 %v6160, 2147483648
      %v6167 = vsel %vm6165, %v6152, %v6166
      %vm6168 = vcmp.eq.s32.totalorder %v6163, 2
      %v6169 = vxor.u32 %v6152, 2147483648
      %v6170 = vsel %vm6168, %v6169, %v6160
      %v6171 = vsel %vm6164, %v6167, %v6170
      %v6172 = vsel %vm6161, nan, %v6171
      %6205 = vrot.lane.b32.xlu0 %v1367, 4
      %v6206 = vpop.permute.xlu0 %6205
      %6207 = vrot.lane.b32.xlu0 %v1522, 4
      %v6208 = vpop.permute.xlu0 %6207
      %6209 = vrot.lane.b32.xlu0 %v1677, 4
      %v6210 = vpop.permute.xlu0 %6209
      %6211 = vrot.lane.b32.xlu0 %v1832, 4
      %v6212 = vpop.permute.xlu0 %6211
      %6213 = vrot.lane.b32.xlu0 %v1987, 4
      %v6214 = vpop.permute.xlu0 %6213
      %6215 = vrot.lane.b32.xlu0 %v2142, 4
      %v6216 = vpop.permute.xlu0 %6215
      %6217 = vrot.lane.b32.xlu0 %v2297, 4
      %v6218 = vpop.permute.xlu0 %6217
      %6219 = vrot.lane.b32.xlu0 %v2452, 4
      %v6220 = vpop.permute.xlu0 %6219
      %6221 = vrot.lane.b32.xlu0 %v2607, 4
      %v6222 = vpop.permute.xlu0 %6221
      %6223 = vrot.lane.b32.xlu0 %v2762, 4
      %v6224 = vpop.permute.xlu0 %6223
      %6225 = vrot.lane.b32.xlu0 %v2917, 4
      %v6226 = vpop.permute.xlu0 %6225
      %6227 = vrot.lane.b32.xlu0 %v3072, 4
      %v6228 = vpop.permute.xlu0 %6227
      %6229 = vrot.lane.b32.xlu0 %v3227, 4
      %v6230 = vpop.permute.xlu0 %6229
      %6231 = vrot.lane.b32.xlu0 %v3382, 4
      %v6232 = vpop.permute.xlu0 %6231
      %6233 = vrot.lane.b32.xlu0 %v3537, 4
      %v6234 = vpop.permute.xlu0 %6233
      %6235 = vrot.lane.b32.xlu0 %v3692, 4
      %v6236 = vpop.permute.xlu0 %6235
      %6237 = vrot.lane.b32.xlu0 %v3847, 4
      %v6238 = vpop.permute.xlu0 %6237
      %6239 = vrot.lane.b32.xlu0 %v4002, 4
      %v6240 = vpop.permute.xlu0 %6239
      %6241 = vrot.lane.b32.xlu0 %v4157, 4
      %v6242 = vpop.permute.xlu0 %6241
      %6243 = vrot.lane.b32.xlu0 %v4312, 4
      %v6244 = vpop.permute.xlu0 %6243
      %6245 = vrot.lane.b32.xlu0 %v4467, 4
      %v6246 = vpop.permute.xlu0 %6245
      %6247 = vrot.lane.b32.xlu0 %v4622, 4
      %v6248 = vpop.permute.xlu0 %6247
      %6249 = vrot.lane.b32.xlu0 %v4777, 4
      %v6250 = vpop.permute.xlu0 %6249
      %6251 = vrot.lane.b32.xlu0 %v4932, 4
      %v6252 = vpop.permute.xlu0 %6251
      %6253 = vrot.lane.b32.xlu0 %v5087, 4
      %v6254 = vpop.permute.xlu0 %6253
      %6255 = vrot.lane.b32.xlu0 %v5242, 4
      %v6256 = vpop.permute.xlu0 %6255
      %6257 = vrot.lane.b32.xlu0 %v5397, 4
      %v6258 = vpop.permute.xlu0 %6257
      %6259 = vrot.lane.b32.xlu0 %v5552, 4
      %v6260 = vpop.permute.xlu0 %6259
      %6261 = vrot.lane.b32.xlu0 %v5707, 4
      %v6262 = vpop.permute.xlu0 %6261
      %6263 = vrot.lane.b32.xlu0 %v5862, 4
      %v6264 = vpop.permute.xlu0 %6263
      %6265 = vrot.lane.b32.xlu0 %v6017, 4
      %v6266 = vpop.permute.xlu0 %6265
      %6267 = vrot.lane.b32.xlu0 %v6172, 4
      %v6268 = vpop.permute.xlu0 %6267
      %v6301 = vsel %vm910, %v174, %v6206
      %v6302 = vsel %vm910, %v175, %v6208
      %v6303 = vsel %vm910, %v176, %v6210
      %v6304 = vsel %vm910, %v177, %v6212
      %v6305 = vsel %vm910, %v178, %v6214
      %v6306 = vsel %vm910, %v179, %v6216
      %v6307 = vsel %vm910, %v180, %v6218
      %v6308 = vsel %vm910, %v181, %v6220
      %v6309 = vsel %vm910, %v182, %v6222
      %v6310 = vsel %vm910, %v183, %v6224
      %v6311 = vsel %vm910, %v184, %v6226
      %v6312 = vsel %vm910, %v185, %v6228
      %v6313 = vsel %vm910, %v186, %v6230
      %v6314 = vsel %vm910, %v187, %v6232
      %v6315 = vsel %vm910, %v188, %v6234
      %v6316 = vsel %vm910, %v189, %v6236
      %v6317 = vsel %vm910, %v190, %v6238
      %v6318 = vsel %vm910, %v191, %v6240
      %v6319 = vsel %vm910, %v192, %v6242
      %v6320 = vsel %vm910, %v193, %v6244
      %v6321 = vsel %vm910, %v194, %v6246
      %v6322 = vsel %vm910, %v195, %v6248
      %v6323 = vsel %vm910, %v196, %v6250
      %v6324 = vsel %vm910, %v197, %v6252
      %v6325 = vsel %vm910, %v198, %v6254
      %v6326 = vsel %vm910, %v199, %v6256
      %v6327 = vsel %vm910, %v200, %v6258
      %v6328 = vsel %vm910, %v201, %v6260
      %v6329 = vsel %vm910, %v202, %v6262
      %v6330 = vsel %vm910, %v203, %v6264
      %v6331 = vsel %vm910, %v204, %v6266
      %v6332 = vsel %vm910, %v205, %v6268
      %vm6333 = vcmask 293888
      %6334 = vst.msk [vmem:[%s172] sm:$0xff] %vm6333, %v6301
      %6335 = vst.msk [vmem:[%s172 + $0x8] sm:$0xff] %vm6333, %v6302
      %6336 = vst.msk [vmem:[%s172 + $0x10] sm:$0xff] %vm6333, %v6303
      %6337 = vst.msk [vmem:[%s172 + $0x18] sm:$0xff] %vm6333, %v6304
      %6338 = vst.msk [vmem:[%s172 + $0x20] sm:$0xff] %vm6333, %v6305
      %6339 = vst.msk [vmem:[%s172 + $0x28] sm:$0xff] %vm6333, %v6306
      %6340 = vst.msk [vmem:[%s172 + $0x30] sm:$0xff] %vm6333, %v6307
      %6341 = vst.msk [vmem:[%s172 + $0x38] sm:$0xff] %vm6333, %v6308
      %6342 = vst.msk [vmem:[%s172 + $0x40] sm:$0xff] %vm6333, %v6309
      %6343 = vst.msk [vmem:[%s172 + $0x48] sm:$0xff] %vm6333, %v6310
      %6344 = vst.msk [vmem:[%s172 + $0x50] sm:$0xff] %vm6333, %v6311
      %6345 = vst.msk [vmem:[%s172 + $0x58] sm:$0xff] %vm6333, %v6312
      %6346 = vst.msk [vmem:[%s172 + $0x60] sm:$0xff] %vm6333, %v6313
      %6347 = vst.msk [vmem:[%s172 + $0x68] sm:$0xff] %vm6333, %v6314
      %6348 = vst.msk [vmem:[%s172 + $0x70] sm:$0xff] %vm6333, %v6315
      %6349 = vst.msk [vmem:[%s172 + $0x78] sm:$0xff] %vm6333, %v6316
      %6350 = vst.msk [vmem:[%s172 + $0x80] sm:$0xff] %vm6333, %v6317
      %6351 = vst.msk [vmem:[%s172 + $0x88] sm:$0xff] %vm6333, %v6318
      %6352 = vst.msk [vmem:[%s172 + $0x90] sm:$0xff] %vm6333, %v6319
      %6353 = vst.msk [vmem:[%s172 + $0x98] sm:$0xff] %vm6333, %v6320
      %6354 = vst.msk [vmem:[%s172 + $0xa0] sm:$0xff] %vm6333, %v6321
      %6355 = vst.msk [vmem:[%s172 + $0xa8] sm:$0xff] %vm6333, %v6322
      %6356 = vst.msk [vmem:[%s172 + $0xb0] sm:$0xff] %vm6333, %v6323
      %6357 = vst.msk [vmem:[%s172 + $0xb8] sm:$0xff] %vm6333, %v6324
      %6358 = vst.msk [vmem:[%s172 + $0xc0] sm:$0xff] %vm6333, %v6325
      %6359 = vst.msk [vmem:[%s172 + $0xc8] sm:$0xff] %vm6333, %v6326
      %6360 = vst.msk [vmem:[%s172 + $0xd0] sm:$0xff] %vm6333, %v6327
      %6361 = vst.msk [vmem:[%s172 + $0xd8] sm:$0xff] %vm6333, %v6328
      %6362 = vst.msk [vmem:[%s172 + $0xe0] sm:$0xff] %vm6333, %v6329
      %6363 = vst.msk [vmem:[%s172 + $0xe8] sm:$0xff] %vm6333, %v6330
      %6364 = vst.msk [vmem:[%s172 + $0xf0] sm:$0xff] %vm6333, %v6331
      %6365 = vst.msk [vmem:[%s172 + $0xf8] sm:$0xff] %vm6333, %v6332
      %s6366 = smul.u32 32, %s14
      %p6367 = scmp.lt.s32.totalorder %s6366, 63
      %s6368 = scalar_select %p6367, %s6366, 63
      %s6369 = smul.addr %s6368, 8
      %s6370 = scalar_lea.vmem %s3, %s6369
      // Predicated region
      $region33: #{tpu_custom_call.1} parent=31 // pred_check
        %p6371 = pneg %p100
      $region34: #{tpu_custom_call.1} parent=31 // pred_check_branch
        %6373 = sbr.rel (%p6371) target = $region36
      $region35: #{tpu_custom_call.1} parent=31 // pred_region
        %s6374 = smul.u32 32, %s14
      $region36: #{tpu_custom_call.1} parent=31 // pred_fallthru
        _
    $region32: #{tpu_custom_call.1} parent=5 // pred_fallthru
      _
    %p6375 = scmp.le.s32.totalorder 2, %s9
    // Predicated region
    $region37: #{tpu_custom_call.1} parent=5 // pred_check
      %p6376 = pneg %p6375
    $region38: #{tpu_custom_call.1} parent=5 // pred_check_branch
      %6378 = sbr.rel (%p6376) target = $region40
    $region39: #{tpu_custom_call.1} parent=5 // pred_region
      %s6379 = ssub.s32 %s9, 2
      // Predicated region
      $region41: #{tpu_custom_call.1} parent=39 // pred_check
        %p6380 = pneg %p106
      $region42: #{tpu_custom_call.1} parent=39 // pred_check_branch
        %6382 = sbr.rel (%p6380) target = $region44
      $region43: #{tpu_custom_call.1} parent=39 // pred_region
        %s6383 = smul.u32 32, %s15
        %p6384 = scmp.lt.s32.totalorder %s6383, 63
        %s6385 = scalar_select %p6384, %s6383, 63
        %s6386 = smul.addr %s6385, 8
        %s6387 = scalar_lea.vmem %s3, %s6386
      $region44: #{tpu_custom_call.1} parent=39 // pred_fallthru
        _
    $region40: #{tpu_custom_call.1} parent=5 // pred_fallthru
      _
  $region6: #{tpu_custom_call.1} parent=0 // loop_footer
    %s13 = sadd.s32 1, %s9
  $region7: #{tpu_custom_call.1} parent=0 // loop_footer_branch
    %8 = sbr.rel target = $region3
  $region8: #{tpu_custom_call.1} parent=0 // loop_exit
    _

</llo_original>
